<compile_context>
chip_gen: v5e
topology: v5e:2x2
jax: 0.10.0
libtpu: 0.0.40
codegen_flags: <defaults>
</compile_context>

<pallas_src>
import functools

import jax
import jax.numpy as jnp
from jax.experimental import pallas as pl
from jax.experimental.pallas import tpu as pltpu

EPS = 1e-5
LANE = 128


# ----------------------------- small helpers --------------------------------

def _round_up(x, m):
    return ((x + m - 1) // m) * m


def _default_vmem_limit():
    cap = 64 * 1024 * 1024                     # safe fallback (v7x physical)
    try:
        info = pltpu.get_tpu_info()
        cap = int(getattr(info, "vmem_capacity_bytes", cap)) or cap
    except Exception:
        pass
    # 3/4 of physical, clamped to [32 MiB, 96 MiB]:
    #   v5e/v6e (128 MiB) -> 96 MiB, v7x (64 MiB) -> 48 MiB.
    return int(min(96 * 1024 * 1024, max(32 * 1024 * 1024, (cap * 3) // 4)))


_VMEM_LIMIT_BYTES = _default_vmem_limit()


def _cparams(semantics):
    return pltpu.CompilerParams(dimension_semantics=semantics,
                                vmem_limit_bytes=_VMEM_LIMIT_BYTES)


def _pad_axis(a, size, axis):
    if a.shape[axis] == size:
        return a
    widths = [(0, 0)] * a.ndim
    widths[axis] = (0, size - a.shape[axis])
    return jnp.pad(a, widths)


def _pad_rows(a2d, tile_m):
    m = a2d.shape[0]
    m_pad = _round_up(m, tile_m)
    if m_pad == m:
        return a2d
    return jnp.pad(a2d, ((0, m_pad - m), (0, 0)))


def _pick_tile_m(m_real, tile_m_cap, min_steps=4):
    """Row tile: as large as allowed, MXU-friendly, but >= `min_steps` steps."""
    m8 = _round_up(m_real, 8)
    cap = _round_up(max(m8 // min_steps, 8), 8) if m8 >= 8 * min_steps else m8
    tm = max(8, min(tile_m_cap, cap, m8))
    if tm >= 256:
        tm = (tm // 256) * 256
    else:
        tm = _round_up(tm, 8)
    return tm


def _pick_band_rows(Ho, Wo, n_images, max_rows=16):
    """Output-row band for the 3x3 kernel (th | Ho, lane/sublane-legal block)."""
    cand = [t for t in range(1, min(Ho, max_rows) + 1)
            if Ho % t == 0 and (t == Ho or (t * Wo) % 8 == 0)]
    for t in sorted(cand, reverse=True):
        if n_images * (Ho // t) >= 4:            # enough steps for 2 TCs (v7x)
            return t
    return max(cand) if cand else Ho


def _finalize_bn(ssum, csq, tile_rows, m_real, gamma, beta):
    """Combine per-tile (sum, centered-sumsq) into fused BN (scale, shift).

    Per-tile stats are centered at c_t = S_t / tile_rows inside the kernel;
    the exact Chan-style combine below removes the E[y^2]-E[y]^2 cancellation.
    """
    nt = ssum.shape[0]
    s_t = ssum[:, 0, :]                                       # (nt, C)
    q_t = csq[:, 0, :]
    counts = jnp.clip(m_real - jnp.arange(nt) * tile_rows, 0, tile_rows
                      ).astype(jnp.float32)[:, None]          # real rows / tile
    c_t = s_t * (1.0 / float(tile_rows))
    mean = jnp.sum(s_t, axis=0) / float(m_real)
    d = c_t - mean[None, :]
    m2 = jnp.sum(q_t + 2.0 * d * (s_t - counts * c_t) + counts * d * d, axis=0)
    var = jnp.maximum(m2 / float(m_real), 0.0)
    scale = gamma * jax.lax.rsqrt(var + EPS)
    shift = beta - mean * scale
    return scale[None, :], shift[None, :]                     # (1, C) each


# ------------------------------- kernels -------------------------------------

def _mm_stats_kernel(*refs, fuse, dual, tile_m, m_real):
    """y = [relu(x*scale+shift)] @ w (+ optional second weight / output).

    Also emits per-tile sum and per-tile-centered sum-of-squares of y (f32).
    y itself is stored in the (possibly bf16) output dtype.
    """
    if dual:
        x_ref, wa_ref, wb_ref, ya_ref, sa_ref, qa_ref, yb_ref, sb_ref, qb_ref = refs
    elif fuse:
        x_ref, wa_ref, sc_ref, sh_ref, ya_ref, sa_ref, qa_ref = refs
    else:
        x_ref, wa_ref, ya_ref, sa_ref, qa_ref = refs

    x = x_ref[...]
    if fuse:
        x = jnp.maximum(x.astype(jnp.float32) * sc_ref[...] + sh_ref[...], 0.0)
    x = x.astype(wa_ref.dtype)

    needs_mask = (m_real % tile_m) != 0          # only emitted when M has a tail
    if needs_mask:
        rows = (pl.program_id(0) * tile_m
                + jax.lax.broadcasted_iota(jnp.int32, (tile_m, 1), 0))
        rowmask = rows < m_real

    def emit(w_ref, y_ref, s_ref, q_ref):
        cout = y_ref.shape[-1]
        y = jnp.dot(x, w_ref[...], preferred_element_type=jnp.float32)
        y_ref[...] = y.astype(y_ref.dtype)
        yz = jnp.where(rowmask, y, 0.0) if needs_mask else y
        ssum = jnp.sum(yz, axis=0, keepdims=True)              # (1, cout)
        d = yz - ssum * (1.0 / tile_m)                          # per-tile pivot
        if needs_mask:
            d = jnp.where(rowmask, d, 0.0)
        csq = jnp.sum(d * d, axis=0, keepdims=True)
        s_ref[0] = jnp.broadcast_to(ssum, (8, cout))
        q_ref[0] = jnp.broadcast_to(csq, (8, cout))

    emit(wa_ref, ya_ref, sa_ref, qa_ref)
    if dual:
        emit(wb_ref, yb_ref, sb_ref, qb_ref)


def _conv3x3_band_kernel(xm_ref, w_ref, sc_ref, sh_ref, y_ref, s_ref, q_ref,
                         acc_ref, *, stride, th, Wo, C, Hp_real, Wp_real):
    """3x3 conv of one row-band of one image (any stride).

    xm_ref : (1, Hp, Wq, s*C)  pre-BN y1, spatially padded; W columns merged
             in groups of `stride` into the channel dim (free glue reshape).
    w_ref  : (3, 3*C, cout)    kw taps folded into the contraction.
    BN1+ReLU is applied in-kernel; the padding ring is re-zeroed via iota mask.
    Accumulates into a VMEM scratch; stores a lane-dense (th*Wo, cout) slab and
    per-band (sum, centered-sumsq) partial BN statistics.
    """
    s = stride
    b = pl.program_id(1)
    Wq = xm_ref.shape[2]
    sC = s * C
    cout = y_ref.shape[-1]
    rows_out = th * Wo

    def activate(xr, row0):
        R = xr.shape[0]
        a = jnp.maximum(xr.astype(jnp.float32) * sc_ref[...] + sh_ref[...], 0.0)
        hh = row0 + jax.lax.broadcasted_iota(jnp.int32, (R, Wq, sC), 0)
        wq = jax.lax.broadcasted_iota(jnp.int32, (R, Wq, sC), 1)
        if s > 1:
            kk = jax.lax.broadcasted_iota(jnp.int32, (R, Wq, sC), 2)
            sub = jnp.zeros_like(kk)
            for j in range(1, s):                 # kk // C without integer div
                sub = sub + (kk >= j * C).astype(jnp.int32)
            col = s * wq + sub
        else:
            col = wq
        border = ((col == 0) | (col >= Wp_real - 1)
                  | (hh == 0) | (hh >= Hp_real - 1))
        return jnp.where(border, 0.0, a).astype(w_ref.dtype)

    if s == 1:
        r0 = b * th
        a = activate(xm_ref[0, pl.ds(r0, th + 2)], r0)      # (th+2, Wp, C)
        # Build the 3 W-shifted copies once; reuse across kh.
        aw = jnp.concatenate(
            [a[:, 0:Wo, :], a[:, 1:Wo + 1, :], a[:, 2:Wo + 2, :]], axis=-1)

        def tap(kh):
            return aw[kh:kh + th].reshape(rows_out, 3 * C)
    else:
        r0 = s * b * th
        a = activate(xm_ref[0, pl.ds(r0, s * (th + 1))], r0)  # (s*(th+1), Wq, sC)
        a4 = a.reshape(th + 1, s, Wq, sC)                      # row phases

        def tap(kh):
            qr, jr = kh // s, kh % s
            ak = a4[qr:qr + th, jr]                            # (th, Wq, sC)
            parts = [ak[:, (kw // s):(kw // s) + Wo,
                        (kw % s) * C:(kw % s + 1) * C] for kw in range(3)]
            return jnp.concatenate(parts, axis=-1).reshape(rows_out, 3 * C)

    for kh in range(3):
        contrib = jnp.dot(tap(kh), w_ref[kh], preferred_element_type=jnp.float32)
        if kh == 0:
            acc_ref[...] = contrib
        else:
            acc_ref[...] += contrib

    acc = acc_ref[...]
    y_ref[0] = acc.astype(y_ref.dtype)
    ssum = jnp.sum(acc, axis=0, keepdims=True)
    d = acc - ssum * (1.0 / rows_out)
    csq = jnp.sum(d * d, axis=0, keepdims=True)
    s_ref[0] = jnp.broadcast_to(ssum, (8, cout))
    q_ref[0] = jnp.broadcast_to(csq, (8, cout))


def _epilogue_proj_kernel(y3_ref, sc3_ref, sh3_ref, ys_ref, scs_ref, shs_ref,
                          o_ref):
    """out = relu(BN3(y3) + BNs(ys))   (projection shortcut)."""
    o_ref[...] = jnp.maximum(
        y3_ref[...].astype(jnp.float32) * sc3_ref[...] + sh3_ref[...]
        + ys_ref[...].astype(jnp.float32) * scs_ref[...] + shs_ref[...], 0.0)


def _epilogue_id_kernel(y3_ref, sc3_ref, sh3_ref, s_ref, o_ref):
    """out = relu(BN3(y3) + x)   (identity shortcut)."""
    o_ref[...] = jnp.maximum(
        y3_ref[...].astype(jnp.float32) * sc3_ref[...] + sh3_ref[...]
        + s_ref[...].astype(jnp.float32), 0.0)


# --------------------------- pallas_call wrappers ----------------------------

def conv1x1_bn_stats(x2d, w, *, tile_m, m_real, out_dtype,
                     in_scale=None, in_shift=None, w_b=None):
    """Row-tiled 1x1-conv matmul (+optional fused input BN+ReLU, +optional
    second weight for the fused projection shortcut) with partial BN stats."""
    m_pad, cin = x2d.shape
    cout = w.shape[1]
    nt = m_pad // tile_m
    fuse = in_scale is not None
    dual = w_b is not None
    kernel = functools.partial(_mm_stats_kernel, fuse=fuse, dual=dual,
                               tile_m=tile_m, m_real=m_real)

    row = pl.BlockSpec((tile_m, cin), lambda i: (i, 0))
    vec = pl.BlockSpec((1, cin), lambda i: (0, 0))
    in_specs = [row, pl.BlockSpec((cin, cout), lambda i: (0, 0))]
    operands = [x2d, w]
    if dual:
        in_specs.append(pl.BlockSpec((cin, w_b.shape[1]), lambda i: (0, 0)))
        operands.append(w_b)
    if fuse:
        in_specs += [vec, vec]
        operands += [in_scale, in_shift]

    def out_group(c):
        shapes = (jax.ShapeDtypeStruct((m_pad, c), out_dtype),
                  jax.ShapeDtypeStruct((nt, 8, c), jnp.float32),
                  jax.ShapeDtypeStruct((nt, 8, c), jnp.float32))
        specs = (pl.BlockSpec((tile_m, c), lambda i: (i, 0)),
                 pl.BlockSpec((1, 8, c), lambda i: (i, 0, 0)),
                 pl.BlockSpec((1, 8, c), lambda i: (i, 0, 0)))
        return shapes, specs

    shp, spc = out_group(cout)
    out_shape, out_specs = list(shp), list(spc)
    if dual:
        shp_b, spc_b = out_group(w_b.shape[1])
        out_shape += list(shp_b)
        out_specs += list(spc_b)

    return pl.pallas_call(
        kernel, grid=(nt,), in_specs=in_specs,
        out_specs=tuple(out_specs), out_shape=tuple(out_shape),
        compiler_params=_cparams(("parallel",)))(*operands)


def conv3x3_bn_stats(xm, w2r, in_scale, in_shift, *, stride, th, Ho, Wo, C,
                     Hp_real, Wp_real, out_dtype):
    """Banded 3x3 conv (any stride) with fused input BN+ReLU + partial stats."""
    N, Hp, Wq, sC = xm.shape
    cout = w2r.shape[-1]
    nb = Ho // th
    kernel = functools.partial(_conv3x3_band_kernel, stride=stride, th=th,
                               Wo=Wo, C=C, Hp_real=Hp_real, Wp_real=Wp_real)
    # TODO(synk): for extreme (H*W*C) the whole padded image per step could be
    # replaced by a manual halo-banded DMA of the input as well.
    return pl.pallas_call(
        kernel,
        grid=(N, nb),
        in_specs=[pl.BlockSpec((1, Hp, Wq, sC), lambda n, b: (n, 0, 0, 0)),
                  pl.BlockSpec((3, 3 * C, cout), lambda n, b: (0, 0, 0)),
                  pl.BlockSpec((1, sC), lambda n, b: (0, 0)),
                  pl.BlockSpec((1, sC), lambda n, b: (0, 0))],
        out_specs=(pl.BlockSpec((1, th * Wo, cout), lambda n, b: (n, b, 0)),
                   pl.BlockSpec((1, 8, cout), lambda n, b: (n * nb + b, 0, 0)),
                   pl.BlockSpec((1, 8, cout), lambda n, b: (n * nb + b, 0, 0))),
        out_shape=(jax.ShapeDtypeStruct((N, Ho * Wo, cout), out_dtype),
                   jax.ShapeDtypeStruct((N * nb, 8, cout), jnp.float32),
                   jax.ShapeDtypeStruct((N * nb, 8, cout), jnp.float32)),
        scratch_shapes=[pltpu.VMEM((th * Wo, cout), jnp.float32)],
        compiler_params=_cparams(("parallel", "arbitrary")),
    )(xm, w2r, in_scale, in_shift)


def fused_add_relu(y3, scale3, shift3, short, scale_s=None, shift_s=None, *,
                   tile_m):
    """Row-tiled epilogue: relu(BN3(y3) + shortcut)."""
    m_pad, c = y3.shape
    nt = m_pad // tile_m
    row = pl.BlockSpec((tile_m, c), lambda i: (i, 0))
    vec = pl.BlockSpec((1, c), lambda i: (0, 0))
    if scale_s is not None:
        kernel = _epilogue_proj_kernel
        in_specs = [row, vec, vec, row, vec, vec]
        operands = (y3, scale3, shift3, short, scale_s, shift_s)
    else:
        kernel = _epilogue_id_kernel
        in_specs = [row, vec, vec, row]
        operands = (y3, scale3, shift3, short)
    return pl.pallas_call(
        kernel, grid=(nt,), in_specs=in_specs,
        out_specs=pl.BlockSpec((tile_m, c), lambda i: (i, 0)),
        out_shape=jax.ShapeDtypeStruct((m_pad, c), jnp.float32),
        compiler_params=_cparams(("parallel",)))(*operands)


# --------------------------------- forward -----------------------------------

def bottleneck_forward(x_nchw, p, stride, *, tile_m=1024,
                       compute_dtype=jnp.bfloat16):
    x = jnp.transpose(x_nchw, (0, 2, 3, 1)).astype(jnp.float32)   # NCHW -> NHWC
    N, H, W, cin = x.shape
    planes = p["w1"].shape[0]
    cout = 4 * planes
    s = stride
    Ho = (H - 1) // s + 1
    Wo = (W - 1) // s + 1

    cin_p = _round_up(cin, LANE)
    c1_p = _round_up(planes, LANE)
    c3_p = _round_up(cout, LANE)

    x_p = _pad_axis(x, cin_p, 3).astype(compute_dtype)

    # weights -> matmul form, channel-padded, compute dtype.
    w1 = _pad_axis(_pad_axis(p["w1"][:, :, 0, 0].T, cin_p, 0), c1_p, 1
                   ).astype(compute_dtype)
    w3 = _pad_axis(_pad_axis(p["w3"][:, :, 0, 0].T, c1_p, 0), c3_p, 1
                   ).astype(compute_dtype)
    w2 = jnp.transpose(p["w2"], (2, 3, 1, 0))                    # (kh,kw,Ci,Co)
    w2 = _pad_axis(_pad_axis(w2, c1_p, 2), c1_p, 3).astype(compute_dtype)
    w2r = w2.reshape(3, 3 * c1_p, c1_p)                          # kw folded in K

    g1 = _pad_axis(p["g1"].astype(jnp.float32), c1_p, 0)
    b1 = _pad_axis(p["b1"].astype(jnp.float32), c1_p, 0)
    g2 = _pad_axis(p["g2"].astype(jnp.float32), c1_p, 0)
    b2 = _pad_axis(p["b2"].astype(jnp.float32), c1_p, 0)
    g3 = _pad_axis(p["g3"].astype(jnp.float32), c3_p, 0)
    b3 = _pad_axis(p["b3"].astype(jnp.float32), c3_p, 0)

    has_proj = "ws" in p
    if has_proj:
        ws = _pad_axis(_pad_axis(p["ws"][:, :, 0, 0].T, cin_p, 0), c3_p, 1
                       ).astype(compute_dtype)
        gs = _pad_axis(p["gs"].astype(jnp.float32), c3_p, 0)
        bs = _pad_axis(p["bs"].astype(jnp.float32), c3_p, 0)

    M1 = N * H * W
    M3 = N * Ho * Wo
    tm1 = _pick_tile_m(M1, tile_m)
    tm3 = tm1 if s == 1 else _pick_tile_m(M3, tile_m)

    # ---- conv1 (1x1), fused with the stride-1 projection shortcut -----------
    x2d = _pad_rows(x_p.reshape(M1, cin_p), tm1)
    scale_s = shift_s = None
    if has_proj and s == 1:
        y1, s1, q1, ysc, ss_, qs_ = conv1x1_bn_stats(
            x2d, w1, w_b=ws, tile_m=tm1, m_real=M1, out_dtype=compute_dtype)
        scale_s, shift_s = _finalize_bn(ss_, qs_, tm1, M1, gs, bs)
    else:
        y1, s1, q1 = conv1x1_bn_stats(x2d, w1, tile_m=tm1, m_real=M1,
                                      out_dtype=compute_dtype)
    scale1, shift1 = _finalize_bn(s1, q1, tm1, M1, g1, b1)

    # ---- conv2 (3x3, any stride): banded kernel, BN1+ReLU fused in-kernel ---
    th = _pick_band_rows(Ho, Wo, N)
    Wq = max(-(-(W + 2) // s), Wo + 2 // s)          # merged-width groups of s
    Hp_arr = H + 2 if s == 1 else max(H + 2, s * (Ho + 1))
    y1_img = y1[:M1].reshape(N, H, W, c1_p)
    y1_sp = jnp.pad(y1_img, ((0, 0), (1, Hp_arr - H - 1),
                             (1, s * Wq - (W + 1)), (0, 0)))
    xm = y1_sp.reshape(N, Hp_arr, Wq, s * c1_p)      # free layout-only reshape
    y2, s2, q2 = conv3x3_bn_stats(
        xm, w2r, jnp.tile(scale1, (1, s)), jnp.tile(shift1, (1, s)),
        stride=s, th=th, Ho=Ho, Wo=Wo, C=c1_p, Hp_real=H + 2, Wp_real=W + 2,
        out_dtype=compute_dtype)
    scale2, shift2 = _finalize_bn(s2, q2, th * Wo, M3, g2, b2)

    # ---- conv3 (1x1) with fused BN2+ReLU on its input ------------------------
    y2_2d = _pad_rows(y2.reshape(M3, c1_p), tm3)
    y3, s3, q3 = conv1x1_bn_stats(y2_2d, w3, in_scale=scale2, in_shift=shift2,
                                  tile_m=tm3, m_real=M3, out_dtype=compute_dtype)
    scale3, shift3 = _finalize_bn(s3, q3, tm3, M3, g3, b3)

    # ---- shortcut + BN3 + add + ReLU epilogue --------------------------------
    if has_proj:
        if s == 1:
            ys = ysc                                  # fused with conv1 above
        else:
            xs = _pad_rows(x_p[:, ::s, ::s, :].reshape(M3, cin_p), tm3)
            ys, ss_, qs_ = conv1x1_bn_stats(xs, ws, tile_m=tm3, m_real=M3,
                                            out_dtype=compute_dtype)
            scale_s, shift_s = _finalize_bn(ss_, qs_, tm3, M3, gs, bs)
        out2d = fused_add_relu(y3, scale3, shift3, ys, scale_s, shift_s,
                               tile_m=tm3)
    else:
        xid = _pad_rows(x_p.reshape(M3, c3_p), tm3)   # identity: cin_p == c3_p
        out2d = fused_add_relu(y3, scale3, shift3, xid, tile_m=tm3)

    out = out2d[:M3, :cout].reshape(N, Ho, Wo, cout)
    return jnp.transpose(out, (0, 3, 1, 2))                       # NHWC -> NCHW


# ----------------------------- pure-JAX reference ----------------------------

def reference_forward(x, p, stride):
    def conv(x_, w_, s=1, pad=0):
        return jax.lax.conv_general_dilated(
            x_, w_, (s, s), [(pad, pad), (pad, pad)],
            dimension_numbers=("NCHW", "OIHW", "NCHW"))

    def bn(y, g, b):
        mu = jnp.mean(y, axis=(0, 2, 3), keepdims=True)
        var = jnp.mean(jnp.square(y - mu), axis=(0, 2, 3), keepdims=True)
        return (y - mu) * jax.lax.rsqrt(var + EPS) * g[None, :, None, None] \
            + b[None, :, None, None]

    out = jax.nn.relu(bn(conv(x, p["w1"]), p["g1"], p["b1"]))
    out = jax.nn.relu(bn(conv(out, p["w2"], s=stride, pad=1), p["g2"], p["b2"]))
    out = bn(conv(out, p["w3"]), p["g3"], p["b3"])
    if "ws" in p:
        short = bn(conv(x, p["ws"], s=stride), p["gs"], p["bs"])
    else:
        short = x
    return jax.nn.relu(out + short)


# ----------------------------------- main ------------------------------------

def make_params(key, in_planes, planes, projection):
    ks = jax.random.split(key, 12)
    exp = 4
    p = {
        "w1": 0.1 * jax.random.normal(ks[0], (planes, in_planes, 1, 1), jnp.float32),
        "g1": 1.0 + 0.1 * jax.random.normal(ks[1], (planes,), jnp.float32),
        "b1": 0.1 * jax.random.normal(ks[2], (planes,), jnp.float32),
        "w2": 0.1 * jax.random.normal(ks[3], (planes, planes, 3, 3), jnp.float32),
        "g2": 1.0 + 0.1 * jax.random.normal(ks[4], (planes,), jnp.float32),
        "b2": 0.1 * jax.random.normal(ks[5], (planes,), jnp.float32),
        "w3": 0.1 * jax.random.normal(ks[6], (exp * planes, planes, 1, 1), jnp.float32),
        "g3": 1.0 + 0.1 * jax.random.normal(ks[7], (exp * planes,), jnp.float32),
        "b3": 0.1 * jax.random.normal(ks[8], (exp * planes,), jnp.float32),
    }
    if projection:
        p["ws"] = 0.1 * jax.random.normal(ks[9], (exp * planes, in_planes, 1, 1), jnp.float32)
        p["gs"] = 1.0 + 0.1 * jax.random.normal(ks[10], (exp * planes,), jnp.float32)
        p["bs"] = 0.1 * jax.random.normal(ks[11], (exp * planes,), jnp.float32)
    return p


if __name__ == "__main__":
    key = jax.random.PRNGKey(0)
    N = 2

    configs = [
        # (in_planes, planes, stride, H, W)
        (4, 4, 1, 16, 16),    # stride-1 projection -> fused dual conv1+shortcut
        (16, 4, 1, 16, 16),   # identity shortcut
        (8, 4, 2, 16, 16),    # strided block -> in-kernel strided 3x3 + proj
        (4, 4, 1, 10, 10),    # M not divisible by the row tile (masked tail)
    ]

    fwd = jax.jit(bottleneck_forward,
                  static_argnames=("stride", "tile_m", "compute_dtype"))
    ref_fn = jax.jit(reference_forward, static_argnames=("stride",))

    for idx, (cin, planes, stride, H, W) in enumerate(configs):
        kp, kx = jax.random.split(jax.random.fold_in(key, idx))
        projection = (stride != 1) or (cin != 4 * planes)
        p = make_params(kp, cin, planes, projection)
        x = jax.random.normal(kx, (N, cin, H, W), jnp.float32)

        out = jax.block_until_ready(
            fwd(x, p, stride=stride, compute_dtype=jnp.float32))
        ref = jax.block_until_ready(ref_fn(x, p, stride=stride))

        assert out.shape == ref.shape, (out.shape, ref.shape)
        err = float(jnp.max(jnp.abs(out - ref)))
        assert jnp.allclose(out, ref, atol=1e-4, rtol=1e-4), \
            f"config {idx}: max abs err = {err}"

    # Production path: bf16 operands + bf16 inter-layer activations
    # (f32 accumulation / stats / epilogue).  Smoke test only.
    cin, planes, stride, H, W = configs[0]
    kp, kx = jax.random.split(jax.random.fold_in(key, 0))
    p = make_params(kp, cin, planes, True)
    x = jax.random.normal(kx, (N, cin, H, W), jnp.float32)
    out_bf16 = jax.block_until_ready(fwd(x, p, stride=stride))
    assert out_bf16.shape == (N, 4 * planes, H, W)
    assert bool(jnp.all(jnp.isfinite(out_bf16)))

    print("KERNEL_OK")
</pallas_src>

<mosaic_0001>
module attributes {stable_mosaic.version = 11 : i64} {
  func.func @_mm_stats_kernel(%arg0: i32, %arg1: memref<128x128xf32, #tpu.memory_space<vmem>>, %arg2: memref<128x128xf32, #tpu.memory_space<vmem>>, %arg3: memref<128x128xf32, #tpu.memory_space<vmem>>, %arg4: memref<128x128xf32, #tpu.memory_space<vmem>>, %arg5: memref<1x8x128xf32, #tpu.memory_space<vmem>>, %arg6: memref<1x8x128xf32, #tpu.memory_space<vmem>>, %arg7: memref<128x128xf32, #tpu.memory_space<vmem>>, %arg8: memref<1x8x128xf32, #tpu.memory_space<vmem>>, %arg9: memref<1x8x128xf32, #tpu.memory_space<vmem>>) attributes {dimension_semantics = [#tpu.dimension_semantics<parallel>], iteration_bounds = array<i64: 4>, scalar_prefetch = 0 : i64, scratch_operands = 0 : i64, tpu.core_type = #tpu.core_type<tc>, window_params = [{transform_indices = @transform_0, window_bounds = array<i64: 128, 128>}, {pipeline_mode = #tpu.pipeline_mode<synchronous>, transform_indices = @transform_1, window_bounds = array<i64: 128, 128>}, {pipeline_mode = #tpu.pipeline_mode<synchronous>, transform_indices = @transform_2, window_bounds = array<i64: 128, 128>}, {transform_indices = @transform_3, window_bounds = array<i64: 128, 128>}, {transform_indices = @transform_4, window_bounds = array<i64: 1, 8, 128>}, {transform_indices = @transform_5, window_bounds = array<i64: 1, 8, 128>}, {transform_indices = @transform_6, window_bounds = array<i64: 128, 128>}, {transform_indices = @transform_7, window_bounds = array<i64: 1, 8, 128>}, {transform_indices = @transform_8, window_bounds = array<i64: 1, 8, 128>}]} {
    %c0 = arith.constant 0 : index
    %c0_0 = arith.constant 0 : index
    %0 = vector.load %arg1[%c0, %c0_0] : memref<128x128xf32, #tpu.memory_space<vmem>>, vector<128x128xf32>
    %c0_1 = arith.constant 0 : index
    %c0_2 = arith.constant 0 : index
    %1 = vector.load %arg2[%c0_1, %c0_2] : memref<128x128xf32, #tpu.memory_space<vmem>>, vector<128x128xf32>
    %cst = arith.constant dense<0.000000e+00> : vector<128x128xf32>
    %2 = tpu.matmul %0, %1, %cst {dimension_numbers = #tpu.dot_dimension_numbers<[1], [0], [0], [1], [0, 0, 1, 1], [], []>} : vector<128x128xf32>, vector<128x128xf32>, vector<128x128xf32> -> vector<128x128xf32>
    %c0_3 = arith.constant 0 : index
    %c0_4 = arith.constant 0 : index
    %3 = vector.load %arg4[%c0_3, %c0_4] : memref<128x128xf32, #tpu.memory_space<vmem>>, vector<128x128xf32>
    tpu.vector_store %arg4[%c0_3, %c0_4], %2 {strides = array<i32>} : memref<128x128xf32, #tpu.memory_space<vmem>>, vector<128x128xf32>,
    %cst_5 = arith.constant dense<0.000000e+00> : vector<128xf32>
    %4 = vector.multi_reduction <add>, %2, %cst_5 [0] : vector<128x128xf32> to vector<128xf32>
    %5 = vector.shape_cast %4 : vector<128xf32> to vector<1x128xf32>
    %cst_6 = arith.constant 7.812500e-03 : f32
    %6 = vector.broadcast %cst_6 : f32 to vector<1x128xf32>
    %7 = arith.mulf %5, %6 : vector<1x128xf32>
    %8 = vector.broadcast %7 : vector<1x128xf32> to vector<128x128xf32>
    %9 = arith.subf %2, %8 : vector<128x128xf32>
    %10 = arith.mulf %9, %9 : vector<128x128xf32>
    %cst_7 = arith.constant dense<0.000000e+00> : vector<128xf32>
    %11 = vector.multi_reduction <add>, %10, %cst_7 [0] : vector<128x128xf32> to vector<128xf32>
    %12 = vector.shape_cast %11 : vector<128xf32> to vector<1x128xf32>
    %13 = vector.shape_cast %5 : vector<1x128xf32> to vector<1x128xf32>
    %14 = vector.broadcast %13 : vector<1x128xf32> to vector<8x128xf32>
    %c0_8 = arith.constant 0 : index
    %c0_9 = arith.constant 0 : index
    %c0_10 = arith.constant 0 : index
    %15 = vector.load %arg5[%c0_8, %c0_9, %c0_10] : memref<1x8x128xf32, #tpu.memory_space<vmem>>, vector<1x8x128xf32>
    %16 = vector.shape_cast %15 : vector<1x8x128xf32> to vector<8x128xf32>
    %17 = vector.shape_cast %14 : vector<8x128xf32> to vector<1x8x128xf32>
    tpu.vector_store %arg5[%c0_8, %c0_9, %c0_10], %17 {strides = array<i32>} : memref<1x8x128xf32, #tpu.memory_space<vmem>>, vector<1x8x128xf32>,
    %18 = vector.shape_cast %12 : vector<1x128xf32> to vector<1x128xf32>
    %19 = vector.broadcast %18 : vector<1x128xf32> to vector<8x128xf32>
    %c0_11 = arith.constant 0 : index
    %c0_12 = arith.constant 0 : index
    %c0_13 = arith.constant 0 : index
    %20 = vector.load %arg6[%c0_11, %c0_12, %c0_13] : memref<1x8x128xf32, #tpu.memory_space<vmem>>, vector<1x8x128xf32>
    %21 = vector.shape_cast %20 : vector<1x8x128xf32> to vector<8x128xf32>
    %22 = vector.shape_cast %19 : vector<8x128xf32> to vector<1x8x128xf32>
    tpu.vector_store %arg6[%c0_11, %c0_12, %c0_13], %22 {strides = array<i32>} : memref<1x8x128xf32, #tpu.memory_space<vmem>>, vector<1x8x128xf32>,
    %c0_14 = arith.constant 0 : index
    %c0_15 = arith.constant 0 : index
    %23 = vector.load %arg3[%c0_14, %c0_15] : memref<128x128xf32, #tpu.memory_space<vmem>>, vector<128x128xf32>
    %cst_16 = arith.constant dense<0.000000e+00> : vector<128x128xf32>
    %24 = tpu.matmul %0, %23, %cst_16 {dimension_numbers = #tpu.dot_dimension_numbers<[1], [0], [0], [1], [0, 0, 1, 1], [], []>} : vector<128x128xf32>, vector<128x128xf32>, vector<128x128xf32> -> vector<128x128xf32>
    %c0_17 = arith.constant 0 : index
    %c0_18 = arith.constant 0 : index
    %25 = vector.load %arg7[%c0_17, %c0_18] : memref<128x128xf32, #tpu.memory_space<vmem>>, vector<128x128xf32>
    tpu.vector_store %arg7[%c0_17, %c0_18], %24 {strides = array<i32>} : memref<128x128xf32, #tpu.memory_space<vmem>>, vector<128x128xf32>,
    %cst_19 = arith.constant dense<0.000000e+00> : vector<128xf32>
    %26 = vector.multi_reduction <add>, %24, %cst_19 [0] : vector<128x128xf32> to vector<128xf32>
    %27 = vector.shape_cast %26 : vector<128xf32> to vector<1x128xf32>
    %cst_20 = arith.constant 7.812500e-03 : f32
    %28 = vector.broadcast %cst_20 : f32 to vector<1x128xf32>
    %29 = arith.mulf %27, %28 : vector<1x128xf32>
    %30 = vector.broadcast %29 : vector<1x128xf32> to vector<128x128xf32>
    %31 = arith.subf %24, %30 : vector<128x128xf32>
    %32 = arith.mulf %31, %31 : vector<128x128xf32>
    %cst_21 = arith.constant dense<0.000000e+00> : vector<128xf32>
    %33 = vector.multi_reduction <add>, %32, %cst_21 [0] : vector<128x128xf32> to vector<128xf32>
    %34 = vector.shape_cast %33 : vector<128xf32> to vector<1x128xf32>
    %35 = vector.shape_cast %27 : vector<1x128xf32> to vector<1x128xf32>
    %36 = vector.broadcast %35 : vector<1x128xf32> to vector<8x128xf32>
    %c0_22 = arith.constant 0 : index
    %c0_23 = arith.constant 0 : index
    %c0_24 = arith.constant 0 : index
    %37 = vector.load %arg8[%c0_22, %c0_23, %c0_24] : memref<1x8x128xf32, #tpu.memory_space<vmem>>, vector<1x8x128xf32>
    %38 = vector.shape_cast %37 : vector<1x8x128xf32> to vector<8x128xf32>
    %39 = vector.shape_cast %36 : vector<8x128xf32> to vector<1x8x128xf32>
    tpu.vector_store %arg8[%c0_22, %c0_23, %c0_24], %39 {strides = array<i32>} : memref<1x8x128xf32, #tpu.memory_space<vmem>>, vector<1x8x128xf32>,
    %40 = vector.shape_cast %34 : vector<1x128xf32> to vector<1x128xf32>
    %41 = vector.broadcast %40 : vector<1x128xf32> to vector<8x128xf32>
    %c0_25 = arith.constant 0 : index
    %c0_26 = arith.constant 0 : index
    %c0_27 = arith.constant 0 : index
    %42 = vector.load %arg9[%c0_25, %c0_26, %c0_27] : memref<1x8x128xf32, #tpu.memory_space<vmem>>, vector<1x8x128xf32>
    %43 = vector.shape_cast %42 : vector<1x8x128xf32> to vector<8x128xf32>
    %44 = vector.shape_cast %41 : vector<8x128xf32> to vector<1x8x128xf32>
    tpu.vector_store %arg9[%c0_25, %c0_26, %c0_27], %44 {strides = array<i32>} : memref<1x8x128xf32, #tpu.memory_space<vmem>>, vector<1x8x128xf32>,
    return
  }
  func.func @transform_0(%arg0: i32) -> (i32, i32) {
    %c0_i32 = arith.constant 0 : i32
    %c0_i32_0 = arith.constant 0 : i32
    return %arg0, %c0_i32 : i32, i32
  }
  func.func @transform_1(%arg0: i32) -> (i32, i32) {
    %c0_i32 = arith.constant 0 : i32
    %c0_i32_0 = arith.constant 0 : i32
    %c0_i32_1 = arith.constant 0 : i32
    return %c0_i32, %c0_i32_0 : i32, i32
  }
  func.func @transform_2(%arg0: i32) -> (i32, i32) {
    %c0_i32 = arith.constant 0 : i32
    %c0_i32_0 = arith.constant 0 : i32
    %c0_i32_1 = arith.constant 0 : i32
    return %c0_i32, %c0_i32_0 : i32, i32
  }
  func.func @transform_3(%arg0: i32) -> (i32, i32) {
    %c0_i32 = arith.constant 0 : i32
    %c0_i32_0 = arith.constant 0 : i32
    return %arg0, %c0_i32 : i32, i32
  }
  func.func @transform_4(%arg0: i32) -> (i32, i32, i32) {
    %c0_i32 = arith.constant 0 : i32
    %c0_i32_0 = arith.constant 0 : i32
    %c0_i32_1 = arith.constant 0 : i32
    return %arg0, %c0_i32, %c0_i32_0 : i32, i32, i32
  }
  func.func @transform_5(%arg0: i32) -> (i32, i32, i32) {
    %c0_i32 = arith.constant 0 : i32
    %c0_i32_0 = arith.constant 0 : i32
    %c0_i32_1 = arith.constant 0 : i32
    return %arg0, %c0_i32, %c0_i32_0 : i32, i32, i32
  }
  func.func @transform_6(%arg0: i32) -> (i32, i32) {
    %c0_i32 = arith.constant 0 : i32
    %c0_i32_0 = arith.constant 0 : i32
    return %arg0, %c0_i32 : i32, i32
  }
  func.func @transform_7(%arg0: i32) -> (i32, i32, i32) {
    %c0_i32 = arith.constant 0 : i32
    %c0_i32_0 = arith.constant 0 : i32
    %c0_i32_1 = arith.constant 0 : i32
    return %arg0, %c0_i32, %c0_i32_0 : i32, i32, i32
  }
  func.func @transform_8(%arg0: i32) -> (i32, i32, i32) {
    %c0_i32 = arith.constant 0 : i32
    %c0_i32_0 = arith.constant 0 : i32
    %c0_i32_1 = arith.constant 0 : i32
    return %arg0, %c0_i32, %c0_i32_0 : i32, i32, i32
  }
}

module attributes {stable_mosaic.version = 11 : i64} {
  func.func @_conv3x3_band_kernel(%arg0: i32, %arg1: i32, %arg2: memref<1x18x18x128xf32, #tpu.memory_space<vmem>>, %arg3: memref<3x384x128xf32, #tpu.memory_space<vmem>>, %arg4: memref<1x128xf32, #tpu.memory_space<vmem>>, %arg5: memref<1x128xf32, #tpu.memory_space<vmem>>, %arg6: memref<1x128x128xf32, #tpu.memory_space<vmem>>, %arg7: memref<1x8x128xf32, #tpu.memory_space<vmem>>, %arg8: memref<1x8x128xf32, #tpu.memory_space<vmem>>, %arg9: memref<128x128xf32, #tpu.memory_space<vmem>>) attributes {dimension_semantics = [#tpu.dimension_semantics<parallel>, #tpu.dimension_semantics<arbitrary>], iteration_bounds = array<i64: 2, 2>, scalar_prefetch = 0 : i64, scratch_operands = 1 : i64, tpu.core_type = #tpu.core_type<tc>, window_params = [{transform_indices = @transform_0, window_bounds = array<i64: 1, 18, 18, 128>}, {pipeline_mode = #tpu.pipeline_mode<synchronous>, transform_indices = @transform_1, window_bounds = array<i64: 3, 384, 128>}, {pipeline_mode = #tpu.pipeline_mode<synchronous>, transform_indices = @transform_2, window_bounds = array<i64: 1, 128>}, {pipeline_mode = #tpu.pipeline_mode<synchronous>, transform_indices = @transform_3, window_bounds = array<i64: 1, 128>}, {transform_indices = @transform_4, window_bounds = array<i64: 1, 128, 128>}, {transform_indices = @transform_5, window_bounds = array<i64: 1, 8, 128>}, {transform_indices = @transform_6, window_bounds = array<i64: 1, 8, 128>}]} {
    %c8_i32 = arith.constant 8 : i32
    %0 = arith.muli %arg1, %c8_i32 : i32
    %c0 = arith.constant 0 : index
    %1 = arith.index_cast %0 : i32 to index
    %c0_0 = arith.constant 0 : index
    %c0_1 = arith.constant 0 : index
    %2 = vector.load %arg2[%c0, %1, %c0_0, %c0_1] : memref<1x18x18x128xf32, #tpu.memory_space<vmem>>, vector<1x10x18x128xf32>
    %3 = vector.shape_cast %2 : vector<1x10x18x128xf32> to vector<10x18x128xf32>
    %c0_2 = arith.constant 0 : index
    %c0_3 = arith.constant 0 : index
    %4 = vector.load %arg4[%c0_2, %c0_3] : memref<1x128xf32, #tpu.memory_space<vmem>>, vector<1x128xf32>
    %5 = vector.shape_cast %4 : vector<1x128xf32> to vector<1x1x128xf32>
    %6 = vector.broadcast %5 : vector<1x1x128xf32> to vector<10x18x128xf32>
    %7 = arith.mulf %3, %6 : vector<10x18x128xf32>
    %c0_4 = arith.constant 0 : index
    %c0_5 = arith.constant 0 : index
    %8 = vector.load %arg5[%c0_4, %c0_5] : memref<1x128xf32, #tpu.memory_space<vmem>>, vector<1x128xf32>
    %9 = vector.shape_cast %8 : vector<1x128xf32> to vector<1x1x128xf32>
    %10 = vector.broadcast %9 : vector<1x1x128xf32> to vector<10x18x128xf32>
    %11 = arith.addf %7, %10 : vector<10x18x128xf32>
    %cst = arith.constant 0.000000e+00 : f32
    %12 = vector.broadcast %cst : f32 to vector<10x18x128xf32>
    %13 = arith.maximumf %11, %12 : vector<10x18x128xf32>
    %14 = tpu.iota {dimensions = array<i32: 0>} : vector<10x18x128xi32>
    %15 = vector.broadcast %0 : i32 to vector<10x18x128xi32>
    %16 = arith.addi %15, %14 : vector<10x18x128xi32>
    %17 = tpu.iota {dimensions = array<i32: 1>} : vector<10x18x128xi32>
    %c0_i32 = arith.constant 0 : i32
    %18 = vector.broadcast %c0_i32 : i32 to vector<10x18x128xi32>
    %19 = arith.cmpi eq, %17, %18 : vector<10x18x128xi32>
    %c17_i32 = arith.constant 17 : i32
    %20 = vector.broadcast %c17_i32 : i32 to vector<10x18x128xi32>
    %21 = arith.cmpi sge, %17, %20 : vector<10x18x128xi32>
    %22 = arith.ori %19, %21 : vector<10x18x128xi1>
    %c0_i32_6 = arith.constant 0 : i32
    %23 = vector.broadcast %c0_i32_6 : i32 to vector<10x18x128xi32>
    %24 = arith.cmpi eq, %16, %23 : vector<10x18x128xi32>
    %25 = arith.ori %22, %24 : vector<10x18x128xi1>
    %c17_i32_7 = arith.constant 17 : i32
    %26 = vector.broadcast %c17_i32_7 : i32 to vector<10x18x128xi32>
    %27 = arith.cmpi sge, %16, %26 : vector<10x18x128xi32>
    %28 = arith.ori %25, %27 : vector<10x18x128xi1>
    %cst_8 = arith.constant 0.000000e+00 : f32
    %29 = vector.broadcast %cst_8 : f32 to vector<10x18x128xf32>
    %30 = arith.select %28, %29, %13 : vector<10x18x128xi1>, vector<10x18x128xf32>
    %31 = vector.extract_strided_slice %30 {offsets = [0, 0, 0], sizes = [10, 16, 128], strides = [1, 1, 1]} : vector<10x18x128xf32> to vector<10x16x128xf32>
    %32 = vector.extract_strided_slice %30 {offsets = [0, 1, 0], sizes = [10, 16, 128], strides = [1, 1, 1]} : vector<10x18x128xf32> to vector<10x16x128xf32>
    %33 = vector.extract_strided_slice %30 {offsets = [0, 2, 0], sizes = [10, 16, 128], strides = [1, 1, 1]} : vector<10x18x128xf32> to vector<10x16x128xf32>
    %34 = tpu.concatenate %31, %32, %33 in 2 : vector<10x16x128xf32>, vector<10x16x128xf32>, vector<10x16x128xf32> -> vector<10x16x384xf32>
    %35 = vector.extract_strided_slice %34 {offsets = [0, 0, 0], sizes = [8, 16, 384], strides = [1, 1, 1]} : vector<10x16x384xf32> to vector<8x16x384xf32>
    %36 = vector.shape_cast %35 : vector<8x16x384xf32> to vector<128x384xf32>
    %c0_9 = arith.constant 0 : index
    %c0_10 = arith.constant 0 : index
    %c0_11 = arith.constant 0 : index
    %37 = vector.load %arg3[%c0_9, %c0_10, %c0_11] : memref<3x384x128xf32, #tpu.memory_space<vmem>>, vector<1x384x128xf32>
    %38 = vector.shape_cast %37 : vector<1x384x128xf32> to vector<384x128xf32>
    %cst_12 = arith.constant dense<0.000000e+00> : vector<128x128xf32>
    %39 = tpu.matmul %36, %38, %cst_12 {dimension_numbers = #tpu.dot_dimension_numbers<[1], [0], [0], [1], [0, 0, 1, 1], [], []>} : vector<128x384xf32>, vector<384x128xf32>, vector<128x128xf32> -> vector<128x128xf32>
    %c0_13 = arith.constant 0 : index
    %c0_14 = arith.constant 0 : index
    %40 = vector.load %arg9[%c0_13, %c0_14] : memref<128x128xf32, #tpu.memory_space<vmem>>, vector<128x128xf32>
    tpu.vector_store %arg9[%c0_13, %c0_14], %39 {strides = array<i32>} : memref<128x128xf32, #tpu.memory_space<vmem>>, vector<128x128xf32>,
    %41 = vector.extract_strided_slice %34 {offsets = [1, 0, 0], sizes = [8, 16, 384], strides = [1, 1, 1]} : vector<10x16x384xf32> to vector<8x16x384xf32>
    %42 = vector.shape_cast %41 : vector<8x16x384xf32> to vector<128x384xf32>
    %c1 = arith.constant 1 : index
    %c0_15 = arith.constant 0 : index
    %c0_16 = arith.constant 0 : index
    %43 = vector.load %arg3[%c1, %c0_15, %c0_16] : memref<3x384x128xf32, #tpu.memory_space<vmem>>, vector<1x384x128xf32>
    %44 = vector.shape_cast %43 : vector<1x384x128xf32> to vector<384x128xf32>
    %cst_17 = arith.constant dense<0.000000e+00> : vector<128x128xf32>
    %45 = tpu.matmul %42, %44, %cst_17 {dimension_numbers = #tpu.dot_dimension_numbers<[1], [0], [0], [1], [0, 0, 1, 1], [], []>} : vector<128x384xf32>, vector<384x128xf32>, vector<128x128xf32> -> vector<128x128xf32>
    %c0_18 = arith.constant 0 : index
    %c0_19 = arith.constant 0 : index
    %46 = vector.load %arg9[%c0_18, %c0_19] : memref<128x128xf32, #tpu.memory_space<vmem>>, vector<128x128xf32>
    %47 = arith.addf %46, %45 : vector<128x128xf32>
    %c0_20 = arith.constant 0 : index
    %c0_21 = arith.constant 0 : index
    %48 = vector.load %arg9[%c0_20, %c0_21] : memref<128x128xf32, #tpu.memory_space<vmem>>, vector<128x128xf32>
    tpu.vector_store %arg9[%c0_20, %c0_21], %47 {strides = array<i32>} : memref<128x128xf32, #tpu.memory_space<vmem>>, vector<128x128xf32>,
    %49 = vector.extract_strided_slice %34 {offsets = [2, 0, 0], sizes = [8, 16, 384], strides = [1, 1, 1]} : vector<10x16x384xf32> to vector<8x16x384xf32>
    %50 = vector.shape_cast %49 : vector<8x16x384xf32> to vector<128x384xf32>
    %c2 = arith.constant 2 : index
    %c0_22 = arith.constant 0 : index
    %c0_23 = arith.constant 0 : index
    %51 = vector.load %arg3[%c2, %c0_22, %c0_23] : memref<3x384x128xf32, #tpu.memory_space<vmem>>, vector<1x384x128xf32>
    %52 = vector.shape_cast %51 : vector<1x384x128xf32> to vector<384x128xf32>
    %cst_24 = arith.constant dense<0.000000e+00> : vector<128x128xf32>
    %53 = tpu.matmul %50, %52, %cst_24 {dimension_numbers = #tpu.dot_dimension_numbers<[1], [0], [0], [1], [0, 0, 1, 1], [], []>} : vector<128x384xf32>, vector<384x128xf32>, vector<128x128xf32> -> vector<128x128xf32>
    %c0_25 = arith.constant 0 : index
    %c0_26 = arith.constant 0 : index
    %54 = vector.load %arg9[%c0_25, %c0_26] : memref<128x128xf32, #tpu.memory_space<vmem>>, vector<128x128xf32>
    %55 = arith.addf %54, %53 : vector<128x128xf32>
    %c0_27 = arith.constant 0 : index
    %c0_28 = arith.constant 0 : index
    %56 = vector.load %arg9[%c0_27, %c0_28] : memref<128x128xf32, #tpu.memory_space<vmem>>, vector<128x128xf32>
    tpu.vector_store %arg9[%c0_27, %c0_28], %55 {strides = array<i32>} : memref<128x128xf32, #tpu.memory_space<vmem>>, vector<128x128xf32>,
    %c0_29 = arith.constant 0 : index
    %c0_30 = arith.constant 0 : index
    %57 = vector.load %arg9[%c0_29, %c0_30] : memref<128x128xf32, #tpu.memory_space<vmem>>, vector<128x128xf32>
    %c0_31 = arith.constant 0 : index
    %c0_32 = arith.constant 0 : index
    %c0_33 = arith.constant 0 : index
    %58 = vector.load %arg6[%c0_31, %c0_32, %c0_33] : memref<1x128x128xf32, #tpu.memory_space<vmem>>, vector<1x128x128xf32>
    %59 = vector.shape_cast %58 : vector<1x128x128xf32> to vector<128x128xf32>
    %60 = vector.shape_cast %57 : vector<128x128xf32> to vector<1x128x128xf32>
    tpu.vector_store %arg6[%c0_31, %c0_32, %c0_33], %60 {strides = array<i32>} : memref<1x128x128xf32, #tpu.memory_space<vmem>>, vector<1x128x128xf32>,
    %cst_34 = arith.constant dense<0.000000e+00> : vector<128xf32>
    %61 = vector.multi_reduction <add>, %57, %cst_34 [0] : vector<128x128xf32> to vector<128xf32>
    %62 = vector.shape_cast %61 : vector<128xf32> to vector<1x128xf32>
    %cst_35 = arith.constant 7.812500e-03 : f32
    %63 = vector.broadcast %cst_35 : f32 to vector<1x128xf32>
    %64 = arith.mulf %62, %63 : vector<1x128xf32>
    %65 = vector.broadcast %64 : vector<1x128xf32> to vector<128x128xf32>
    %66 = arith.subf %57, %65 : vector<128x128xf32>
    %67 = arith.mulf %66, %66 : vector<128x128xf32>
    %cst_36 = arith.constant dense<0.000000e+00> : vector<128xf32>
    %68 = vector.multi_reduction <add>, %67, %cst_36 [0] : vector<128x128xf32> to vector<128xf32>
    %69 = vector.shape_cast %68 : vector<128xf32> to vector<1x128xf32>
    %70 = vector.shape_cast %62 : vector<1x128xf32> to vector<1x128xf32>
    %71 = vector.broadcast %70 : vector<1x128xf32> to vector<8x128xf32>
    %c0_37 = arith.constant 0 : index
    %c0_38 = arith.constant 0 : index
    %c0_39 = arith.constant 0 : index
    %72 = vector.load %arg7[%c0_37, %c0_38, %c0_39] : memref<1x8x128xf32, #tpu.memory_space<vmem>>, vector<1x8x128xf32>
    %73 = vector.shape_cast %72 : vector<1x8x128xf32> to vector<8x128xf32>
    %74 = vector.shape_cast %71 : vector<8x128xf32> to vector<1x8x128xf32>
    tpu.vector_store %arg7[%c0_37, %c0_38, %c0_39], %74 {strides = array<i32>} : memref<1x8x128xf32, #tpu.memory_space<vmem>>, vector<1x8x128xf32>,
    %75 = vector.shape_cast %69 : vector<1x128xf32> to vector<1x128xf32>
    %76 = vector.broadcast %75 : vector<1x128xf32> to vector<8x128xf32>
    %c0_40 = arith.constant 0 : index
    %c0_41 = arith.constant 0 : index
    %c0_42 = arith.constant 0 : index
    %77 = vector.load %arg8[%c0_40, %c0_41, %c0_42] : memref<1x8x128xf32, #tpu.memory_space<vmem>>, vector<1x8x128xf32>
    %78 = vector.shape_cast %77 : vector<1x8x128xf32> to vector<8x128xf32>
    %79 = vector.shape_cast %76 : vector<8x128xf32> to vector<1x8x128xf32>
    tpu.vector_store %arg8[%c0_40, %c0_41, %c0_42], %79 {strides = array<i32>} : memref<1x8x128xf32, #tpu.memory_space<vmem>>, vector<1x8x128xf32>,
    return
  }
  func.func @transform_0(%arg0: i32, %arg1: i32) -> (i32, i32, i32, i32) {
    %c0_i32 = arith.constant 0 : i32
    %c0_i32_0 = arith.constant 0 : i32
    %c0_i32_1 = arith.constant 0 : i32
    %c0_i32_2 = arith.constant 0 : i32
    return %arg0, %c0_i32, %c0_i32_0, %c0_i32_1 : i32, i32, i32, i32
  }
  func.func @transform_1(%arg0: i32, %arg1: i32) -> (i32, i32, i32) {
    %c0_i32 = arith.constant 0 : i32
    %c0_i32_0 = arith.constant 0 : i32
    %c0_i32_1 = arith.constant 0 : i32
    %c0_i32_2 = arith.constant 0 : i32
    return %c0_i32, %c0_i32_0, %c0_i32_1 : i32, i32, i32
  }
  func.func @transform_2(%arg0: i32, %arg1: i32) -> (i32, i32) {
    %c0_i32 = arith.constant 0 : i32
    %c0_i32_0 = arith.constant 0 : i32
    %c0_i32_1 = arith.constant 0 : i32
    return %c0_i32, %c0_i32_0 : i32, i32
  }
  func.func @transform_3(%arg0: i32, %arg1: i32) -> (i32, i32) {
    %c0_i32 = arith.constant 0 : i32
    %c0_i32_0 = arith.constant 0 : i32
    %c0_i32_1 = arith.constant 0 : i32
    return %c0_i32, %c0_i32_0 : i32, i32
  }
  func.func @transform_4(%arg0: i32, %arg1: i32) -> (i32, i32, i32) {
    %c0_i32 = arith.constant 0 : i32
    %c0_i32_0 = arith.constant 0 : i32
    return %arg0, %arg1, %c0_i32 : i32, i32, i32
  }
  func.func @transform_5(%arg0: i32, %arg1: i32) -> (i32, i32, i32) {
    %c2_i32 = arith.constant 2 : i32
    %0 = arith.muli %arg0, %c2_i32 : i32
    %1 = arith.addi %0, %arg1 : i32
    %c0_i32 = arith.constant 0 : i32
    %c0_i32_0 = arith.constant 0 : i32
    %c0_i32_1 = arith.constant 0 : i32
    return %1, %c0_i32, %c0_i32_0 : i32, i32, i32
  }
  func.func @transform_6(%arg0: i32, %arg1: i32) -> (i32, i32, i32) {
    %c2_i32 = arith.constant 2 : i32
    %0 = arith.muli %arg0, %c2_i32 : i32
    %1 = arith.addi %0, %arg1 : i32
    %c0_i32 = arith.constant 0 : i32
    %c0_i32_0 = arith.constant 0 : i32
    %c0_i32_1 = arith.constant 0 : i32
    return %1, %c0_i32, %c0_i32_0 : i32, i32, i32
  }
}

module attributes {stable_mosaic.version = 11 : i64} {
  func.func @_mm_stats_kernel(%arg0: i32, %arg1: memref<128x128xf32, #tpu.memory_space<vmem>>, %arg2: memref<128x128xf32, #tpu.memory_space<vmem>>, %arg3: memref<1x128xf32, #tpu.memory_space<vmem>>, %arg4: memref<1x128xf32, #tpu.memory_space<vmem>>, %arg5: memref<128x128xf32, #tpu.memory_space<vmem>>, %arg6: memref<1x8x128xf32, #tpu.memory_space<vmem>>, %arg7: memref<1x8x128xf32, #tpu.memory_space<vmem>>) attributes {dimension_semantics = [#tpu.dimension_semantics<parallel>], iteration_bounds = array<i64: 4>, scalar_prefetch = 0 : i64, scratch_operands = 0 : i64, tpu.core_type = #tpu.core_type<tc>, window_params = [{transform_indices = @transform_0, window_bounds = array<i64: 128, 128>}, {pipeline_mode = #tpu.pipeline_mode<synchronous>, transform_indices = @transform_1, window_bounds = array<i64: 128, 128>}, {pipeline_mode = #tpu.pipeline_mode<synchronous>, transform_indices = @transform_2, window_bounds = array<i64: 1, 128>}, {pipeline_mode = #tpu.pipeline_mode<synchronous>, transform_indices = @transform_3, window_bounds = array<i64: 1, 128>}, {transform_indices = @transform_4, window_bounds = array<i64: 128, 128>}, {transform_indices = @transform_5, window_bounds = array<i64: 1, 8, 128>}, {transform_indices = @transform_6, window_bounds = array<i64: 1, 8, 128>}]} {
    %c0 = arith.constant 0 : index
    %c0_0 = arith.constant 0 : index
    %0 = vector.load %arg1[%c0, %c0_0] : memref<128x128xf32, #tpu.memory_space<vmem>>, vector<128x128xf32>
    %c0_1 = arith.constant 0 : index
    %c0_2 = arith.constant 0 : index
    %1 = vector.load %arg3[%c0_1, %c0_2] : memref<1x128xf32, #tpu.memory_space<vmem>>, vector<1x128xf32>
    %2 = vector.broadcast %1 : vector<1x128xf32> to vector<128x128xf32>
    %3 = arith.mulf %0, %2 : vector<128x128xf32>
    %c0_3 = arith.constant 0 : index
    %c0_4 = arith.constant 0 : index
    %4 = vector.load %arg4[%c0_3, %c0_4] : memref<1x128xf32, #tpu.memory_space<vmem>>, vector<1x128xf32>
    %5 = vector.broadcast %4 : vector<1x128xf32> to vector<128x128xf32>
    %6 = arith.addf %3, %5 : vector<128x128xf32>
    %cst = arith.constant 0.000000e+00 : f32
    %7 = vector.broadcast %cst : f32 to vector<128x128xf32>
    %8 = arith.maximumf %6, %7 : vector<128x128xf32>
    %c0_5 = arith.constant 0 : index
    %c0_6 = arith.constant 0 : index
    %9 = vector.load %arg2[%c0_5, %c0_6] : memref<128x128xf32, #tpu.memory_space<vmem>>, vector<128x128xf32>
    %cst_7 = arith.constant dense<0.000000e+00> : vector<128x128xf32>
    %10 = tpu.matmul %8, %9, %cst_7 {dimension_numbers = #tpu.dot_dimension_numbers<[1], [0], [0], [1], [0, 0, 1, 1], [], []>} : vector<128x128xf32>, vector<128x128xf32>, vector<128x128xf32> -> vector<128x128xf32>
    %c0_8 = arith.constant 0 : index
    %c0_9 = arith.constant 0 : index
    %11 = vector.load %arg5[%c0_8, %c0_9] : memref<128x128xf32, #tpu.memory_space<vmem>>, vector<128x128xf32>
    tpu.vector_store %arg5[%c0_8, %c0_9], %10 {strides = array<i32>} : memref<128x128xf32, #tpu.memory_space<vmem>>, vector<128x128xf32>,
    %cst_10 = arith.constant dense<0.000000e+00> : vector<128xf32>
    %12 = vector.multi_reduction <add>, %10, %cst_10 [0] : vector<128x128xf32> to vector<128xf32>
    %13 = vector.shape_cast %12 : vector<128xf32> to vector<1x128xf32>
    %cst_11 = arith.constant 7.812500e-03 : f32
    %14 = vector.broadcast %cst_11 : f32 to vector<1x128xf32>
    %15 = arith.mulf %13, %14 : vector<1x128xf32>
    %16 = vector.broadcast %15 : vector<1x128xf32> to vector<128x128xf32>
    %17 = arith.subf %10, %16 : vector<128x128xf32>
    %18 = arith.mulf %17, %17 : vector<128x128xf32>
    %cst_12 = arith.constant dense<0.000000e+00> : vector<128xf32>
    %19 = vector.multi_reduction <add>, %18, %cst_12 [0] : vector<128x128xf32> to vector<128xf32>
    %20 = vector.shape_cast %19 : vector<128xf32> to vector<1x128xf32>
    %21 = vector.shape_cast %13 : vector<1x128xf32> to vector<1x128xf32>
    %22 = vector.broadcast %21 : vector<1x128xf32> to vector<8x128xf32>
    %c0_13 = arith.constant 0 : index
    %c0_14 = arith.constant 0 : index
    %c0_15 = arith.constant 0 : index
    %23 = vector.load %arg6[%c0_13, %c0_14, %c0_15] : memref<1x8x128xf32, #tpu.memory_space<vmem>>, vector<1x8x128xf32>
    %24 = vector.shape_cast %23 : vector<1x8x128xf32> to vector<8x128xf32>
    %25 = vector.shape_cast %22 : vector<8x128xf32> to vector<1x8x128xf32>
    tpu.vector_store %arg6[%c0_13, %c0_14, %c0_15], %25 {strides = array<i32>} : memref<1x8x128xf32, #tpu.memory_space<vmem>>, vector<1x8x128xf32>,
    %26 = vector.shape_cast %20 : vector<1x128xf32> to vector<1x128xf32>
    %27 = vector.broadcast %26 : vector<1x128xf32> to vector<8x128xf32>
    %c0_16 = arith.constant 0 : index
    %c0_17 = arith.constant 0 : index
    %c0_18 = arith.constant 0 : index
    %28 = vector.load %arg7[%c0_16, %c0_17, %c0_18] : memref<1x8x128xf32, #tpu.memory_space<vmem>>, vector<1x8x128xf32>
    %29 = vector.shape_cast %28 : vector<1x8x128xf32> to vector<8x128xf32>
    %30 = vector.shape_cast %27 : vector<8x128xf32> to vector<1x8x128xf32>
    tpu.vector_store %arg7[%c0_16, %c0_17, %c0_18], %30 {strides = array<i32>} : memref<1x8x128xf32, #tpu.memory_space<vmem>>, vector<1x8x128xf32>,
    return
  }
  func.func @transform_0(%arg0: i32) -> (i32, i32) {
    %c0_i32 = arith.constant 0 : i32
    %c0_i32_0 = arith.constant 0 : i32
    return %arg0, %c0_i32 : i32, i32
  }
  func.func @transform_1(%arg0: i32) -> (i32, i32) {
    %c0_i32 = arith.constant 0 : i32
    %c0_i32_0 = arith.constant 0 : i32
    %c0_i32_1 = arith.constant 0 : i32
    return %c0_i32, %c0_i32_0 : i32, i32
  }
  func.func @transform_2(%arg0: i32) -> (i32, i32) {
    %c0_i32 = arith.constant 0 : i32
    %c0_i32_0 = arith.constant 0 : i32
    %c0_i32_1 = arith.constant 0 : i32
    return %c0_i32, %c0_i32_0 : i32, i32
  }
  func.func @transform_3(%arg0: i32) -> (i32, i32) {
    %c0_i32 = arith.constant 0 : i32
    %c0_i32_0 = arith.constant 0 : i32
    %c0_i32_1 = arith.constant 0 : i32
    return %c0_i32, %c0_i32_0 : i32, i32
  }
  func.func @transform_4(%arg0: i32) -> (i32, i32) {
    %c0_i32 = arith.constant 0 : i32
    %c0_i32_0 = arith.constant 0 : i32
    return %arg0, %c0_i32 : i32, i32
  }
  func.func @transform_5(%arg0: i32) -> (i32, i32, i32) {
    %c0_i32 = arith.constant 0 : i32
    %c0_i32_0 = arith.constant 0 : i32
    %c0_i32_1 = arith.constant 0 : i32
    return %arg0, %c0_i32, %c0_i32_0 : i32, i32, i32
  }
  func.func @transform_6(%arg0: i32) -> (i32, i32, i32) {
    %c0_i32 = arith.constant 0 : i32
    %c0_i32_0 = arith.constant 0 : i32
    %c0_i32_1 = arith.constant 0 : i32
    return %arg0, %c0_i32, %c0_i32_0 : i32, i32, i32
  }
}

module attributes {stable_mosaic.version = 11 : i64} {
  func.func @_epilogue_proj_kernel(%arg0: i32, %arg1: memref<128x128xf32, #tpu.memory_space<vmem>>, %arg2: memref<1x128xf32, #tpu.memory_space<vmem>>, %arg3: memref<1x128xf32, #tpu.memory_space<vmem>>, %arg4: memref<128x128xf32, #tpu.memory_space<vmem>>, %arg5: memref<1x128xf32, #tpu.memory_space<vmem>>, %arg6: memref<1x128xf32, #tpu.memory_space<vmem>>, %arg7: memref<128x128xf32, #tpu.memory_space<vmem>>) attributes {dimension_semantics = [#tpu.dimension_semantics<parallel>], iteration_bounds = array<i64: 4>, scalar_prefetch = 0 : i64, scratch_operands = 0 : i64, tpu.core_type = #tpu.core_type<tc>, window_params = [{transform_indices = @transform_0, window_bounds = array<i64: 128, 128>}, {pipeline_mode = #tpu.pipeline_mode<synchronous>, transform_indices = @transform_1, window_bounds = array<i64: 1, 128>}, {pipeline_mode = #tpu.pipeline_mode<synchronous>, transform_indices = @transform_2, window_bounds = array<i64: 1, 128>}, {transform_indices = @transform_3, window_bounds = array<i64: 128, 128>}, {pipeline_mode = #tpu.pipeline_mode<synchronous>, transform_indices = @transform_4, window_bounds = array<i64: 1, 128>}, {pipeline_mode = #tpu.pipeline_mode<synchronous>, transform_indices = @transform_5, window_bounds = array<i64: 1, 128>}, {transform_indices = @transform_6, window_bounds = array<i64: 128, 128>}]} {
    %c0 = arith.constant 0 : index
    %c0_0 = arith.constant 0 : index
    %0 = vector.load %arg1[%c0, %c0_0] : memref<128x128xf32, #tpu.memory_space<vmem>>, vector<128x128xf32>
    %c0_1 = arith.constant 0 : index
    %c0_2 = arith.constant 0 : index
    %1 = vector.load %arg2[%c0_1, %c0_2] : memref<1x128xf32, #tpu.memory_space<vmem>>, vector<1x128xf32>
    %2 = vector.broadcast %1 : vector<1x128xf32> to vector<128x128xf32>
    %3 = arith.mulf %0, %2 : vector<128x128xf32>
    %c0_3 = arith.constant 0 : index
    %c0_4 = arith.constant 0 : index
    %4 = vector.load %arg3[%c0_3, %c0_4] : memref<1x128xf32, #tpu.memory_space<vmem>>, vector<1x128xf32>
    %5 = vector.broadcast %4 : vector<1x128xf32> to vector<128x128xf32>
    %6 = arith.addf %3, %5 : vector<128x128xf32>
    %c0_5 = arith.constant 0 : index
    %c0_6 = arith.constant 0 : index
    %7 = vector.load %arg4[%c0_5, %c0_6] : memref<128x128xf32, #tpu.memory_space<vmem>>, vector<128x128xf32>
    %c0_7 = arith.constant 0 : index
    %c0_8 = arith.constant 0 : index
    %8 = vector.load %arg5[%c0_7, %c0_8] : memref<1x128xf32, #tpu.memory_space<vmem>>, vector<1x128xf32>
    %9 = vector.broadcast %8 : vector<1x128xf32> to vector<128x128xf32>
    %10 = arith.mulf %7, %9 : vector<128x128xf32>
    %11 = arith.addf %6, %10 : vector<128x128xf32>
    %c0_9 = arith.constant 0 : index
    %c0_10 = arith.constant 0 : index
    %12 = vector.load %arg6[%c0_9, %c0_10] : memref<1x128xf32, #tpu.memory_space<vmem>>, vector<1x128xf32>
    %13 = vector.broadcast %12 : vector<1x128xf32> to vector<128x128xf32>
    %14 = arith.addf %11, %13 : vector<128x128xf32>
    %cst = arith.constant 0.000000e+00 : f32
    %15 = vector.broadcast %cst : f32 to vector<128x128xf32>
    %16 = arith.maximumf %14, %15 : vector<128x128xf32>
    %c0_11 = arith.constant 0 : index
    %c0_12 = arith.constant 0 : index
    %17 = vector.load %arg7[%c0_11, %c0_12] : memref<128x128xf32, #tpu.memory_space<vmem>>, vector<128x128xf32>
    tpu.vector_store %arg7[%c0_11, %c0_12], %16 {strides = array<i32>} : memref<128x128xf32, #tpu.memory_space<vmem>>, vector<128x128xf32>,
    return
  }
  func.func @transform_0(%arg0: i32) -> (i32, i32) {
    %c0_i32 = arith.constant 0 : i32
    %c0_i32_0 = arith.constant 0 : i32
    return %arg0, %c0_i32 : i32, i32
  }
  func.func @transform_1(%arg0: i32) -> (i32, i32) {
    %c0_i32 = arith.constant 0 : i32
    %c0_i32_0 = arith.constant 0 : i32
    %c0_i32_1 = arith.constant 0 : i32
    return %c0_i32, %c0_i32_0 : i32, i32
  }
  func.func @transform_2(%arg0: i32) -> (i32, i32) {
    %c0_i32 = arith.constant 0 : i32
    %c0_i32_0 = arith.constant 0 : i32
    %c0_i32_1 = arith.constant 0 : i32
    return %c0_i32, %c0_i32_0 : i32, i32
  }
  func.func @transform_3(%arg0: i32) -> (i32, i32) {
    %c0_i32 = arith.constant 0 : i32
    %c0_i32_0 = arith.constant 0 : i32
    return %arg0, %c0_i32 : i32, i32
  }
  func.func @transform_4(%arg0: i32) -> (i32, i32) {
    %c0_i32 = arith.constant 0 : i32
    %c0_i32_0 = arith.constant 0 : i32
    %c0_i32_1 = arith.constant 0 : i32
    return %c0_i32, %c0_i32_0 : i32, i32
  }
  func.func @transform_5(%arg0: i32) -> (i32, i32) {
    %c0_i32 = arith.constant 0 : i32
    %c0_i32_0 = arith.constant 0 : i32
    %c0_i32_1 = arith.constant 0 : i32
    return %c0_i32, %c0_i32_0 : i32, i32
  }
  func.func @transform_6(%arg0: i32) -> (i32, i32) {
    %c0_i32 = arith.constant 0 : i32
    %c0_i32_0 = arith.constant 0 : i32
    return %arg0, %c0_i32 : i32, i32
  }
}

</mosaic_0001>

<llo_original>
// kernel: bottleneck_forward.4
$region0: #{bottleneck_forward.4}
  #allocation0 [shape = 'u32[]', space=smem, size = 0x4, offset = 0x4, fixed_abs, tag = 'smem constant byte address 0x4 - core index']
  #allocation1 [shape = 'u32[72,128]{1,0:T(1,128)}', space=vmem, size = 0x9000, scoped, tag = 'internal scratch']
  %s0 = inlined_call_operand.vmem [shape: f32[512,128], index: 0, kind: input, shape index: {}]
  %s1 = inlined_call_operand.vmem [shape: f32[128,128], index: 1, kind: input, shape index: {}]
  %s2 = inlined_call_operand.vmem [shape: f32[128,128], index: 2, kind: input, shape index: {}]
  %s3 = inlined_call_operand.vmem [shape: f32[512,128], index: 3, kind: output, shape index: {0}]
  %s4 = inlined_call_operand.vmem [shape: f32[4,8,128], index: 4, kind: output, shape index: {1}]
  %s5 = inlined_call_operand.vmem [shape: f32[4,8,128], index: 5, kind: output, shape index: {2}]
  %s6 = inlined_call_operand.vmem [shape: f32[512,128], index: 6, kind: output, shape index: {3}]
  %s7 = inlined_call_operand.vmem [shape: f32[4,8,128], index: 7, kind: output, shape index: {4}]
  %s8 = inlined_call_operand.vmem [shape: f32[4,8,128], index: 8, kind: output, shape index: {5}]
  %9 = xla_tuple %s3, %s4, %s5, %s6, %s7, %s8
  %s10 = sld [smem:[#allocation0]]
  $region85: #{bottleneck_forward.4} parent=0
    _
  %s12 = ssub.s32 1, %s10
  %s13 = scalar_select 0, %s12, %s10
  loop: start=0, step=1, limit=6
  $region2: #{bottleneck_forward.4} parent=0 // loop_pre_header
    _
  $region3: #{bottleneck_forward.4} parent=0 // loop_header
    %s15 = sphi 0, %s19
    %p16 = scmp.ge.s32.totalorder %s15, 6
    %s25 = sphi 0, %s27
    %s28 = sphi 0, %s25
    %s29 = sphi 0, %s28
    %s45 = sphi 0, %s29
    %s49 = sphi 0, %s49
    %s51 = sphi 0, %s49
    %s52 = sphi 0, %s51
    %s66 = sphi 0, %s52
    %s70 = sphi 0, %s70
    %s72 = sphi 0, %s70
    %s73 = sphi 0, %s72
    %s87 = sphi 0, %s73
    %s93 = sphi 0, %s95
    %s96 = sphi 0, %s93
    %s97 = sphi 0, %s96
    %s113 = sphi 0, %s97
    %s119 = sphi 0, %s121
    %s122 = sphi 0, %s119
    %s123 = sphi 0, %s122
    %s139 = sphi 0, %s123
    %s145 = sphi 0, %s147
    %s148 = sphi 0, %s145
    %s149 = sphi 0, %s148
    %s165 = sphi 0, %s149
    %s171 = sphi 0, %s173
    %s174 = sphi 0, %s171
    %s175 = sphi 0, %s174
    %s191 = sphi 0, %s175
    %s197 = sphi 0, %s199
    %s200 = sphi 0, %s197
    %s201 = sphi 0, %s200
    %s217 = sphi 0, %s201
    %s223 = sphi 0, %s225
    %s226 = sphi 0, %s223
    %s227 = sphi 0, %s226
    %s243 = sphi 0, %s227
  $region4: #{bottleneck_forward.4} parent=0 // loop_header_branch
    %18 = sbr.rel (%p16) target = $region8
  $region5: #{bottleneck_forward.4} parent=0 // loop_body
    %s20 = ssub.s32 %s15, 1
    %s21 = ssub.s32 %s15, 2
    %s22 = sadd.s32 %s15, 1
    %s23 = ssub.s32 %s15, %s22
    %p24 = scmp.eq.s32.totalorder %s23, 0
    %s26 = sadd.s32 %s25, 1
    %s27 = scalar_select %p24, %s25, %s26
    %p30 = pneg %p24
    %p31 = scmp.eq.s32.totalorder %s15, 3
    %p32 = por %p30, %p31
    %p33 = scmp.ne.s32.totalorder %s25, %s28
    %p34 = scmp.eq.s32.totalorder %s15, 0
    %p35 = por %p33, %p34
    %p36 = scmp.ne.s32.totalorder %s25, %s28
    %p37 = scmp.eq.s32.totalorder %s20, 3
    %p38 = por %p36, %p37
    %p39 = scmp.ne.s32.totalorder %s28, %s29
    %p40 = scmp.eq.s32.totalorder %s20, 0
    %p41 = por %p39, %p40
    %p42 = scmp.ne.s32.totalorder %s28, %s29
    %p43 = scmp.eq.s32.totalorder %s21, 3
    %p44 = por %p42, %p43
    %p46 = scmp.ne.s32.totalorder %s29, %s45
    %p47 = scmp.eq.s32.totalorder %s21, 0
    %p48 = por %p46, %p47
    %s50 = sadd.s32 %s49, 1
    %p53 = scmp.eq.s32.totalorder %s15, 3
    %p54 = scmp.ne.s32.totalorder %s49, %s51
    %p55 = scmp.eq.s32.totalorder %s15, 0
    %p56 = por %p54, %p55
    %p57 = scmp.ne.s32.totalorder %s49, %s51
    %p58 = scmp.eq.s32.totalorder %s20, 3
    %p59 = por %p57, %p58
    %p60 = scmp.ne.s32.totalorder %s51, %s52
    %p61 = scmp.eq.s32.totalorder %s20, 0
    %p62 = por %p60, %p61
    %p63 = scmp.ne.s32.totalorder %s51, %s52
    %p64 = scmp.eq.s32.totalorder %s21, 3
    %p65 = por %p63, %p64
    %p67 = scmp.ne.s32.totalorder %s52, %s66
    %p68 = scmp.eq.s32.totalorder %s21, 0
    %p69 = por %p67, %p68
    %s71 = sadd.s32 %s70, 1
    %p74 = scmp.eq.s32.totalorder %s15, 3
    %p75 = scmp.ne.s32.totalorder %s70, %s72
    %p76 = scmp.eq.s32.totalorder %s15, 0
    %p77 = por %p75, %p76
    %p78 = scmp.ne.s32.totalorder %s70, %s72
    %p79 = scmp.eq.s32.totalorder %s20, 3
    %p80 = por %p78, %p79
    %p81 = scmp.ne.s32.totalorder %s72, %s73
    %p82 = scmp.eq.s32.totalorder %s20, 0
    %p83 = por %p81, %p82
    %p84 = scmp.ne.s32.totalorder %s72, %s73
    %p85 = scmp.eq.s32.totalorder %s21, 3
    %p86 = por %p84, %p85
    %p88 = scmp.ne.s32.totalorder %s73, %s87
    %p89 = scmp.eq.s32.totalorder %s21, 0
    %p90 = por %p88, %p89
    %s91 = ssub.s32 %s15, %s22
    %p92 = scmp.eq.s32.totalorder %s91, 0
    %s94 = sadd.s32 %s93, 1
    %s95 = scalar_select %p92, %s93, %s94
    %p98 = pneg %p92
    %p99 = scmp.eq.s32.totalorder %s15, 3
    %p100 = por %p98, %p99
    %p101 = scmp.ne.s32.totalorder %s93, %s96
    %p102 = scmp.eq.s32.totalorder %s15, 0
    %p103 = por %p101, %p102
    %p104 = scmp.ne.s32.totalorder %s93, %s96
    %p105 = scmp.eq.s32.totalorder %s20, 3
    %p106 = por %p104, %p105
    %p107 = scmp.ne.s32.totalorder %s96, %s97
    %p108 = scmp.eq.s32.totalorder %s20, 0
    %p109 = por %p107, %p108
    %p110 = scmp.ne.s32.totalorder %s96, %s97
    %p111 = scmp.eq.s32.totalorder %s21, 3
    %p112 = por %p110, %p111
    %p114 = scmp.ne.s32.totalorder %s97, %s113
    %p115 = scmp.eq.s32.totalorder %s21, 0
    %p116 = por %p114, %p115
    %s117 = ssub.s32 %s15, %s22
    %p118 = scmp.eq.s32.totalorder %s117, 0
    %s120 = sadd.s32 %s119, 1
    %s121 = scalar_select %p118, %s119, %s120
    %p124 = pneg %p118
    %p125 = scmp.eq.s32.totalorder %s15, 3
    %p126 = por %p124, %p125
    %p127 = scmp.ne.s32.totalorder %s119, %s122
    %p128 = scmp.eq.s32.totalorder %s15, 0
    %p129 = por %p127, %p128
    %p130 = scmp.ne.s32.totalorder %s119, %s122
    %p131 = scmp.eq.s32.totalorder %s20, 3
    %p132 = por %p130, %p131
    %p133 = scmp.ne.s32.totalorder %s122, %s123
    %p134 = scmp.eq.s32.totalorder %s20, 0
    %p135 = por %p133, %p134
    %p136 = scmp.ne.s32.totalorder %s122, %s123
    %p137 = scmp.eq.s32.totalorder %s21, 3
    %p138 = por %p136, %p137
    %p140 = scmp.ne.s32.totalorder %s123, %s139
    %p141 = scmp.eq.s32.totalorder %s21, 0
    %p142 = por %p140, %p141
    %s143 = ssub.s32 %s15, %s22
    %p144 = scmp.eq.s32.totalorder %s143, 0
    %s146 = sadd.s32 %s145, 1
    %s147 = scalar_select %p144, %s145, %s146
    %p150 = pneg %p144
    %p151 = scmp.eq.s32.totalorder %s15, 3
    %p152 = por %p150, %p151
    %p153 = scmp.ne.s32.totalorder %s145, %s148
    %p154 = scmp.eq.s32.totalorder %s15, 0
    %p155 = por %p153, %p154
    %p156 = scmp.ne.s32.totalorder %s145, %s148
    %p157 = scmp.eq.s32.totalorder %s20, 3
    %p158 = por %p156, %p157
    %p159 = scmp.ne.s32.totalorder %s148, %s149
    %p160 = scmp.eq.s32.totalorder %s20, 0
    %p161 = por %p159, %p160
    %p162 = scmp.ne.s32.totalorder %s148, %s149
    %p163 = scmp.eq.s32.totalorder %s21, 3
    %p164 = por %p162, %p163
    %p166 = scmp.ne.s32.totalorder %s149, %s165
    %p167 = scmp.eq.s32.totalorder %s21, 0
    %p168 = por %p166, %p167
    %s169 = ssub.s32 %s15, %s22
    %p170 = scmp.eq.s32.totalorder %s169, 0
    %s172 = sadd.s32 %s171, 1
    %s173 = scalar_select %p170, %s171, %s172
    %p176 = pneg %p170
    %p177 = scmp.eq.s32.totalorder %s15, 3
    %p178 = por %p176, %p177
    %p179 = scmp.ne.s32.totalorder %s171, %s174
    %p180 = scmp.eq.s32.totalorder %s15, 0
    %p181 = por %p179, %p180
    %p182 = scmp.ne.s32.totalorder %s171, %s174
    %p183 = scmp.eq.s32.totalorder %s20, 3
    %p184 = por %p182, %p183
    %p185 = scmp.ne.s32.totalorder %s174, %s175
    %p186 = scmp.eq.s32.totalorder %s20, 0
    %p187 = por %p185, %p186
    %p188 = scmp.ne.s32.totalorder %s174, %s175
    %p189 = scmp.eq.s32.totalorder %s21, 3
    %p190 = por %p188, %p189
    %p192 = scmp.ne.s32.totalorder %s175, %s191
    %p193 = scmp.eq.s32.totalorder %s21, 0
    %p194 = por %p192, %p193
    %s195 = ssub.s32 %s15, %s22
    %p196 = scmp.eq.s32.totalorder %s195, 0
    %s198 = sadd.s32 %s197, 1
    %s199 = scalar_select %p196, %s197, %s198
    %p202 = pneg %p196
    %p203 = scmp.eq.s32.totalorder %s15, 3
    %p204 = por %p202, %p203
    %p205 = scmp.ne.s32.totalorder %s197, %s200
    %p206 = scmp.eq.s32.totalorder %s15, 0
    %p207 = por %p205, %p206
    %p208 = scmp.ne.s32.totalorder %s197, %s200
    %p209 = scmp.eq.s32.totalorder %s20, 3
    %p210 = por %p208, %p209
    %p211 = scmp.ne.s32.totalorder %s200, %s201
    %p212 = scmp.eq.s32.totalorder %s20, 0
    %p213 = por %p211, %p212
    %p214 = scmp.ne.s32.totalorder %s200, %s201
    %p215 = scmp.eq.s32.totalorder %s21, 3
    %p216 = por %p214, %p215
    %p218 = scmp.ne.s32.totalorder %s201, %s217
    %p219 = scmp.eq.s32.totalorder %s21, 0
    %p220 = por %p218, %p219
    %s221 = ssub.s32 %s15, %s22
    %p222 = scmp.eq.s32.totalorder %s221, 0
    %s224 = sadd.s32 %s223, 1
    %s225 = scalar_select %p222, %s223, %s224
    %p228 = pneg %p222
    %p229 = scmp.eq.s32.totalorder %s15, 3
    %p230 = por %p228, %p229
    %p231 = scmp.ne.s32.totalorder %s223, %s226
    %p232 = scmp.eq.s32.totalorder %s15, 0
    %p233 = por %p231, %p232
    %p234 = scmp.ne.s32.totalorder %s223, %s226
    %p235 = scmp.eq.s32.totalorder %s20, 3
    %p236 = por %p234, %p235
    %p237 = scmp.ne.s32.totalorder %s226, %s227
    %p238 = scmp.eq.s32.totalorder %s20, 0
    %p239 = por %p237, %p238
    %p240 = scmp.ne.s32.totalorder %s226, %s227
    %p241 = scmp.eq.s32.totalorder %s21, 3
    %p242 = por %p240, %p241
    %p244 = scmp.ne.s32.totalorder %s227, %s243
    %p245 = scmp.eq.s32.totalorder %s21, 0
    %p246 = por %p244, %p245
    %p247 = scmp.le.s32.totalorder 1, %s15
    %p248 = scmp.lt.s32.totalorder %s15, 5
    %p249 = pnand %p247, %p248
    %p250 = pneg %p249
    // Predicated region
    $region9: #{bottleneck_forward.4} parent=5 // pred_check
      _
    $region10: #{bottleneck_forward.4} parent=5 // pred_check_branch
      %252 = sbr.rel (%p249) target = $region12
    $region11: #{bottleneck_forward.4} parent=5 // pred_region
      %s253 = ssub.s32 %s15, 1
      // Predicated region
      $region13: #{bottleneck_forward.4} parent=11 // pred_check
        %p254 = pneg %p62
      $region14: #{bottleneck_forward.4} parent=11 // pred_check_branch
        %256 = sbr.rel (%p254) target = $region16
      $region15: #{bottleneck_forward.4} parent=11 // pred_region
        _
      $region16: #{bottleneck_forward.4} parent=11 // pred_fallthru
        _
      // Predicated region
      $region17: #{bottleneck_forward.4} parent=11 // pred_check
        %p257 = pneg %p83
      $region18: #{bottleneck_forward.4} parent=11 // pred_check_branch
        %259 = sbr.rel (%p257) target = $region20
      $region19: #{bottleneck_forward.4} parent=11 // pred_region
        _
      $region20: #{bottleneck_forward.4} parent=11 // pred_fallthru
        _
    $region12: #{bottleneck_forward.4} parent=5 // pred_fallthru
      _
    %p260 = scmp.lt.s32.totalorder %s15, 4
    // Predicated region
    $region21: #{bottleneck_forward.4} parent=5 // pred_check
      %p261 = pneg %p260
    $region22: #{bottleneck_forward.4} parent=5 // pred_check_branch
      %263 = sbr.rel (%p261) target = $region24
    $region23: #{bottleneck_forward.4} parent=5 // pred_region
      // Predicated region
      $region25: #{bottleneck_forward.4} parent=23 // pred_check
        %p264 = pneg %p35
      $region26: #{bottleneck_forward.4} parent=23 // pred_check_branch
        %266 = sbr.rel (%p264) target = $region28
      $region27: #{bottleneck_forward.4} parent=23 // pred_region
        %s267 = smul.u32 16, %s15
        %p268 = scmp.lt.s32.totalorder %s267, 63
        %s269 = scalar_select %p268, %s267, 63
        %s270 = smul.addr %s269, 8
        %s271 = scalar_lea.vmem %s0, %s270
        %s272 = smul.u32 16, %s15
      $region28: #{bottleneck_forward.4} parent=23 // pred_fallthru
        _
    $region24: #{bottleneck_forward.4} parent=5 // pred_fallthru
      _
    %p273 = scmp.le.s32.totalorder 1, %s15
    %p274 = scmp.lt.s32.totalorder %s15, 5
    %p275 = pnand %p273, %p274
    %p276 = pneg %p275
    // Predicated region
    $region29: #{bottleneck_forward.4} parent=5 // pred_check
      _
    $region30: #{bottleneck_forward.4} parent=5 // pred_check_branch
      %278 = sbr.rel (%p275) target = $region32
    $region31: #{bottleneck_forward.4} parent=5 // pred_region
      %s279 = ssub.s32 %s15, 1
      %s280 = smul.u32 16, %s20
      %p281 = scmp.lt.s32.totalorder %s280, 63
      %s282 = scalar_select %p281, %s280, 63
      %s283 = smul.addr %s282, 8
      %s284 = scalar_lea.vmem %s0, %s283
      %p285 = pneg %p41
      %p286 = pneg %p38
      %p287 = pneg %p62
      %p288 = pneg %p59
      %p289 = pneg %p83
      %p290 = pneg %p80
      %p291 = pneg %p109
      %p292 = pneg %p106
      %s293 = smul.u32 16, %s20
      %p294 = scmp.lt.s32.totalorder %s293, 63
      %s295 = scalar_select %p294, %s293, 63
      %s296 = smul.addr %s295, 8
      %s297 = scalar_lea.vmem %s3, %s296
      %p298 = pneg %p135
      %p299 = pneg %p132
      %p300 = scmp.lt.s32.totalorder %s20, 3
      %s301 = scalar_select %p300, %s20, 3
      %s302 = smul.addr %s301, 8
      %s303 = scalar_lea.vmem %s4, %s302
      %p304 = pneg %p161
      %p305 = pneg %p158
      %p306 = scmp.lt.s32.totalorder %s20, 3
      %s307 = scalar_select %p306, %s20, 3
      %s308 = smul.addr %s307, 8
      %s309 = scalar_lea.vmem %s5, %s308
      %p310 = pneg %p187
      %p311 = pneg %p184
      %s312 = smul.u32 16, %s20
      %p313 = scmp.lt.s32.totalorder %s312, 63
      %s314 = scalar_select %p313, %s312, 63
      %s315 = smul.addr %s314, 8
      %s316 = scalar_lea.vmem %s6, %s315
      %p317 = pneg %p213
      %p318 = pneg %p210
      %p319 = scmp.lt.s32.totalorder %s20, 3
      %s320 = scalar_select %p319, %s20, 3
      %s321 = smul.addr %s320, 8
      %s322 = scalar_lea.vmem %s7, %s321
      %p323 = pneg %p239
      %p324 = pneg %p236
      %p325 = scmp.lt.s32.totalorder %s20, 3
      %s326 = scalar_select %p325, %s20, 3
      %s327 = smul.addr %s326, 8
      %s328 = scalar_lea.vmem %s8, %s327
      %s329 = smul.u32 16, %s20
      %p330 = scmp.lt.s32.totalorder %s329, 63
      %s331 = scalar_select %p330, %s329, 63
      %s332 = smul.addr %s331, 8
      %s333 = scalar_lea.vmem %s0, %s332
      %s334 = smul.u32 16, %s20
      %s335 = smul.u32 16, %s20
      %p336 = scmp.lt.s32.totalorder %s335, 63
      %s337 = scalar_select %p336, %s335, 63
      %s338 = smul.addr %s337, 8
      %s339 = scalar_lea.vmem %s3, %s338
      %s340 = smul.u32 16, %s20
      %p341 = scmp.lt.s32.totalorder %s20, 3
      %s342 = scalar_select %p341, %s20, 3
      %s343 = smul.addr %s342, 8
      %s344 = scalar_lea.vmem %s4, %s343
      %p345 = scmp.lt.s32.totalorder %s20, 3
      %s346 = scalar_select %p345, %s20, 3
      %s347 = smul.addr %s346, 8
      %s348 = scalar_lea.vmem %s5, %s347
      %s349 = smul.u32 16, %s20
      %p350 = scmp.lt.s32.totalorder %s349, 63
      %s351 = scalar_select %p350, %s349, 63
      %s352 = smul.addr %s351, 8
      %s353 = scalar_lea.vmem %s6, %s352
      %s354 = smul.u32 16, %s20
      %p355 = scmp.lt.s32.totalorder %s20, 3
      %s356 = scalar_select %p355, %s20, 3
      %s357 = smul.addr %s356, 8
      %s358 = scalar_lea.vmem %s7, %s357
      %p359 = scmp.lt.s32.totalorder %s20, 3
      %s360 = scalar_select %p359, %s20, 3
      %s361 = smul.addr %s360, 8
      %s362 = scalar_lea.vmem %s8, %s361
      %v363 = vld [vmem:[%s333] sm:$0xff]
      %v364 = vld [vmem:[%s333 + $0x8] sm:$0xff]
      %v365 = vld [vmem:[%s333 + $0x10] sm:$0xff]
      %v366 = vld [vmem:[%s333 + $0x18] sm:$0xff]
      %v367 = vld [vmem:[%s333 + $0x20] sm:$0xff]
      %v368 = vld [vmem:[%s333 + $0x28] sm:$0xff]
      %v369 = vld [vmem:[%s333 + $0x30] sm:$0xff]
      %v370 = vld [vmem:[%s333 + $0x38] sm:$0xff]
      %v371 = vld [vmem:[%s333 + $0x40] sm:$0xff]
      %v372 = vld [vmem:[%s333 + $0x48] sm:$0xff]
      %v373 = vld [vmem:[%s333 + $0x50] sm:$0xff]
      %v374 = vld [vmem:[%s333 + $0x58] sm:$0xff]
      %v375 = vld [vmem:[%s333 + $0x60] sm:$0xff]
      %v376 = vld [vmem:[%s333 + $0x68] sm:$0xff]
      %v377 = vld [vmem:[%s333 + $0x70] sm:$0xff]
      %v378 = vld [vmem:[%s333 + $0x78] sm:$0xff]
      %v379 = vld [vmem:[%s1] sm:$0xff]
      %v380 = vld [vmem:[%s1 + $0x8] sm:$0xff]
      %v381 = vld [vmem:[%s1 + $0x10] sm:$0xff]
      %v382 = vld [vmem:[%s1 + $0x18] sm:$0xff]
      %v383 = vld [vmem:[%s1 + $0x20] sm:$0xff]
      %v384 = vld [vmem:[%s1 + $0x28] sm:$0xff]
      %v385 = vld [vmem:[%s1 + $0x30] sm:$0xff]
      %v386 = vld [vmem:[%s1 + $0x38] sm:$0xff]
      %v387 = vld [vmem:[%s1 + $0x40] sm:$0xff]
      %v388 = vld [vmem:[%s1 + $0x48] sm:$0xff]
      %v389 = vld [vmem:[%s1 + $0x50] sm:$0xff]
      %v390 = vld [vmem:[%s1 + $0x58] sm:$0xff]
      %v391 = vld [vmem:[%s1 + $0x60] sm:$0xff]
      %v392 = vld [vmem:[%s1 + $0x68] sm:$0xff]
      %v393 = vld [vmem:[%s1 + $0x70] sm:$0xff]
      %v394 = vld [vmem:[%s1 + $0x78] sm:$0xff]
      %395 = vmatpush.msra.mxu0 %v394
      %396 = vmatpush.msra.mxu0 %v393
      %397 = vmatpush.msra.mxu0 %v392
      %398 = vmatpush.msra.mxu0 %v391
      %399 = vmatpush.msra.mxu0 %v390
      %400 = vmatpush.msra.mxu0 %v389
      %401 = vmatpush.msra.mxu0 %v388
      %402 = vmatpush.msra.mxu0 %v387
      %403 = vmatpush.msra.mxu0 %v386
      %404 = vmatpush.msra.mxu0 %v385
      %405 = vmatpush.msra.mxu0 %v384
      %406 = vmatpush.msra.mxu0 %v383
      %407 = vmatpush.msra.mxu0 %v382
      %408 = vmatpush.msra.mxu0 %v381
      %409 = vmatpush.msra.mxu0 %v380
      %410 = vmatpush.msra.mxu0 %v379
      %411 = vmatmul.f32.gmra.mxu0 %v363
      %v412 = vpop.f32.mrf.mxu0
      %v413 = vadd.f32 0.0, %v412
      %414 = vmatmul.f32.gmra.mxu0 %v364
      %v415 = vpop.f32.mrf.mxu0
      %v416 = vadd.f32 0.0, %v415
      %417 = vmatmul.f32.gmra.mxu0 %v365
      %v418 = vpop.f32.mrf.mxu0
      %v419 = vadd.f32 0.0, %v418
      %420 = vmatmul.f32.gmra.mxu0 %v366
      %v421 = vpop.f32.mrf.mxu0
      %v422 = vadd.f32 0.0, %v421
      %423 = vmatmul.f32.gmra.mxu0 %v367
      %v424 = vpop.f32.mrf.mxu0
      %v425 = vadd.f32 0.0, %v424
      %426 = vmatmul.f32.gmra.mxu0 %v368
      %v427 = vpop.f32.mrf.mxu0
      %v428 = vadd.f32 0.0, %v427
      %429 = vmatmul.f32.gmra.mxu0 %v369
      %v430 = vpop.f32.mrf.mxu0
      %v431 = vadd.f32 0.0, %v430
      %432 = vmatmul.f32.gmra.mxu0 %v370
      %v433 = vpop.f32.mrf.mxu0
      %v434 = vadd.f32 0.0, %v433
      %435 = vmatmul.f32.gmra.mxu0 %v371
      %v436 = vpop.f32.mrf.mxu0
      %v437 = vadd.f32 0.0, %v436
      %438 = vmatmul.f32.gmra.mxu0 %v372
      %v439 = vpop.f32.mrf.mxu0
      %v440 = vadd.f32 0.0, %v439
      %441 = vmatmul.f32.gmra.mxu0 %v373
      %v442 = vpop.f32.mrf.mxu0
      %v443 = vadd.f32 0.0, %v442
      %444 = vmatmul.f32.gmra.mxu0 %v374
      %v445 = vpop.f32.mrf.mxu0
      %v446 = vadd.f32 0.0, %v445
      %447 = vmatmul.f32.gmra.mxu0 %v375
      %v448 = vpop.f32.mrf.mxu0
      %v449 = vadd.f32 0.0, %v448
      %450 = vmatmul.f32.gmra.mxu0 %v376
      %v451 = vpop.f32.mrf.mxu0
      %v452 = vadd.f32 0.0, %v451
      %453 = vmatmul.f32.gmra.mxu0 %v377
      %v454 = vpop.f32.mrf.mxu0
      %v455 = vadd.f32 0.0, %v454
      %456 = vmatmul.f32.gmra.mxu0 %v378
      %v457 = vpop.f32.mrf.mxu0
      %v458 = vadd.f32 0.0, %v457
      %459 = vdwg.mxu0
      %460 = vst [vmem:[%s339] sm:$0xff] %v413
      %461 = vst [vmem:[%s339 + $0x8] sm:$0xff] %v416
      %462 = vst [vmem:[%s339 + $0x10] sm:$0xff] %v419
      %463 = vst [vmem:[%s339 + $0x18] sm:$0xff] %v422
      %464 = vst [vmem:[%s339 + $0x20] sm:$0xff] %v425
      %465 = vst [vmem:[%s339 + $0x28] sm:$0xff] %v428
      %466 = vst [vmem:[%s339 + $0x30] sm:$0xff] %v431
      %467 = vst [vmem:[%s339 + $0x38] sm:$0xff] %v434
      %468 = vst [vmem:[%s339 + $0x40] sm:$0xff] %v437
      %469 = vst [vmem:[%s339 + $0x48] sm:$0xff] %v440
      %470 = vst [vmem:[%s339 + $0x50] sm:$0xff] %v443
      %471 = vst [vmem:[%s339 + $0x58] sm:$0xff] %v446
      %472 = vst [vmem:[%s339 + $0x60] sm:$0xff] %v449
      %473 = vst [vmem:[%s339 + $0x68] sm:$0xff] %v452
      %474 = vst [vmem:[%s339 + $0x70] sm:$0xff] %v455
      %475 = vst [vmem:[%s339 + $0x78] sm:$0xff] %v458
      %v476 = vadd.f32 %v413, %v416
      %v477 = vadd.f32 %v476, %v419
      %v478 = vadd.f32 %v477, %v422
      %v479 = vadd.f32 %v478, %v425
      %v480 = vadd.f32 %v479, %v428
      %v481 = vadd.f32 %v480, %v431
      %v482 = vadd.f32 %v481, %v434
      %v483 = vadd.f32 %v482, %v437
      %v484 = vadd.f32 %v483, %v440
      %v485 = vadd.f32 %v484, %v443
      %v486 = vadd.f32 %v485, %v446
      %v487 = vadd.f32 %v486, %v449
      %v488 = vadd.f32 %v487, %v452
      %v489 = vadd.f32 %v488, %v455
      %v490 = vadd.f32 %v489, %v458
      %v491 = vrot.slane %v490, 4
      %v492 = vadd.f32 %v490, %v491
      %v493 = vrot.slane %v492, 2
      %v494 = vadd.f32 %v492, %v493
      %v495 = vrot.slane %v494, 1
      %v496 = vadd.f32 %v494, %v495
      %v497 = vmul.f32 %v496, 0.0078125
      %v498 = vsub.f32 %v413, %v497
      %v499 = vsub.f32 %v416, %v497
      %v500 = vsub.f32 %v419, %v497
      %v501 = vsub.f32 %v422, %v497
      %v502 = vsub.f32 %v425, %v497
      %v503 = vsub.f32 %v428, %v497
      %v504 = vsub.f32 %v431, %v497
      %v505 = vsub.f32 %v434, %v497
      %v506 = vsub.f32 %v437, %v497
      %v507 = vsub.f32 %v440, %v497
      %v508 = vsub.f32 %v443, %v497
      %v509 = vsub.f32 %v446, %v497
      %v510 = vsub.f32 %v449, %v497
      %v511 = vsub.f32 %v452, %v497
      %v512 = vsub.f32 %v455, %v497
      %v513 = vsub.f32 %v458, %v497
      %v514 = vmul.f32 %v498, %v498
      %v515 = vmul.f32 %v499, %v499
      %v516 = vmul.f32 %v500, %v500
      %v517 = vmul.f32 %v501, %v501
      %v518 = vmul.f32 %v502, %v502
      %v519 = vmul.f32 %v503, %v503
      %v520 = vmul.f32 %v504, %v504
      %v521 = vmul.f32 %v505, %v505
      %v522 = vmul.f32 %v506, %v506
      %v523 = vmul.f32 %v507, %v507
      %v524 = vmul.f32 %v508, %v508
      %v525 = vmul.f32 %v509, %v509
      %v526 = vmul.f32 %v510, %v510
      %v527 = vmul.f32 %v511, %v511
      %v528 = vmul.f32 %v512, %v512
      %v529 = vmul.f32 %v513, %v513
      %v530 = vadd.f32 %v514, %v515
      %v531 = vadd.f32 %v530, %v516
      %v532 = vadd.f32 %v531, %v517
      %v533 = vadd.f32 %v532, %v518
      %v534 = vadd.f32 %v533, %v519
      %v535 = vadd.f32 %v534, %v520
      %v536 = vadd.f32 %v535, %v521
      %v537 = vadd.f32 %v536, %v522
      %v538 = vadd.f32 %v537, %v523
      %v539 = vadd.f32 %v538, %v524
      %v540 = vadd.f32 %v539, %v525
      %v541 = vadd.f32 %v540, %v526
      %v542 = vadd.f32 %v541, %v527
      %v543 = vadd.f32 %v542, %v528
      %v544 = vadd.f32 %v543, %v529
      %v545 = vrot.slane %v544, 4
      %v546 = vadd.f32 %v544, %v545
      %v547 = vrot.slane %v546, 2
      %v548 = vadd.f32 %v546, %v547
      %v549 = vrot.slane %v548, 1
      %v550 = vadd.f32 %v548, %v549
      %551 = vst [vmem:[%s344] sm:$0xff] %v496
      %552 = vst [vmem:[%s348] sm:$0xff] %v550
      %v553 = vld [vmem:[%s2] sm:$0xff]
      %v554 = vld [vmem:[%s2 + $0x8] sm:$0xff]
      %v555 = vld [vmem:[%s2 + $0x10] sm:$0xff]
      %v556 = vld [vmem:[%s2 + $0x18] sm:$0xff]
      %v557 = vld [vmem:[%s2 + $0x20] sm:$0xff]
      %v558 = vld [vmem:[%s2 + $0x28] sm:$0xff]
      %v559 = vld [vmem:[%s2 + $0x30] sm:$0xff]
      %v560 = vld [vmem:[%s2 + $0x38] sm:$0xff]
      %v561 = vld [vmem:[%s2 + $0x40] sm:$0xff]
      %v562 = vld [vmem:[%s2 + $0x48] sm:$0xff]
      %v563 = vld [vmem:[%s2 + $0x50] sm:$0xff]
      %v564 = vld [vmem:[%s2 + $0x58] sm:$0xff]
      %v565 = vld [vmem:[%s2 + $0x60] sm:$0xff]
      %v566 = vld [vmem:[%s2 + $0x68] sm:$0xff]
      %v567 = vld [vmem:[%s2 + $0x70] sm:$0xff]
      %v568 = vld [vmem:[%s2 + $0x78] sm:$0xff]
      %569 = vmatpush.msra.mxu0 %v568
      %570 = vmatpush.msra.mxu0 %v567
      %571 = vmatpush.msra.mxu0 %v566
      %572 = vmatpush.msra.mxu0 %v565
      %573 = vmatpush.msra.mxu0 %v564
      %574 = vmatpush.msra.mxu0 %v563
      %575 = vmatpush.msra.mxu0 %v562
      %576 = vmatpush.msra.mxu0 %v561
      %577 = vmatpush.msra.mxu0 %v560
      %578 = vmatpush.msra.mxu0 %v559
      %579 = vmatpush.msra.mxu0 %v558
      %580 = vmatpush.msra.mxu0 %v557
      %581 = vmatpush.msra.mxu0 %v556
      %582 = vmatpush.msra.mxu0 %v555
      %583 = vmatpush.msra.mxu0 %v554
      %584 = vmatpush.msra.mxu0 %v553
      %585 = vmatmul.f32.gmra.mxu0 %v363
      %v586 = vpop.f32.mrf.mxu0
      %v587 = vadd.f32 0.0, %v586
      %588 = vmatmul.f32.gmra.mxu0 %v364
      %v589 = vpop.f32.mrf.mxu0
      %v590 = vadd.f32 0.0, %v589
      %591 = vmatmul.f32.gmra.mxu0 %v365
      %v592 = vpop.f32.mrf.mxu0
      %v593 = vadd.f32 0.0, %v592
      %594 = vmatmul.f32.gmra.mxu0 %v366
      %v595 = vpop.f32.mrf.mxu0
      %v596 = vadd.f32 0.0, %v595
      %597 = vmatmul.f32.gmra.mxu0 %v367
      %v598 = vpop.f32.mrf.mxu0
      %v599 = vadd.f32 0.0, %v598
      %600 = vmatmul.f32.gmra.mxu0 %v368
      %v601 = vpop.f32.mrf.mxu0
      %v602 = vadd.f32 0.0, %v601
      %603 = vmatmul.f32.gmra.mxu0 %v369
      %v604 = vpop.f32.mrf.mxu0
      %v605 = vadd.f32 0.0, %v604
      %606 = vmatmul.f32.gmra.mxu0 %v370
      %v607 = vpop.f32.mrf.mxu0
      %v608 = vadd.f32 0.0, %v607
      %609 = vmatmul.f32.gmra.mxu0 %v371
      %v610 = vpop.f32.mrf.mxu0
      %v611 = vadd.f32 0.0, %v610
      %612 = vmatmul.f32.gmra.mxu0 %v372
      %v613 = vpop.f32.mrf.mxu0
      %v614 = vadd.f32 0.0, %v613
      %615 = vmatmul.f32.gmra.mxu0 %v373
      %v616 = vpop.f32.mrf.mxu0
      %v617 = vadd.f32 0.0, %v616
      %618 = vmatmul.f32.gmra.mxu0 %v374
      %v619 = vpop.f32.mrf.mxu0
      %v620 = vadd.f32 0.0, %v619
      %621 = vmatmul.f32.gmra.mxu0 %v375
      %v622 = vpop.f32.mrf.mxu0
      %v623 = vadd.f32 0.0, %v622
      %624 = vmatmul.f32.gmra.mxu0 %v376
      %v625 = vpop.f32.mrf.mxu0
      %v626 = vadd.f32 0.0, %v625
      %627 = vmatmul.f32.gmra.mxu0 %v377
      %v628 = vpop.f32.mrf.mxu0
      %v629 = vadd.f32 0.0, %v628
      %630 = vmatmul.f32.gmra.mxu0 %v378
      %v631 = vpop.f32.mrf.mxu0
      %v632 = vadd.f32 0.0, %v631
      %633 = vdwg.mxu0
      %634 = vst [vmem:[%s353] sm:$0xff] %v587
      %635 = vst [vmem:[%s353 + $0x8] sm:$0xff] %v590
      %636 = vst [vmem:[%s353 + $0x10] sm:$0xff] %v593
      %637 = vst [vmem:[%s353 + $0x18] sm:$0xff] %v596
      %638 = vst [vmem:[%s353 + $0x20] sm:$0xff] %v599
      %639 = vst [vmem:[%s353 + $0x28] sm:$0xff] %v602
      %640 = vst [vmem:[%s353 + $0x30] sm:$0xff] %v605
      %641 = vst [vmem:[%s353 + $0x38] sm:$0xff] %v608
      %642 = vst [vmem:[%s353 + $0x40] sm:$0xff] %v611
      %643 = vst [vmem:[%s353 + $0x48] sm:$0xff] %v614
      %644 = vst [vmem:[%s353 + $0x50] sm:$0xff] %v617
      %645 = vst [vmem:[%s353 + $0x58] sm:$0xff] %v620
      %646 = vst [vmem:[%s353 + $0x60] sm:$0xff] %v623
      %647 = vst [vmem:[%s353 + $0x68] sm:$0xff] %v626
      %648 = vst [vmem:[%s353 + $0x70] sm:$0xff] %v629
      %649 = vst [vmem:[%s353 + $0x78] sm:$0xff] %v632
      %v650 = vadd.f32 %v587, %v590
      %v651 = vadd.f32 %v650, %v593
      %v652 = vadd.f32 %v651, %v596
      %v653 = vadd.f32 %v652, %v599
      %v654 = vadd.f32 %v653, %v602
      %v655 = vadd.f32 %v654, %v605
      %v656 = vadd.f32 %v655, %v608
      %v657 = vadd.f32 %v656, %v611
      %v658 = vadd.f32 %v657, %v614
      %v659 = vadd.f32 %v658, %v617
      %v660 = vadd.f32 %v659, %v620
      %v661 = vadd.f32 %v660, %v623
      %v662 = vadd.f32 %v661, %v626
      %v663 = vadd.f32 %v662, %v629
      %v664 = vadd.f32 %v663, %v632
      %v665 = vrot.slane %v664, 4
      %v666 = vadd.f32 %v664, %v665
      %v667 = vrot.slane %v666, 2
      %v668 = vadd.f32 %v666, %v667
      %v669 = vrot.slane %v668, 1
      %v670 = vadd.f32 %v668, %v669
      %v671 = vmul.f32 %v670, 0.0078125
      %v672 = vsub.f32 %v587, %v671
      %v673 = vsub.f32 %v590, %v671
      %v674 = vsub.f32 %v593, %v671
      %v675 = vsub.f32 %v596, %v671
      %v676 = vsub.f32 %v599, %v671
      %v677 = vsub.f32 %v602, %v671
      %v678 = vsub.f32 %v605, %v671
      %v679 = vsub.f32 %v608, %v671
      %v680 = vsub.f32 %v611, %v671
      %v681 = vsub.f32 %v614, %v671
      %v682 = vsub.f32 %v617, %v671
      %v683 = vsub.f32 %v620, %v671
      %v684 = vsub.f32 %v623, %v671
      %v685 = vsub.f32 %v626, %v671
      %v686 = vsub.f32 %v629, %v671
      %v687 = vsub.f32 %v632, %v671
      %v688 = vmul.f32 %v672, %v672
      %v689 = vmul.f32 %v673, %v673
      %v690 = vmul.f32 %v674, %v674
      %v691 = vmul.f32 %v675, %v675
      %v692 = vmul.f32 %v676, %v676
      %v693 = vmul.f32 %v677, %v677
      %v694 = vmul.f32 %v678, %v678
      %v695 = vmul.f32 %v679, %v679
      %v696 = vmul.f32 %v680, %v680
      %v697 = vmul.f32 %v681, %v681
      %v698 = vmul.f32 %v682, %v682
      %v699 = vmul.f32 %v683, %v683
      %v700 = vmul.f32 %v684, %v684
      %v701 = vmul.f32 %v685, %v685
      %v702 = vmul.f32 %v686, %v686
      %v703 = vmul.f32 %v687, %v687
      %v704 = vadd.f32 %v688, %v689
      %v705 = vadd.f32 %v704, %v690
      %v706 = vadd.f32 %v705, %v691
      %v707 = vadd.f32 %v706, %v692
      %v708 = vadd.f32 %v707, %v693
      %v709 = vadd.f32 %v708, %v694
      %v710 = vadd.f32 %v709, %v695
      %v711 = vadd.f32 %v710, %v696
      %v712 = vadd.f32 %v711, %v697
      %v713 = vadd.f32 %v712, %v698
      %v714 = vadd.f32 %v713, %v699
      %v715 = vadd.f32 %v714, %v700
      %v716 = vadd.f32 %v715, %v701
      %v717 = vadd.f32 %v716, %v702
      %v718 = vadd.f32 %v717, %v703
      %v719 = vrot.slane %v718, 4
      %v720 = vadd.f32 %v718, %v719
      %v721 = vrot.slane %v720, 2
      %v722 = vadd.f32 %v720, %v721
      %v723 = vrot.slane %v722, 1
      %v724 = vadd.f32 %v722, %v723
      %725 = vst [vmem:[%s358] sm:$0xff] %v670
      %726 = vst [vmem:[%s362] sm:$0xff] %v724
      %s727 = smul.u32 16, %s20
      %p728 = scmp.lt.s32.totalorder %s727, 63
      %s729 = scalar_select %p728, %s727, 63
      %s730 = smul.addr %s729, 8
      %s731 = scalar_lea.vmem %s3, %s730
      %p732 = scmp.lt.s32.totalorder %s20, 3
      %s733 = scalar_select %p732, %s20, 3
      %s734 = smul.addr %s733, 8
      %s735 = scalar_lea.vmem %s4, %s734
      %p736 = scmp.lt.s32.totalorder %s20, 3
      %s737 = scalar_select %p736, %s20, 3
      %s738 = smul.addr %s737, 8
      %s739 = scalar_lea.vmem %s5, %s738
      %s740 = smul.u32 16, %s20
      %p741 = scmp.lt.s32.totalorder %s740, 63
      %s742 = scalar_select %p741, %s740, 63
      %s743 = smul.addr %s742, 8
      %s744 = scalar_lea.vmem %s6, %s743
      %p745 = scmp.lt.s32.totalorder %s20, 3
      %s746 = scalar_select %p745, %s20, 3
      %s747 = smul.addr %s746, 8
      %s748 = scalar_lea.vmem %s7, %s747
      %p749 = scmp.lt.s32.totalorder %s20, 3
      %s750 = scalar_select %p749, %s20, 3
      %s751 = smul.addr %s750, 8
      %s752 = scalar_lea.vmem %s8, %s751
      // Predicated region
      $region33: #{bottleneck_forward.4} parent=31 // pred_check
        %p753 = pneg %p106
      $region34: #{bottleneck_forward.4} parent=31 // pred_check_branch
        %755 = sbr.rel (%p753) target = $region36
      $region35: #{bottleneck_forward.4} parent=31 // pred_region
        %s756 = smul.u32 16, %s20
      $region36: #{bottleneck_forward.4} parent=31 // pred_fallthru
        _
      // Predicated region
      $region37: #{bottleneck_forward.4} parent=31 // pred_check
        %p757 = pneg %p132
      $region38: #{bottleneck_forward.4} parent=31 // pred_check_branch
        %759 = sbr.rel (%p757) target = $region40
      $region39: #{bottleneck_forward.4} parent=31 // pred_region
        _
      $region40: #{bottleneck_forward.4} parent=31 // pred_fallthru
        _
      // Predicated region
      $region41: #{bottleneck_forward.4} parent=31 // pred_check
        %p760 = pneg %p158
      $region42: #{bottleneck_forward.4} parent=31 // pred_check_branch
        %762 = sbr.rel (%p760) target = $region44
      $region43: #{bottleneck_forward.4} parent=31 // pred_region
        _
      $region44: #{bottleneck_forward.4} parent=31 // pred_fallthru
        _
      // Predicated region
      $region45: #{bottleneck_forward.4} parent=31 // pred_check
        %p763 = pneg %p184
      $region46: #{bottleneck_forward.4} parent=31 // pred_check_branch
        %765 = sbr.rel (%p763) target = $region48
      $region47: #{bottleneck_forward.4} parent=31 // pred_region
        %s766 = smul.u32 16, %s20
      $region48: #{bottleneck_forward.4} parent=31 // pred_fallthru
        _
      // Predicated region
      $region49: #{bottleneck_forward.4} parent=31 // pred_check
        %p767 = pneg %p210
      $region50: #{bottleneck_forward.4} parent=31 // pred_check_branch
        %769 = sbr.rel (%p767) target = $region52
      $region51: #{bottleneck_forward.4} parent=31 // pred_region
        _
      $region52: #{bottleneck_forward.4} parent=31 // pred_fallthru
        _
      // Predicated region
      $region53: #{bottleneck_forward.4} parent=31 // pred_check
        %p770 = pneg %p236
      $region54: #{bottleneck_forward.4} parent=31 // pred_check_branch
        %772 = sbr.rel (%p770) target = $region56
      $region55: #{bottleneck_forward.4} parent=31 // pred_region
        _
      $region56: #{bottleneck_forward.4} parent=31 // pred_fallthru
        _
    $region32: #{bottleneck_forward.4} parent=5 // pred_fallthru
      _
    %p773 = scmp.le.s32.totalorder 2, %s15
    // Predicated region
    $region57: #{bottleneck_forward.4} parent=5 // pred_check
      %p774 = pneg %p773
    $region58: #{bottleneck_forward.4} parent=5 // pred_check_branch
      %776 = sbr.rel (%p774) target = $region60
    $region59: #{bottleneck_forward.4} parent=5 // pred_region
      %s777 = ssub.s32 %s15, 2
      // Predicated region
      $region61: #{bottleneck_forward.4} parent=59 // pred_check
        %p778 = pneg %p112
      $region62: #{bottleneck_forward.4} parent=59 // pred_check_branch
        %780 = sbr.rel (%p778) target = $region64
      $region63: #{bottleneck_forward.4} parent=59 // pred_region
        %s781 = smul.u32 16, %s21
        %p782 = scmp.lt.s32.totalorder %s781, 63
        %s783 = scalar_select %p782, %s781, 63
        %s784 = smul.addr %s783, 8
        %s785 = scalar_lea.vmem %s3, %s784
      $region64: #{bottleneck_forward.4} parent=59 // pred_fallthru
        _
      // Predicated region
      $region65: #{bottleneck_forward.4} parent=59 // pred_check
        %p786 = pneg %p138
      $region66: #{bottleneck_forward.4} parent=59 // pred_check_branch
        %788 = sbr.rel (%p786) target = $region68
      $region67: #{bottleneck_forward.4} parent=59 // pred_region
        %p789 = scmp.lt.s32.totalorder %s21, 3
        %s790 = scalar_select %p789, %s21, 3
        %s791 = smul.addr %s790, 8
        %s792 = scalar_lea.vmem %s4, %s791
      $region68: #{bottleneck_forward.4} parent=59 // pred_fallthru
        _
      // Predicated region
      $region69: #{bottleneck_forward.4} parent=59 // pred_check
        %p793 = pneg %p164
      $region70: #{bottleneck_forward.4} parent=59 // pred_check_branch
        %795 = sbr.rel (%p793) target = $region72
      $region71: #{bottleneck_forward.4} parent=59 // pred_region
        %p796 = scmp.lt.s32.totalorder %s21, 3
        %s797 = scalar_select %p796, %s21, 3
        %s798 = smul.addr %s797, 8
        %s799 = scalar_lea.vmem %s5, %s798
      $region72: #{bottleneck_forward.4} parent=59 // pred_fallthru
        _
      // Predicated region
      $region73: #{bottleneck_forward.4} parent=59 // pred_check
        %p800 = pneg %p190
      $region74: #{bottleneck_forward.4} parent=59 // pred_check_branch
        %802 = sbr.rel (%p800) target = $region76
      $region75: #{bottleneck_forward.4} parent=59 // pred_region
        %s803 = smul.u32 16, %s21
        %p804 = scmp.lt.s32.totalorder %s803, 63
        %s805 = scalar_select %p804, %s803, 63
        %s806 = smul.addr %s805, 8
        %s807 = scalar_lea.vmem %s6, %s806
      $region76: #{bottleneck_forward.4} parent=59 // pred_fallthru
        _
      // Predicated region
      $region77: #{bottleneck_forward.4} parent=59 // pred_check
        %p808 = pneg %p216
      $region78: #{bottleneck_forward.4} parent=59 // pred_check_branch
        %810 = sbr.rel (%p808) target = $region80
      $region79: #{bottleneck_forward.4} parent=59 // pred_region
        %p811 = scmp.lt.s32.totalorder %s21, 3
        %s812 = scalar_select %p811, %s21, 3
        %s813 = smul.addr %s812, 8
        %s814 = scalar_lea.vmem %s7, %s813
      $region80: #{bottleneck_forward.4} parent=59 // pred_fallthru
        _
      // Predicated region
      $region81: #{bottleneck_forward.4} parent=59 // pred_check
        %p815 = pneg %p242
      $region82: #{bottleneck_forward.4} parent=59 // pred_check_branch
        %817 = sbr.rel (%p815) target = $region84
      $region83: #{bottleneck_forward.4} parent=59 // pred_region
        %p818 = scmp.lt.s32.totalorder %s21, 3
        %s819 = scalar_select %p818, %s21, 3
        %s820 = smul.addr %s819, 8
        %s821 = scalar_lea.vmem %s8, %s820
      $region84: #{bottleneck_forward.4} parent=59 // pred_fallthru
        _
    $region60: #{bottleneck_forward.4} parent=5 // pred_fallthru
      _
  $region6: #{bottleneck_forward.4} parent=0 // loop_footer
    %s19 = sadd.s32 1, %s15
  $region7: #{bottleneck_forward.4} parent=0 // loop_footer_branch
    %14 = sbr.rel target = $region3
  $region8: #{bottleneck_forward.4} parent=0 // loop_exit
    _

// kernel: bottleneck_forward.7
$region0: #{bottleneck_forward.7}
  #allocation0 [shape = 'u32[]', space=smem, size = 0x4, offset = 0x4, fixed_abs, tag = 'smem constant byte address 0x4 - core index']
  #allocation1 [shape = 'u32[72,128]{1,0:T(1,128)}', space=vmem, size = 0x9000, scoped, tag = 'internal scratch']
  %s0 = inlined_call_operand.vmem [shape: f32[512,128], index: 0, kind: input, shape index: {}]
  %s1 = inlined_call_operand.vmem [shape: f32[1,128], index: 1, kind: input, shape index: {}]
  %s2 = inlined_call_operand.vmem [shape: f32[1,128], index: 2, kind: input, shape index: {}]
  %s3 = inlined_call_operand.vmem [shape: f32[512,128], index: 3, kind: input, shape index: {}]
  %s4 = inlined_call_operand.vmem [shape: f32[1,128], index: 4, kind: input, shape index: {}]
  %s5 = inlined_call_operand.vmem [shape: f32[1,128], index: 5, kind: input, shape index: {}]
  %s6 = inlined_call_operand.vmem [shape: f32[512,128], index: 6, kind: output, shape index: {}]
  %s7 = sld [smem:[#allocation0]]
  $region57: #{bottleneck_forward.7} parent=0
    _
  %s9 = ssub.s32 1, %s7
  %s10 = scalar_select 0, %s9, %s7
  loop: start=0, step=1, limit=6
  $region2: #{bottleneck_forward.7} parent=0 // loop_pre_header
    _
  $region3: #{bottleneck_forward.7} parent=0 // loop_header
    %s12 = sphi 0, %s16
    %p13 = scmp.ge.s32.totalorder %s12, 6
    %s22 = sphi 0, %s24
    %s25 = sphi 0, %s22
    %s26 = sphi 0, %s25
    %s42 = sphi 0, %s26
    %s46 = sphi 0, %s46
    %s48 = sphi 0, %s46
    %s49 = sphi 0, %s48
    %s63 = sphi 0, %s49
    %s67 = sphi 0, %s67
    %s69 = sphi 0, %s67
    %s70 = sphi 0, %s69
    %s84 = sphi 0, %s70
    %s90 = sphi 0, %s92
    %s93 = sphi 0, %s90
    %s94 = sphi 0, %s93
    %s110 = sphi 0, %s94
    %s114 = sphi 0, %s114
    %s116 = sphi 0, %s114
    %s117 = sphi 0, %s116
    %s131 = sphi 0, %s117
    %s135 = sphi 0, %s135
    %s137 = sphi 0, %s135
    %s138 = sphi 0, %s137
    %s152 = sphi 0, %s138
    %s158 = sphi 0, %s160
    %s161 = sphi 0, %s158
    %s162 = sphi 0, %s161
    %s178 = sphi 0, %s162
  $region4: #{bottleneck_forward.7} parent=0 // loop_header_branch
    %15 = sbr.rel (%p13) target = $region8
  $region5: #{bottleneck_forward.7} parent=0 // loop_body
    %s17 = ssub.s32 %s12, 1
    %s18 = ssub.s32 %s12, 2
    %s19 = sadd.s32 %s12, 1
    %s20 = ssub.s32 %s12, %s19
    %p21 = scmp.eq.s32.totalorder %s20, 0
    %s23 = sadd.s32 %s22, 1
    %s24 = scalar_select %p21, %s22, %s23
    %p27 = pneg %p21
    %p28 = scmp.eq.s32.totalorder %s12, 3
    %p29 = por %p27, %p28
    %p30 = scmp.ne.s32.totalorder %s22, %s25
    %p31 = scmp.eq.s32.totalorder %s12, 0
    %p32 = por %p30, %p31
    %p33 = scmp.ne.s32.totalorder %s22, %s25
    %p34 = scmp.eq.s32.totalorder %s17, 3
    %p35 = por %p33, %p34
    %p36 = scmp.ne.s32.totalorder %s25, %s26
    %p37 = scmp.eq.s32.totalorder %s17, 0
    %p38 = por %p36, %p37
    %p39 = scmp.ne.s32.totalorder %s25, %s26
    %p40 = scmp.eq.s32.totalorder %s18, 3
    %p41 = por %p39, %p40
    %p43 = scmp.ne.s32.totalorder %s26, %s42
    %p44 = scmp.eq.s32.totalorder %s18, 0
    %p45 = por %p43, %p44
    %s47 = sadd.s32 %s46, 1
    %p50 = scmp.eq.s32.totalorder %s12, 3
    %p51 = scmp.ne.s32.totalorder %s46, %s48
    %p52 = scmp.eq.s32.totalorder %s12, 0
    %p53 = por %p51, %p52
    %p54 = scmp.ne.s32.totalorder %s46, %s48
    %p55 = scmp.eq.s32.totalorder %s17, 3
    %p56 = por %p54, %p55
    %p57 = scmp.ne.s32.totalorder %s48, %s49
    %p58 = scmp.eq.s32.totalorder %s17, 0
    %p59 = por %p57, %p58
    %p60 = scmp.ne.s32.totalorder %s48, %s49
    %p61 = scmp.eq.s32.totalorder %s18, 3
    %p62 = por %p60, %p61
    %p64 = scmp.ne.s32.totalorder %s49, %s63
    %p65 = scmp.eq.s32.totalorder %s18, 0
    %p66 = por %p64, %p65
    %s68 = sadd.s32 %s67, 1
    %p71 = scmp.eq.s32.totalorder %s12, 3
    %p72 = scmp.ne.s32.totalorder %s67, %s69
    %p73 = scmp.eq.s32.totalorder %s12, 0
    %p74 = por %p72, %p73
    %p75 = scmp.ne.s32.totalorder %s67, %s69
    %p76 = scmp.eq.s32.totalorder %s17, 3
    %p77 = por %p75, %p76
    %p78 = scmp.ne.s32.totalorder %s69, %s70
    %p79 = scmp.eq.s32.totalorder %s17, 0
    %p80 = por %p78, %p79
    %p81 = scmp.ne.s32.totalorder %s69, %s70
    %p82 = scmp.eq.s32.totalorder %s18, 3
    %p83 = por %p81, %p82
    %p85 = scmp.ne.s32.totalorder %s70, %s84
    %p86 = scmp.eq.s32.totalorder %s18, 0
    %p87 = por %p85, %p86
    %s88 = ssub.s32 %s12, %s19
    %p89 = scmp.eq.s32.totalorder %s88, 0
    %s91 = sadd.s32 %s90, 1
    %s92 = scalar_select %p89, %s90, %s91
    %p95 = pneg %p89
    %p96 = scmp.eq.s32.totalorder %s12, 3
    %p97 = por %p95, %p96
    %p98 = scmp.ne.s32.totalorder %s90, %s93
    %p99 = scmp.eq.s32.totalorder %s12, 0
    %p100 = por %p98, %p99
    %p101 = scmp.ne.s32.totalorder %s90, %s93
    %p102 = scmp.eq.s32.totalorder %s17, 3
    %p103 = por %p101, %p102
    %p104 = scmp.ne.s32.totalorder %s93, %s94
    %p105 = scmp.eq.s32.totalorder %s17, 0
    %p106 = por %p104, %p105
    %p107 = scmp.ne.s32.totalorder %s93, %s94
    %p108 = scmp.eq.s32.totalorder %s18, 3
    %p109 = por %p107, %p108
    %p111 = scmp.ne.s32.totalorder %s94, %s110
    %p112 = scmp.eq.s32.totalorder %s18, 0
    %p113 = por %p111, %p112
    %s115 = sadd.s32 %s114, 1
    %p118 = scmp.eq.s32.totalorder %s12, 3
    %p119 = scmp.ne.s32.totalorder %s114, %s116
    %p120 = scmp.eq.s32.totalorder %s12, 0
    %p121 = por %p119, %p120
    %p122 = scmp.ne.s32.totalorder %s114, %s116
    %p123 = scmp.eq.s32.totalorder %s17, 3
    %p124 = por %p122, %p123
    %p125 = scmp.ne.s32.totalorder %s116, %s117
    %p126 = scmp.eq.s32.totalorder %s17, 0
    %p127 = por %p125, %p126
    %p128 = scmp.ne.s32.totalorder %s116, %s117
    %p129 = scmp.eq.s32.totalorder %s18, 3
    %p130 = por %p128, %p129
    %p132 = scmp.ne.s32.totalorder %s117, %s131
    %p133 = scmp.eq.s32.totalorder %s18, 0
    %p134 = por %p132, %p133
    %s136 = sadd.s32 %s135, 1
    %p139 = scmp.eq.s32.totalorder %s12, 3
    %p140 = scmp.ne.s32.totalorder %s135, %s137
    %p141 = scmp.eq.s32.totalorder %s12, 0
    %p142 = por %p140, %p141
    %p143 = scmp.ne.s32.totalorder %s135, %s137
    %p144 = scmp.eq.s32.totalorder %s17, 3
    %p145 = por %p143, %p144
    %p146 = scmp.ne.s32.totalorder %s137, %s138
    %p147 = scmp.eq.s32.totalorder %s17, 0
    %p148 = por %p146, %p147
    %p149 = scmp.ne.s32.totalorder %s137, %s138
    %p150 = scmp.eq.s32.totalorder %s18, 3
    %p151 = por %p149, %p150
    %p153 = scmp.ne.s32.totalorder %s138, %s152
    %p154 = scmp.eq.s32.totalorder %s18, 0
    %p155 = por %p153, %p154
    %s156 = ssub.s32 %s12, %s19
    %p157 = scmp.eq.s32.totalorder %s156, 0
    %s159 = sadd.s32 %s158, 1
    %s160 = scalar_select %p157, %s158, %s159
    %p163 = pneg %p157
    %p164 = scmp.eq.s32.totalorder %s12, 3
    %p165 = por %p163, %p164
    %p166 = scmp.ne.s32.totalorder %s158, %s161
    %p167 = scmp.eq.s32.totalorder %s12, 0
    %p168 = por %p166, %p167
    %p169 = scmp.ne.s32.totalorder %s158, %s161
    %p170 = scmp.eq.s32.totalorder %s17, 3
    %p171 = por %p169, %p170
    %p172 = scmp.ne.s32.totalorder %s161, %s162
    %p173 = scmp.eq.s32.totalorder %s17, 0
    %p174 = por %p172, %p173
    %p175 = scmp.ne.s32.totalorder %s161, %s162
    %p176 = scmp.eq.s32.totalorder %s18, 3
    %p177 = por %p175, %p176
    %p179 = scmp.ne.s32.totalorder %s162, %s178
    %p180 = scmp.eq.s32.totalorder %s18, 0
    %p181 = por %p179, %p180
    %p182 = scmp.le.s32.totalorder 1, %s12
    %p183 = scmp.lt.s32.totalorder %s12, 5
    %p184 = pnand %p182, %p183
    %p185 = pneg %p184
    // Predicated region
    $region9: #{bottleneck_forward.7} parent=5 // pred_check
      _
    $region10: #{bottleneck_forward.7} parent=5 // pred_check_branch
      %187 = sbr.rel (%p184) target = $region12
    $region11: #{bottleneck_forward.7} parent=5 // pred_region
      %s188 = ssub.s32 %s12, 1
      // Predicated region
      $region13: #{bottleneck_forward.7} parent=11 // pred_check
        %p189 = pneg %p59
      $region14: #{bottleneck_forward.7} parent=11 // pred_check_branch
        %191 = sbr.rel (%p189) target = $region16
      $region15: #{bottleneck_forward.7} parent=11 // pred_region
        _
      $region16: #{bottleneck_forward.7} parent=11 // pred_fallthru
        _
      // Predicated region
      $region17: #{bottleneck_forward.7} parent=11 // pred_check
        %p192 = pneg %p80
      $region18: #{bottleneck_forward.7} parent=11 // pred_check_branch
        %194 = sbr.rel (%p192) target = $region20
      $region19: #{bottleneck_forward.7} parent=11 // pred_region
        _
      $region20: #{bottleneck_forward.7} parent=11 // pred_fallthru
        _
      // Predicated region
      $region21: #{bottleneck_forward.7} parent=11 // pred_check
        %p195 = pneg %p127
      $region22: #{bottleneck_forward.7} parent=11 // pred_check_branch
        %197 = sbr.rel (%p195) target = $region24
      $region23: #{bottleneck_forward.7} parent=11 // pred_region
        _
      $region24: #{bottleneck_forward.7} parent=11 // pred_fallthru
        _
      // Predicated region
      $region25: #{bottleneck_forward.7} parent=11 // pred_check
        %p198 = pneg %p148
      $region26: #{bottleneck_forward.7} parent=11 // pred_check_branch
        %200 = sbr.rel (%p198) target = $region28
      $region27: #{bottleneck_forward.7} parent=11 // pred_region
        _
      $region28: #{bottleneck_forward.7} parent=11 // pred_fallthru
        _
    $region12: #{bottleneck_forward.7} parent=5 // pred_fallthru
      _
    %p201 = scmp.lt.s32.totalorder %s12, 4
    // Predicated region
    $region29: #{bottleneck_forward.7} parent=5 // pred_check
      %p202 = pneg %p201
    $region30: #{bottleneck_forward.7} parent=5 // pred_check_branch
      %204 = sbr.rel (%p202) target = $region32
    $region31: #{bottleneck_forward.7} parent=5 // pred_region
      // Predicated region
      $region33: #{bottleneck_forward.7} parent=31 // pred_check
        %p205 = pneg %p32
      $region34: #{bottleneck_forward.7} parent=31 // pred_check_branch
        %207 = sbr.rel (%p205) target = $region36
      $region35: #{bottleneck_forward.7} parent=31 // pred_region
        %s208 = smul.u32 16, %s12
        %p209 = scmp.lt.s32.totalorder %s208, 63
        %s210 = scalar_select %p209, %s208, 63
        %s211 = smul.addr %s210, 8
        %s212 = scalar_lea.vmem %s0, %s211
        %s213 = smul.u32 16, %s12
      $region36: #{bottleneck_forward.7} parent=31 // pred_fallthru
        _
      // Predicated region
      $region37: #{bottleneck_forward.7} parent=31 // pred_check
        %p214 = pneg %p100
      $region38: #{bottleneck_forward.7} parent=31 // pred_check_branch
        %216 = sbr.rel (%p214) target = $region40
      $region39: #{bottleneck_forward.7} parent=31 // pred_region
        %s217 = smul.u32 16, %s12
        %p218 = scmp.lt.s32.totalorder %s217, 63
        %s219 = scalar_select %p218, %s217, 63
        %s220 = smul.addr %s219, 8
        %s221 = scalar_lea.vmem %s3, %s220
        %s222 = smul.u32 16, %s12
      $region40: #{bottleneck_forward.7} parent=31 // pred_fallthru
        _
    $region32: #{bottleneck_forward.7} parent=5 // pred_fallthru
      _
    %p223 = scmp.le.s32.totalorder 1, %s12
    %p224 = scmp.lt.s32.totalorder %s12, 5
    %p225 = pnand %p223, %p224
    %p226 = pneg %p225
    // Predicated region
    $region41: #{bottleneck_forward.7} parent=5 // pred_check
      _
    $region42: #{bottleneck_forward.7} parent=5 // pred_check_branch
      %228 = sbr.rel (%p225) target = $region44
    $region43: #{bottleneck_forward.7} parent=5 // pred_region
      %s229 = ssub.s32 %s12, 1
      %s230 = smul.u32 16, %s17
      %p231 = scmp.lt.s32.totalorder %s230, 63
      %s232 = scalar_select %p231, %s230, 63
      %s233 = smul.addr %s232, 8
      %s234 = scalar_lea.vmem %s0, %s233
      %p235 = pneg %p38
      %p236 = pneg %p35
      %p237 = pneg %p59
      %p238 = pneg %p56
      %p239 = pneg %p80
      %p240 = pneg %p77
      %s241 = smul.u32 16, %s17
      %p242 = scmp.lt.s32.totalorder %s241, 63
      %s243 = scalar_select %p242, %s241, 63
      %s244 = smul.addr %s243, 8
      %s245 = scalar_lea.vmem %s3, %s244
      %p246 = pneg %p106
      %p247 = pneg %p103
      %p248 = pneg %p127
      %p249 = pneg %p124
      %p250 = pneg %p148
      %p251 = pneg %p145
      %p252 = pneg %p174
      %p253 = pneg %p171
      %s254 = smul.u32 16, %s17
      %p255 = scmp.lt.s32.totalorder %s254, 63
      %s256 = scalar_select %p255, %s254, 63
      %s257 = smul.addr %s256, 8
      %s258 = scalar_lea.vmem %s6, %s257
      %s259 = smul.u32 16, %s17
      %p260 = scmp.lt.s32.totalorder %s259, 63
      %s261 = scalar_select %p260, %s259, 63
      %s262 = smul.addr %s261, 8
      %s263 = scalar_lea.vmem %s0, %s262
      %s264 = smul.u32 16, %s17
      %s265 = smul.u32 16, %s17
      %p266 = scmp.lt.s32.totalorder %s265, 63
      %s267 = scalar_select %p266, %s265, 63
      %s268 = smul.addr %s267, 8
      %s269 = scalar_lea.vmem %s3, %s268
      %s270 = smul.u32 16, %s17
      %s271 = smul.u32 16, %s17
      %p272 = scmp.lt.s32.totalorder %s271, 63
      %s273 = scalar_select %p272, %s271, 63
      %s274 = smul.addr %s273, 8
      %s275 = scalar_lea.vmem %s6, %s274
      %s276 = smul.u32 16, %s17
      %v277 = vld [vmem:[%s263] sm:$0xff]
      %v278 = vld [vmem:[%s263 + $0x8] sm:$0xff]
      %v279 = vld [vmem:[%s263 + $0x10] sm:$0xff]
      %v280 = vld [vmem:[%s263 + $0x18] sm:$0xff]
      %v281 = vld [vmem:[%s263 + $0x20] sm:$0xff]
      %v282 = vld [vmem:[%s263 + $0x28] sm:$0xff]
      %v283 = vld [vmem:[%s263 + $0x30] sm:$0xff]
      %v284 = vld [vmem:[%s263 + $0x38] sm:$0xff]
      %v285 = vld [vmem:[%s263 + $0x40] sm:$0xff]
      %v286 = vld [vmem:[%s263 + $0x48] sm:$0xff]
      %v287 = vld [vmem:[%s263 + $0x50] sm:$0xff]
      %v288 = vld [vmem:[%s263 + $0x58] sm:$0xff]
      %v289 = vld [vmem:[%s263 + $0x60] sm:$0xff]
      %v290 = vld [vmem:[%s263 + $0x68] sm:$0xff]
      %v291 = vld [vmem:[%s263 + $0x70] sm:$0xff]
      %v292 = vld [vmem:[%s263 + $0x78] sm:$0xff]
      %v293 = vld [vmem:[%s1] sm:$0x1]
      %v295 = vperm.slane %v293, 0
      %v297 = vmul.f32 %v277, %v295
      %v298 = vmul.f32 %v278, %v295
      %v299 = vmul.f32 %v279, %v295
      %v300 = vmul.f32 %v280, %v295
      %v301 = vmul.f32 %v281, %v295
      %v302 = vmul.f32 %v282, %v295
      %v303 = vmul.f32 %v283, %v295
      %v304 = vmul.f32 %v284, %v295
      %v305 = vmul.f32 %v285, %v295
      %v306 = vmul.f32 %v286, %v295
      %v307 = vmul.f32 %v287, %v295
      %v308 = vmul.f32 %v288, %v295
      %v309 = vmul.f32 %v289, %v295
      %v310 = vmul.f32 %v290, %v295
      %v311 = vmul.f32 %v291, %v295
      %v312 = vmul.f32 %v292, %v295
      %v313 = vld [vmem:[%s2] sm:$0x1]
      %v315 = vperm.slane %v313, 0
      %v317 = vadd.f32 %v297, %v315
      %v318 = vadd.f32 %v298, %v315
      %v319 = vadd.f32 %v299, %v315
      %v320 = vadd.f32 %v300, %v315
      %v321 = vadd.f32 %v301, %v315
      %v322 = vadd.f32 %v302, %v315
      %v323 = vadd.f32 %v303, %v315
      %v324 = vadd.f32 %v304, %v315
      %v325 = vadd.f32 %v305, %v315
      %v326 = vadd.f32 %v306, %v315
      %v327 = vadd.f32 %v307, %v315
      %v328 = vadd.f32 %v308, %v315
      %v329 = vadd.f32 %v309, %v315
      %v330 = vadd.f32 %v310, %v315
      %v331 = vadd.f32 %v311, %v315
      %v332 = vadd.f32 %v312, %v315
      %v333 = vld [vmem:[%s269] sm:$0xff]
      %v334 = vld [vmem:[%s269 + $0x8] sm:$0xff]
      %v335 = vld [vmem:[%s269 + $0x10] sm:$0xff]
      %v336 = vld [vmem:[%s269 + $0x18] sm:$0xff]
      %v337 = vld [vmem:[%s269 + $0x20] sm:$0xff]
      %v338 = vld [vmem:[%s269 + $0x28] sm:$0xff]
      %v339 = vld [vmem:[%s269 + $0x30] sm:$0xff]
      %v340 = vld [vmem:[%s269 + $0x38] sm:$0xff]
      %v341 = vld [vmem:[%s269 + $0x40] sm:$0xff]
      %v342 = vld [vmem:[%s269 + $0x48] sm:$0xff]
      %v343 = vld [vmem:[%s269 + $0x50] sm:$0xff]
      %v344 = vld [vmem:[%s269 + $0x58] sm:$0xff]
      %v345 = vld [vmem:[%s269 + $0x60] sm:$0xff]
      %v346 = vld [vmem:[%s269 + $0x68] sm:$0xff]
      %v347 = vld [vmem:[%s269 + $0x70] sm:$0xff]
      %v348 = vld [vmem:[%s269 + $0x78] sm:$0xff]
      %v349 = vld [vmem:[%s4] sm:$0x1]
      %v351 = vperm.slane %v349, 0
      %v353 = vmul.f32 %v333, %v351
      %v354 = vmul.f32 %v334, %v351
      %v355 = vmul.f32 %v335, %v351
      %v356 = vmul.f32 %v336, %v351
      %v357 = vmul.f32 %v337, %v351
      %v358 = vmul.f32 %v338, %v351
      %v359 = vmul.f32 %v339, %v351
      %v360 = vmul.f32 %v340, %v351
      %v361 = vmul.f32 %v341, %v351
      %v362 = vmul.f32 %v342, %v351
      %v363 = vmul.f32 %v343, %v351
      %v364 = vmul.f32 %v344, %v351
      %v365 = vmul.f32 %v345, %v351
      %v366 = vmul.f32 %v346, %v351
      %v367 = vmul.f32 %v347, %v351
      %v368 = vmul.f32 %v348, %v351
      %v369 = vadd.f32 %v317, %v353
      %v370 = vadd.f32 %v318, %v354
      %v371 = vadd.f32 %v319, %v355
      %v372 = vadd.f32 %v320, %v356
      %v373 = vadd.f32 %v321, %v357
      %v374 = vadd.f32 %v322, %v358
      %v375 = vadd.f32 %v323, %v359
      %v376 = vadd.f32 %v324, %v360
      %v377 = vadd.f32 %v325, %v361
      %v378 = vadd.f32 %v326, %v362
      %v379 = vadd.f32 %v327, %v363
      %v380 = vadd.f32 %v328, %v364
      %v381 = vadd.f32 %v329, %v365
      %v382 = vadd.f32 %v330, %v366
      %v383 = vadd.f32 %v331, %v367
      %v384 = vadd.f32 %v332, %v368
      %v385 = vld [vmem:[%s5] sm:$0x1]
      %v387 = vperm.slane %v385, 0
      %v389 = vadd.f32 %v369, %v387
      %v390 = vadd.f32 %v370, %v387
      %v391 = vadd.f32 %v371, %v387
      %v392 = vadd.f32 %v372, %v387
      %v393 = vadd.f32 %v373, %v387
      %v394 = vadd.f32 %v374, %v387
      %v395 = vadd.f32 %v375, %v387
      %v396 = vadd.f32 %v376, %v387
      %v397 = vadd.f32 %v377, %v387
      %v398 = vadd.f32 %v378, %v387
      %v399 = vadd.f32 %v379, %v387
      %v400 = vadd.f32 %v380, %v387
      %v401 = vadd.f32 %v381, %v387
      %v402 = vadd.f32 %v382, %v387
      %v403 = vadd.f32 %v383, %v387
      %v404 = vadd.f32 %v384, %v387
      %v405 = vmax.f32 %v389, 0.0
      %v406 = vmax.f32 %v390, 0.0
      %v407 = vmax.f32 %v391, 0.0
      %v408 = vmax.f32 %v392, 0.0
      %v409 = vmax.f32 %v393, 0.0
      %v410 = vmax.f32 %v394, 0.0
      %v411 = vmax.f32 %v395, 0.0
      %v412 = vmax.f32 %v396, 0.0
      %v413 = vmax.f32 %v397, 0.0
      %v414 = vmax.f32 %v398, 0.0
      %v415 = vmax.f32 %v399, 0.0
      %v416 = vmax.f32 %v400, 0.0
      %v417 = vmax.f32 %v401, 0.0
      %v418 = vmax.f32 %v402, 0.0
      %v419 = vmax.f32 %v403, 0.0
      %v420 = vmax.f32 %v404, 0.0
      %421 = vst [vmem:[%s275] sm:$0xff] %v405
      %422 = vst [vmem:[%s275 + $0x8] sm:$0xff] %v406
      %423 = vst [vmem:[%s275 + $0x10] sm:$0xff] %v407
      %424 = vst [vmem:[%s275 + $0x18] sm:$0xff] %v408
      %425 = vst [vmem:[%s275 + $0x20] sm:$0xff] %v409
      %426 = vst [vmem:[%s275 + $0x28] sm:$0xff] %v410
      %427 = vst [vmem:[%s275 + $0x30] sm:$0xff] %v411
      %428 = vst [vmem:[%s275 + $0x38] sm:$0xff] %v412
      %429 = vst [vmem:[%s275 + $0x40] sm:$0xff] %v413
      %430 = vst [vmem:[%s275 + $0x48] sm:$0xff] %v414
      %431 = vst [vmem:[%s275 + $0x50] sm:$0xff] %v415
      %432 = vst [vmem:[%s275 + $0x58] sm:$0xff] %v416
      %433 = vst [vmem:[%s275 + $0x60] sm:$0xff] %v417
      %434 = vst [vmem:[%s275 + $0x68] sm:$0xff] %v418
      %435 = vst [vmem:[%s275 + $0x70] sm:$0xff] %v419
      %436 = vst [vmem:[%s275 + $0x78] sm:$0xff] %v420
      %s437 = smul.u32 16, %s17
      %p438 = scmp.lt.s32.totalorder %s437, 63
      %s439 = scalar_select %p438, %s437, 63
      %s440 = smul.addr %s439, 8
      %s441 = scalar_lea.vmem %s6, %s440
      // Predicated region
      $region45: #{bottleneck_forward.7} parent=43 // pred_check
        %p442 = pneg %p171
      $region46: #{bottleneck_forward.7} parent=43 // pred_check_branch
        %444 = sbr.rel (%p442) target = $region48
      $region47: #{bottleneck_forward.7} parent=43 // pred_region
        %s445 = smul.u32 16, %s17
      $region48: #{bottleneck_forward.7} parent=43 // pred_fallthru
        _
    $region44: #{bottleneck_forward.7} parent=5 // pred_fallthru
      _
    %p446 = scmp.le.s32.totalorder 2, %s12
    // Predicated region
    $region49: #{bottleneck_forward.7} parent=5 // pred_check
      %p447 = pneg %p446
    $region50: #{bottleneck_forward.7} parent=5 // pred_check_branch
      %449 = sbr.rel (%p447) target = $region52
    $region51: #{bottleneck_forward.7} parent=5 // pred_region
      %s450 = ssub.s32 %s12, 2
      // Predicated region
      $region53: #{bottleneck_forward.7} parent=51 // pred_check
        %p451 = pneg %p177
      $region54: #{bottleneck_forward.7} parent=51 // pred_check_branch
        %453 = sbr.rel (%p451) target = $region56
      $region55: #{bottleneck_forward.7} parent=51 // pred_region
        %s454 = smul.u32 16, %s18
        %p455 = scmp.lt.s32.totalorder %s454, 63
        %s456 = scalar_select %p455, %s454, 63
        %s457 = smul.addr %s456, 8
        %s458 = scalar_lea.vmem %s6, %s457
      $region56: #{bottleneck_forward.7} parent=51 // pred_fallthru
        _
    $region52: #{bottleneck_forward.7} parent=5 // pred_fallthru
      _
  $region6: #{bottleneck_forward.7} parent=0 // loop_footer
    %s16 = sadd.s32 1, %s12
  $region7: #{bottleneck_forward.7} parent=0 // loop_footer_branch
    %11 = sbr.rel target = $region3
  $region8: #{bottleneck_forward.7} parent=0 // loop_exit
    _

// kernel: bottleneck_forward.6
$region0: #{bottleneck_forward.6}
  #allocation0 [shape = 'u32[]', space=smem, size = 0x4, offset = 0x4, fixed_abs, tag = 'smem constant byte address 0x4 - core index']
  #allocation1 [shape = 'u32[72,128]{1,0:T(1,128)}', space=vmem, size = 0x9000, scoped, tag = 'internal scratch']
  %s0 = inlined_call_operand.vmem [shape: f32[512,128], index: 0, kind: input, shape index: {}]
  %s1 = inlined_call_operand.vmem [shape: f32[128,128], index: 1, kind: input, shape index: {}]
  %s2 = inlined_call_operand.vmem [shape: f32[1,128], index: 2, kind: input, shape index: {}]
  %s3 = inlined_call_operand.vmem [shape: f32[1,128], index: 3, kind: input, shape index: {}]
  %s4 = inlined_call_operand.vmem [shape: f32[512,128], index: 4, kind: output, shape index: {0}]
  %s5 = inlined_call_operand.vmem [shape: f32[4,8,128], index: 5, kind: output, shape index: {1}]
  %s6 = inlined_call_operand.vmem [shape: f32[4,8,128], index: 6, kind: output, shape index: {2}]
  %7 = xla_tuple %s4, %s5, %s6
  %s8 = sld [smem:[#allocation0]]
  $region65: #{bottleneck_forward.6} parent=0
    _
  %s10 = ssub.s32 1, %s8
  %s11 = scalar_select 0, %s10, %s8
  loop: start=0, step=1, limit=6
  $region2: #{bottleneck_forward.6} parent=0 // loop_pre_header
    _
  $region3: #{bottleneck_forward.6} parent=0 // loop_header
    %s13 = sphi 0, %s17
    %p14 = scmp.ge.s32.totalorder %s13, 6
    %s23 = sphi 0, %s25
    %s26 = sphi 0, %s23
    %s27 = sphi 0, %s26
    %s43 = sphi 0, %s27
    %s47 = sphi 0, %s47
    %s49 = sphi 0, %s47
    %s50 = sphi 0, %s49
    %s64 = sphi 0, %s50
    %s68 = sphi 0, %s68
    %s70 = sphi 0, %s68
    %s71 = sphi 0, %s70
    %s85 = sphi 0, %s71
    %s89 = sphi 0, %s89
    %s91 = sphi 0, %s89
    %s92 = sphi 0, %s91
    %s106 = sphi 0, %s92
    %s112 = sphi 0, %s114
    %s115 = sphi 0, %s112
    %s116 = sphi 0, %s115
    %s132 = sphi 0, %s116
    %s138 = sphi 0, %s140
    %s141 = sphi 0, %s138
    %s142 = sphi 0, %s141
    %s158 = sphi 0, %s142
    %s164 = sphi 0, %s166
    %s167 = sphi 0, %s164
    %s168 = sphi 0, %s167
    %s184 = sphi 0, %s168
  $region4: #{bottleneck_forward.6} parent=0 // loop_header_branch
    %16 = sbr.rel (%p14) target = $region8
  $region5: #{bottleneck_forward.6} parent=0 // loop_body
    %s18 = ssub.s32 %s13, 1
    %s19 = ssub.s32 %s13, 2
    %s20 = sadd.s32 %s13, 1
    %s21 = ssub.s32 %s13, %s20
    %p22 = scmp.eq.s32.totalorder %s21, 0
    %s24 = sadd.s32 %s23, 1
    %s25 = scalar_select %p22, %s23, %s24
    %p28 = pneg %p22
    %p29 = scmp.eq.s32.totalorder %s13, 3
    %p30 = por %p28, %p29
    %p31 = scmp.ne.s32.totalorder %s23, %s26
    %p32 = scmp.eq.s32.totalorder %s13, 0
    %p33 = por %p31, %p32
    %p34 = scmp.ne.s32.totalorder %s23, %s26
    %p35 = scmp.eq.s32.totalorder %s18, 3
    %p36 = por %p34, %p35
    %p37 = scmp.ne.s32.totalorder %s26, %s27
    %p38 = scmp.eq.s32.totalorder %s18, 0
    %p39 = por %p37, %p38
    %p40 = scmp.ne.s32.totalorder %s26, %s27
    %p41 = scmp.eq.s32.totalorder %s19, 3
    %p42 = por %p40, %p41
    %p44 = scmp.ne.s32.totalorder %s27, %s43
    %p45 = scmp.eq.s32.totalorder %s19, 0
    %p46 = por %p44, %p45
    %s48 = sadd.s32 %s47, 1
    %p51 = scmp.eq.s32.totalorder %s13, 3
    %p52 = scmp.ne.s32.totalorder %s47, %s49
    %p53 = scmp.eq.s32.totalorder %s13, 0
    %p54 = por %p52, %p53
    %p55 = scmp.ne.s32.totalorder %s47, %s49
    %p56 = scmp.eq.s32.totalorder %s18, 3
    %p57 = por %p55, %p56
    %p58 = scmp.ne.s32.totalorder %s49, %s50
    %p59 = scmp.eq.s32.totalorder %s18, 0
    %p60 = por %p58, %p59
    %p61 = scmp.ne.s32.totalorder %s49, %s50
    %p62 = scmp.eq.s32.totalorder %s19, 3
    %p63 = por %p61, %p62
    %p65 = scmp.ne.s32.totalorder %s50, %s64
    %p66 = scmp.eq.s32.totalorder %s19, 0
    %p67 = por %p65, %p66
    %s69 = sadd.s32 %s68, 1
    %p72 = scmp.eq.s32.totalorder %s13, 3
    %p73 = scmp.ne.s32.totalorder %s68, %s70
    %p74 = scmp.eq.s32.totalorder %s13, 0
    %p75 = por %p73, %p74
    %p76 = scmp.ne.s32.totalorder %s68, %s70
    %p77 = scmp.eq.s32.totalorder %s18, 3
    %p78 = por %p76, %p77
    %p79 = scmp.ne.s32.totalorder %s70, %s71
    %p80 = scmp.eq.s32.totalorder %s18, 0
    %p81 = por %p79, %p80
    %p82 = scmp.ne.s32.totalorder %s70, %s71
    %p83 = scmp.eq.s32.totalorder %s19, 3
    %p84 = por %p82, %p83
    %p86 = scmp.ne.s32.totalorder %s71, %s85
    %p87 = scmp.eq.s32.totalorder %s19, 0
    %p88 = por %p86, %p87
    %s90 = sadd.s32 %s89, 1
    %p93 = scmp.eq.s32.totalorder %s13, 3
    %p94 = scmp.ne.s32.totalorder %s89, %s91
    %p95 = scmp.eq.s32.totalorder %s13, 0
    %p96 = por %p94, %p95
    %p97 = scmp.ne.s32.totalorder %s89, %s91
    %p98 = scmp.eq.s32.totalorder %s18, 3
    %p99 = por %p97, %p98
    %p100 = scmp.ne.s32.totalorder %s91, %s92
    %p101 = scmp.eq.s32.totalorder %s18, 0
    %p102 = por %p100, %p101
    %p103 = scmp.ne.s32.totalorder %s91, %s92
    %p104 = scmp.eq.s32.totalorder %s19, 3
    %p105 = por %p103, %p104
    %p107 = scmp.ne.s32.totalorder %s92, %s106
    %p108 = scmp.eq.s32.totalorder %s19, 0
    %p109 = por %p107, %p108
    %s110 = ssub.s32 %s13, %s20
    %p111 = scmp.eq.s32.totalorder %s110, 0
    %s113 = sadd.s32 %s112, 1
    %s114 = scalar_select %p111, %s112, %s113
    %p117 = pneg %p111
    %p118 = scmp.eq.s32.totalorder %s13, 3
    %p119 = por %p117, %p118
    %p120 = scmp.ne.s32.totalorder %s112, %s115
    %p121 = scmp.eq.s32.totalorder %s13, 0
    %p122 = por %p120, %p121
    %p123 = scmp.ne.s32.totalorder %s112, %s115
    %p124 = scmp.eq.s32.totalorder %s18, 3
    %p125 = por %p123, %p124
    %p126 = scmp.ne.s32.totalorder %s115, %s116
    %p127 = scmp.eq.s32.totalorder %s18, 0
    %p128 = por %p126, %p127
    %p129 = scmp.ne.s32.totalorder %s115, %s116
    %p130 = scmp.eq.s32.totalorder %s19, 3
    %p131 = por %p129, %p130
    %p133 = scmp.ne.s32.totalorder %s116, %s132
    %p134 = scmp.eq.s32.totalorder %s19, 0
    %p135 = por %p133, %p134
    %s136 = ssub.s32 %s13, %s20
    %p137 = scmp.eq.s32.totalorder %s136, 0
    %s139 = sadd.s32 %s138, 1
    %s140 = scalar_select %p137, %s138, %s139
    %p143 = pneg %p137
    %p144 = scmp.eq.s32.totalorder %s13, 3
    %p145 = por %p143, %p144
    %p146 = scmp.ne.s32.totalorder %s138, %s141
    %p147 = scmp.eq.s32.totalorder %s13, 0
    %p148 = por %p146, %p147
    %p149 = scmp.ne.s32.totalorder %s138, %s141
    %p150 = scmp.eq.s32.totalorder %s18, 3
    %p151 = por %p149, %p150
    %p152 = scmp.ne.s32.totalorder %s141, %s142
    %p153 = scmp.eq.s32.totalorder %s18, 0
    %p154 = por %p152, %p153
    %p155 = scmp.ne.s32.totalorder %s141, %s142
    %p156 = scmp.eq.s32.totalorder %s19, 3
    %p157 = por %p155, %p156
    %p159 = scmp.ne.s32.totalorder %s142, %s158
    %p160 = scmp.eq.s32.totalorder %s19, 0
    %p161 = por %p159, %p160
    %s162 = ssub.s32 %s13, %s20
    %p163 = scmp.eq.s32.totalorder %s162, 0
    %s165 = sadd.s32 %s164, 1
    %s166 = scalar_select %p163, %s164, %s165
    %p169 = pneg %p163
    %p170 = scmp.eq.s32.totalorder %s13, 3
    %p171 = por %p169, %p170
    %p172 = scmp.ne.s32.totalorder %s164, %s167
    %p173 = scmp.eq.s32.totalorder %s13, 0
    %p174 = por %p172, %p173
    %p175 = scmp.ne.s32.totalorder %s164, %s167
    %p176 = scmp.eq.s32.totalorder %s18, 3
    %p177 = por %p175, %p176
    %p178 = scmp.ne.s32.totalorder %s167, %s168
    %p179 = scmp.eq.s32.totalorder %s18, 0
    %p180 = por %p178, %p179
    %p181 = scmp.ne.s32.totalorder %s167, %s168
    %p182 = scmp.eq.s32.totalorder %s19, 3
    %p183 = por %p181, %p182
    %p185 = scmp.ne.s32.totalorder %s168, %s184
    %p186 = scmp.eq.s32.totalorder %s19, 0
    %p187 = por %p185, %p186
    %p188 = scmp.le.s32.totalorder 1, %s13
    %p189 = scmp.lt.s32.totalorder %s13, 5
    %p190 = pnand %p188, %p189
    %p191 = pneg %p190
    // Predicated region
    $region9: #{bottleneck_forward.6} parent=5 // pred_check
      _
    $region10: #{bottleneck_forward.6} parent=5 // pred_check_branch
      %193 = sbr.rel (%p190) target = $region12
    $region11: #{bottleneck_forward.6} parent=5 // pred_region
      %s194 = ssub.s32 %s13, 1
      // Predicated region
      $region13: #{bottleneck_forward.6} parent=11 // pred_check
        %p195 = pneg %p60
      $region14: #{bottleneck_forward.6} parent=11 // pred_check_branch
        %197 = sbr.rel (%p195) target = $region16
      $region15: #{bottleneck_forward.6} parent=11 // pred_region
        _
      $region16: #{bottleneck_forward.6} parent=11 // pred_fallthru
        _
      // Predicated region
      $region17: #{bottleneck_forward.6} parent=11 // pred_check
        %p198 = pneg %p81
      $region18: #{bottleneck_forward.6} parent=11 // pred_check_branch
        %200 = sbr.rel (%p198) target = $region20
      $region19: #{bottleneck_forward.6} parent=11 // pred_region
        _
      $region20: #{bottleneck_forward.6} parent=11 // pred_fallthru
        _
      // Predicated region
      $region21: #{bottleneck_forward.6} parent=11 // pred_check
        %p201 = pneg %p102
      $region22: #{bottleneck_forward.6} parent=11 // pred_check_branch
        %203 = sbr.rel (%p201) target = $region24
      $region23: #{bottleneck_forward.6} parent=11 // pred_region
        _
      $region24: #{bottleneck_forward.6} parent=11 // pred_fallthru
        _
    $region12: #{bottleneck_forward.6} parent=5 // pred_fallthru
      _
    %p204 = scmp.lt.s32.totalorder %s13, 4
    // Predicated region
    $region25: #{bottleneck_forward.6} parent=5 // pred_check
      %p205 = pneg %p204
    $region26: #{bottleneck_forward.6} parent=5 // pred_check_branch
      %207 = sbr.rel (%p205) target = $region28
    $region27: #{bottleneck_forward.6} parent=5 // pred_region
      // Predicated region
      $region29: #{bottleneck_forward.6} parent=27 // pred_check
        %p208 = pneg %p33
      $region30: #{bottleneck_forward.6} parent=27 // pred_check_branch
        %210 = sbr.rel (%p208) target = $region32
      $region31: #{bottleneck_forward.6} parent=27 // pred_region
        %s211 = smul.u32 16, %s13
        %p212 = scmp.lt.s32.totalorder %s211, 63
        %s213 = scalar_select %p212, %s211, 63
        %s214 = smul.addr %s213, 8
        %s215 = scalar_lea.vmem %s0, %s214
        %s216 = smul.u32 16, %s13
      $region32: #{bottleneck_forward.6} parent=27 // pred_fallthru
        _
    $region28: #{bottleneck_forward.6} parent=5 // pred_fallthru
      _
    %p217 = scmp.le.s32.totalorder 1, %s13
    %p218 = scmp.lt.s32.totalorder %s13, 5
    %p219 = pnand %p217, %p218
    %p220 = pneg %p219
    // Predicated region
    $region33: #{bottleneck_forward.6} parent=5 // pred_check
      _
    $region34: #{bottleneck_forward.6} parent=5 // pred_check_branch
      %222 = sbr.rel (%p219) target = $region36
    $region35: #{bottleneck_forward.6} parent=5 // pred_region
      %s223 = ssub.s32 %s13, 1
      %s224 = smul.u32 16, %s18
      %p225 = scmp.lt.s32.totalorder %s224, 63
      %s226 = scalar_select %p225, %s224, 63
      %s227 = smul.addr %s226, 8
      %s228 = scalar_lea.vmem %s0, %s227
      %p229 = pneg %p39
      %p230 = pneg %p36
      %p231 = pneg %p60
      %p232 = pneg %p57
      %p233 = pneg %p81
      %p234 = pneg %p78
      %p235 = pneg %p102
      %p236 = pneg %p99
      %p237 = pneg %p128
      %p238 = pneg %p125
      %s239 = smul.u32 16, %s18
      %p240 = scmp.lt.s32.totalorder %s239, 63
      %s241 = scalar_select %p240, %s239, 63
      %s242 = smul.addr %s241, 8
      %s243 = scalar_lea.vmem %s4, %s242
      %p244 = pneg %p154
      %p245 = pneg %p151
      %p246 = scmp.lt.s32.totalorder %s18, 3
      %s247 = scalar_select %p246, %s18, 3
      %s248 = smul.addr %s247, 8
      %s249 = scalar_lea.vmem %s5, %s248
      %p250 = pneg %p180
      %p251 = pneg %p177
      %p252 = scmp.lt.s32.totalorder %s18, 3
      %s253 = scalar_select %p252, %s18, 3
      %s254 = smul.addr %s253, 8
      %s255 = scalar_lea.vmem %s6, %s254
      %s256 = smul.u32 16, %s18
      %p257 = scmp.lt.s32.totalorder %s256, 63
      %s258 = scalar_select %p257, %s256, 63
      %s259 = smul.addr %s258, 8
      %s260 = scalar_lea.vmem %s0, %s259
      %s261 = smul.u32 16, %s18
      %s262 = smul.u32 16, %s18
      %p263 = scmp.lt.s32.totalorder %s262, 63
      %s264 = scalar_select %p263, %s262, 63
      %s265 = smul.addr %s264, 8
      %s266 = scalar_lea.vmem %s4, %s265
      %s267 = smul.u32 16, %s18
      %p268 = scmp.lt.s32.totalorder %s18, 3
      %s269 = scalar_select %p268, %s18, 3
      %s270 = smul.addr %s269, 8
      %s271 = scalar_lea.vmem %s5, %s270
      %p272 = scmp.lt.s32.totalorder %s18, 3
      %s273 = scalar_select %p272, %s18, 3
      %s274 = smul.addr %s273, 8
      %s275 = scalar_lea.vmem %s6, %s274
      %v276 = vld [vmem:[%s260] sm:$0xff]
      %v277 = vld [vmem:[%s260 + $0x8] sm:$0xff]
      %v278 = vld [vmem:[%s260 + $0x10] sm:$0xff]
      %v279 = vld [vmem:[%s260 + $0x18] sm:$0xff]
      %v280 = vld [vmem:[%s260 + $0x20] sm:$0xff]
      %v281 = vld [vmem:[%s260 + $0x28] sm:$0xff]
      %v282 = vld [vmem:[%s260 + $0x30] sm:$0xff]
      %v283 = vld [vmem:[%s260 + $0x38] sm:$0xff]
      %v284 = vld [vmem:[%s260 + $0x40] sm:$0xff]
      %v285 = vld [vmem:[%s260 + $0x48] sm:$0xff]
      %v286 = vld [vmem:[%s260 + $0x50] sm:$0xff]
      %v287 = vld [vmem:[%s260 + $0x58] sm:$0xff]
      %v288 = vld [vmem:[%s260 + $0x60] sm:$0xff]
      %v289 = vld [vmem:[%s260 + $0x68] sm:$0xff]
      %v290 = vld [vmem:[%s260 + $0x70] sm:$0xff]
      %v291 = vld [vmem:[%s260 + $0x78] sm:$0xff]
      %v292 = vld [vmem:[%s2] sm:$0x1]
      %v294 = vperm.slane %v292, 0
      %v296 = vmul.f32 %v276, %v294
      %v297 = vmul.f32 %v277, %v294
      %v298 = vmul.f32 %v278, %v294
      %v299 = vmul.f32 %v279, %v294
      %v300 = vmul.f32 %v280, %v294
      %v301 = vmul.f32 %v281, %v294
      %v302 = vmul.f32 %v282, %v294
      %v303 = vmul.f32 %v283, %v294
      %v304 = vmul.f32 %v284, %v294
      %v305 = vmul.f32 %v285, %v294
      %v306 = vmul.f32 %v286, %v294
      %v307 = vmul.f32 %v287, %v294
      %v308 = vmul.f32 %v288, %v294
      %v309 = vmul.f32 %v289, %v294
      %v310 = vmul.f32 %v290, %v294
      %v311 = vmul.f32 %v291, %v294
      %v312 = vld [vmem:[%s3] sm:$0x1]
      %v314 = vperm.slane %v312, 0
      %v316 = vadd.f32 %v296, %v314
      %v317 = vadd.f32 %v297, %v314
      %v318 = vadd.f32 %v298, %v314
      %v319 = vadd.f32 %v299, %v314
      %v320 = vadd.f32 %v300, %v314
      %v321 = vadd.f32 %v301, %v314
      %v322 = vadd.f32 %v302, %v314
      %v323 = vadd.f32 %v303, %v314
      %v324 = vadd.f32 %v304, %v314
      %v325 = vadd.f32 %v305, %v314
      %v326 = vadd.f32 %v306, %v314
      %v327 = vadd.f32 %v307, %v314
      %v328 = vadd.f32 %v308, %v314
      %v329 = vadd.f32 %v309, %v314
      %v330 = vadd.f32 %v310, %v314
      %v331 = vadd.f32 %v311, %v314
      %v332 = vmax.f32 %v316, 0.0
      %v333 = vmax.f32 %v317, 0.0
      %v334 = vmax.f32 %v318, 0.0
      %v335 = vmax.f32 %v319, 0.0
      %v336 = vmax.f32 %v320, 0.0
      %v337 = vmax.f32 %v321, 0.0
      %v338 = vmax.f32 %v322, 0.0
      %v339 = vmax.f32 %v323, 0.0
      %v340 = vmax.f32 %v324, 0.0
      %v341 = vmax.f32 %v325, 0.0
      %v342 = vmax.f32 %v326, 0.0
      %v343 = vmax.f32 %v327, 0.0
      %v344 = vmax.f32 %v328, 0.0
      %v345 = vmax.f32 %v329, 0.0
      %v346 = vmax.f32 %v330, 0.0
      %v347 = vmax.f32 %v331, 0.0
      %v348 = vld [vmem:[%s1] sm:$0xff]
      %v349 = vld [vmem:[%s1 + $0x8] sm:$0xff]
      %v350 = vld [vmem:[%s1 + $0x10] sm:$0xff]
      %v351 = vld [vmem:[%s1 + $0x18] sm:$0xff]
      %v352 = vld [vmem:[%s1 + $0x20] sm:$0xff]
      %v353 = vld [vmem:[%s1 + $0x28] sm:$0xff]
      %v354 = vld [vmem:[%s1 + $0x30] sm:$0xff]
      %v355 = vld [vmem:[%s1 + $0x38] sm:$0xff]
      %v356 = vld [vmem:[%s1 + $0x40] sm:$0xff]
      %v357 = vld [vmem:[%s1 + $0x48] sm:$0xff]
      %v358 = vld [vmem:[%s1 + $0x50] sm:$0xff]
      %v359 = vld [vmem:[%s1 + $0x58] sm:$0xff]
      %v360 = vld [vmem:[%s1 + $0x60] sm:$0xff]
      %v361 = vld [vmem:[%s1 + $0x68] sm:$0xff]
      %v362 = vld [vmem:[%s1 + $0x70] sm:$0xff]
      %v363 = vld [vmem:[%s1 + $0x78] sm:$0xff]
      %364 = vmatpush.msra.mxu0 %v363
      %365 = vmatpush.msra.mxu0 %v362
      %366 = vmatpush.msra.mxu0 %v361
      %367 = vmatpush.msra.mxu0 %v360
      %368 = vmatpush.msra.mxu0 %v359
      %369 = vmatpush.msra.mxu0 %v358
      %370 = vmatpush.msra.mxu0 %v357
      %371 = vmatpush.msra.mxu0 %v356
      %372 = vmatpush.msra.mxu0 %v355
      %373 = vmatpush.msra.mxu0 %v354
      %374 = vmatpush.msra.mxu0 %v353
      %375 = vmatpush.msra.mxu0 %v352
      %376 = vmatpush.msra.mxu0 %v351
      %377 = vmatpush.msra.mxu0 %v350
      %378 = vmatpush.msra.mxu0 %v349
      %379 = vmatpush.msra.mxu0 %v348
      %380 = vmatmul.f32.gmra.mxu0 %v332
      %v381 = vpop.f32.mrf.mxu0
      %v382 = vadd.f32 0.0, %v381
      %383 = vmatmul.f32.gmra.mxu0 %v333
      %v384 = vpop.f32.mrf.mxu0
      %v385 = vadd.f32 0.0, %v384
      %386 = vmatmul.f32.gmra.mxu0 %v334
      %v387 = vpop.f32.mrf.mxu0
      %v388 = vadd.f32 0.0, %v387
      %389 = vmatmul.f32.gmra.mxu0 %v335
      %v390 = vpop.f32.mrf.mxu0
      %v391 = vadd.f32 0.0, %v390
      %392 = vmatmul.f32.gmra.mxu0 %v336
      %v393 = vpop.f32.mrf.mxu0
      %v394 = vadd.f32 0.0, %v393
      %395 = vmatmul.f32.gmra.mxu0 %v337
      %v396 = vpop.f32.mrf.mxu0
      %v397 = vadd.f32 0.0, %v396
      %398 = vmatmul.f32.gmra.mxu0 %v338
      %v399 = vpop.f32.mrf.mxu0
      %v400 = vadd.f32 0.0, %v399
      %401 = vmatmul.f32.gmra.mxu0 %v339
      %v402 = vpop.f32.mrf.mxu0
      %v403 = vadd.f32 0.0, %v402
      %404 = vmatmul.f32.gmra.mxu0 %v340
      %v405 = vpop.f32.mrf.mxu0
      %v406 = vadd.f32 0.0, %v405
      %407 = vmatmul.f32.gmra.mxu0 %v341
      %v408 = vpop.f32.mrf.mxu0
      %v409 = vadd.f32 0.0, %v408
      %410 = vmatmul.f32.gmra.mxu0 %v342
      %v411 = vpop.f32.mrf.mxu0
      %v412 = vadd.f32 0.0, %v411
      %413 = vmatmul.f32.gmra.mxu0 %v343
      %v414 = vpop.f32.mrf.mxu0
      %v415 = vadd.f32 0.0, %v414
      %416 = vmatmul.f32.gmra.mxu0 %v344
      %v417 = vpop.f32.mrf.mxu0
      %v418 = vadd.f32 0.0, %v417
      %419 = vmatmul.f32.gmra.mxu0 %v345
      %v420 = vpop.f32.mrf.mxu0
      %v421 = vadd.f32 0.0, %v420
      %422 = vmatmul.f32.gmra.mxu0 %v346
      %v423 = vpop.f32.mrf.mxu0
      %v424 = vadd.f32 0.0, %v423
      %425 = vmatmul.f32.gmra.mxu0 %v347
      %v426 = vpop.f32.mrf.mxu0
      %v427 = vadd.f32 0.0, %v426
      %428 = vdwg.mxu0
      %429 = vst [vmem:[%s266] sm:$0xff] %v382
      %430 = vst [vmem:[%s266 + $0x8] sm:$0xff] %v385
      %431 = vst [vmem:[%s266 + $0x10] sm:$0xff] %v388
      %432 = vst [vmem:[%s266 + $0x18] sm:$0xff] %v391
      %433 = vst [vmem:[%s266 + $0x20] sm:$0xff] %v394
      %434 = vst [vmem:[%s266 + $0x28] sm:$0xff] %v397
      %435 = vst [vmem:[%s266 + $0x30] sm:$0xff] %v400
      %436 = vst [vmem:[%s266 + $0x38] sm:$0xff] %v403
      %437 = vst [vmem:[%s266 + $0x40] sm:$0xff] %v406
      %438 = vst [vmem:[%s266 + $0x48] sm:$0xff] %v409
      %439 = vst [vmem:[%s266 + $0x50] sm:$0xff] %v412
      %440 = vst [vmem:[%s266 + $0x58] sm:$0xff] %v415
      %441 = vst [vmem:[%s266 + $0x60] sm:$0xff] %v418
      %442 = vst [vmem:[%s266 + $0x68] sm:$0xff] %v421
      %443 = vst [vmem:[%s266 + $0x70] sm:$0xff] %v424
      %444 = vst [vmem:[%s266 + $0x78] sm:$0xff] %v427
      %v445 = vadd.f32 %v382, %v385
      %v446 = vadd.f32 %v445, %v388
      %v447 = vadd.f32 %v446, %v391
      %v448 = vadd.f32 %v447, %v394
      %v449 = vadd.f32 %v448, %v397
      %v450 = vadd.f32 %v449, %v400
      %v451 = vadd.f32 %v450, %v403
      %v452 = vadd.f32 %v451, %v406
      %v453 = vadd.f32 %v452, %v409
      %v454 = vadd.f32 %v453, %v412
      %v455 = vadd.f32 %v454, %v415
      %v456 = vadd.f32 %v455, %v418
      %v457 = vadd.f32 %v456, %v421
      %v458 = vadd.f32 %v457, %v424
      %v459 = vadd.f32 %v458, %v427
      %v460 = vrot.slane %v459, 4
      %v461 = vadd.f32 %v459, %v460
      %v462 = vrot.slane %v461, 2
      %v463 = vadd.f32 %v461, %v462
      %v464 = vrot.slane %v463, 1
      %v465 = vadd.f32 %v463, %v464
      %v466 = vmul.f32 %v465, 0.0078125
      %v467 = vsub.f32 %v382, %v466
      %v468 = vsub.f32 %v385, %v466
      %v469 = vsub.f32 %v388, %v466
      %v470 = vsub.f32 %v391, %v466
      %v471 = vsub.f32 %v394, %v466
      %v472 = vsub.f32 %v397, %v466
      %v473 = vsub.f32 %v400, %v466
      %v474 = vsub.f32 %v403, %v466
      %v475 = vsub.f32 %v406, %v466
      %v476 = vsub.f32 %v409, %v466
      %v477 = vsub.f32 %v412, %v466
      %v478 = vsub.f32 %v415, %v466
      %v479 = vsub.f32 %v418, %v466
      %v480 = vsub.f32 %v421, %v466
      %v481 = vsub.f32 %v424, %v466
      %v482 = vsub.f32 %v427, %v466
      %v483 = vmul.f32 %v467, %v467
      %v484 = vmul.f32 %v468, %v468
      %v485 = vmul.f32 %v469, %v469
      %v486 = vmul.f32 %v470, %v470
      %v487 = vmul.f32 %v471, %v471
      %v488 = vmul.f32 %v472, %v472
      %v489 = vmul.f32 %v473, %v473
      %v490 = vmul.f32 %v474, %v474
      %v491 = vmul.f32 %v475, %v475
      %v492 = vmul.f32 %v476, %v476
      %v493 = vmul.f32 %v477, %v477
      %v494 = vmul.f32 %v478, %v478
      %v495 = vmul.f32 %v479, %v479
      %v496 = vmul.f32 %v480, %v480
      %v497 = vmul.f32 %v481, %v481
      %v498 = vmul.f32 %v482, %v482
      %v499 = vadd.f32 %v483, %v484
      %v500 = vadd.f32 %v499, %v485
      %v501 = vadd.f32 %v500, %v486
      %v502 = vadd.f32 %v501, %v487
      %v503 = vadd.f32 %v502, %v488
      %v504 = vadd.f32 %v503, %v489
      %v505 = vadd.f32 %v504, %v490
      %v506 = vadd.f32 %v505, %v491
      %v507 = vadd.f32 %v506, %v492
      %v508 = vadd.f32 %v507, %v493
      %v509 = vadd.f32 %v508, %v494
      %v510 = vadd.f32 %v509, %v495
      %v511 = vadd.f32 %v510, %v496
      %v512 = vadd.f32 %v511, %v497
      %v513 = vadd.f32 %v512, %v498
      %v514 = vrot.slane %v513, 4
      %v515 = vadd.f32 %v513, %v514
      %v516 = vrot.slane %v515, 2
      %v517 = vadd.f32 %v515, %v516
      %v518 = vrot.slane %v517, 1
      %v519 = vadd.f32 %v517, %v518
      %520 = vst [vmem:[%s271] sm:$0xff] %v465
      %521 = vst [vmem:[%s275] sm:$0xff] %v519
      %s522 = smul.u32 16, %s18
      %p523 = scmp.lt.s32.totalorder %s522, 63
      %s524 = scalar_select %p523, %s522, 63
      %s525 = smul.addr %s524, 8
      %s526 = scalar_lea.vmem %s4, %s525
      %p527 = scmp.lt.s32.totalorder %s18, 3
      %s528 = scalar_select %p527, %s18, 3
      %s529 = smul.addr %s528, 8
      %s530 = scalar_lea.vmem %s5, %s529
      %p531 = scmp.lt.s32.totalorder %s18, 3
      %s532 = scalar_select %p531, %s18, 3
      %s533 = smul.addr %s532, 8
      %s534 = scalar_lea.vmem %s6, %s533
      // Predicated region
      $region37: #{bottleneck_forward.6} parent=35 // pred_check
        %p535 = pneg %p125
      $region38: #{bottleneck_forward.6} parent=35 // pred_check_branch
        %537 = sbr.rel (%p535) target = $region40
      $region39: #{bottleneck_forward.6} parent=35 // pred_region
        %s538 = smul.u32 16, %s18
      $region40: #{bottleneck_forward.6} parent=35 // pred_fallthru
        _
      // Predicated region
      $region41: #{bottleneck_forward.6} parent=35 // pred_check
        %p539 = pneg %p151
      $region42: #{bottleneck_forward.6} parent=35 // pred_check_branch
        %541 = sbr.rel (%p539) target = $region44
      $region43: #{bottleneck_forward.6} parent=35 // pred_region
        _
      $region44: #{bottleneck_forward.6} parent=35 // pred_fallthru
        _
      // Predicated region
      $region45: #{bottleneck_forward.6} parent=35 // pred_check
        %p542 = pneg %p177
      $region46: #{bottleneck_forward.6} parent=35 // pred_check_branch
        %544 = sbr.rel (%p542) target = $region48
      $region47: #{bottleneck_forward.6} parent=35 // pred_region
        _
      $region48: #{bottleneck_forward.6} parent=35 // pred_fallthru
        _
    $region36: #{bottleneck_forward.6} parent=5 // pred_fallthru
      _
    %p545 = scmp.le.s32.totalorder 2, %s13
    // Predicated region
    $region49: #{bottleneck_forward.6} parent=5 // pred_check
      %p546 = pneg %p545
    $region50: #{bottleneck_forward.6} parent=5 // pred_check_branch
      %548 = sbr.rel (%p546) target = $region52
    $region51: #{bottleneck_forward.6} parent=5 // pred_region
      %s549 = ssub.s32 %s13, 2
      // Predicated region
      $region53: #{bottleneck_forward.6} parent=51 // pred_check
        %p550 = pneg %p131
      $region54: #{bottleneck_forward.6} parent=51 // pred_check_branch
        %552 = sbr.rel (%p550) target = $region56
      $region55: #{bottleneck_forward.6} parent=51 // pred_region
        %s553 = smul.u32 16, %s19
        %p554 = scmp.lt.s32.totalorder %s553, 63
        %s555 = scalar_select %p554, %s553, 63
        %s556 = smul.addr %s555, 8
        %s557 = scalar_lea.vmem %s4, %s556
      $region56: #{bottleneck_forward.6} parent=51 // pred_fallthru
        _
      // Predicated region
      $region57: #{bottleneck_forward.6} parent=51 // pred_check
        %p558 = pneg %p157
      $region58: #{bottleneck_forward.6} parent=51 // pred_check_branch
        %560 = sbr.rel (%p558) target = $region60
      $region59: #{bottleneck_forward.6} parent=51 // pred_region
        %p561 = scmp.lt.s32.totalorder %s19, 3
        %s562 = scalar_select %p561, %s19, 3
        %s563 = smul.addr %s562, 8
        %s564 = scalar_lea.vmem %s5, %s563
      $region60: #{bottleneck_forward.6} parent=51 // pred_fallthru
        _
      // Predicated region
      $region61: #{bottleneck_forward.6} parent=51 // pred_check
        %p565 = pneg %p183
      $region62: #{bottleneck_forward.6} parent=51 // pred_check_branch
        %567 = sbr.rel (%p565) target = $region64
      $region63: #{bottleneck_forward.6} parent=51 // pred_region
        %p568 = scmp.lt.s32.totalorder %s19, 3
        %s569 = scalar_select %p568, %s19, 3
        %s570 = smul.addr %s569, 8
        %s571 = scalar_lea.vmem %s6, %s570
      $region64: #{bottleneck_forward.6} parent=51 // pred_fallthru
        _
    $region52: #{bottleneck_forward.6} parent=5 // pred_fallthru
      _
  $region6: #{bottleneck_forward.6} parent=0 // loop_footer
    %s17 = sadd.s32 1, %s13
  $region7: #{bottleneck_forward.6} parent=0 // loop_footer_branch
    %12 = sbr.rel target = $region3
  $region8: #{bottleneck_forward.6} parent=0 // loop_exit
    _

// kernel: bottleneck_forward.5
$region0: #{bottleneck_forward.5}
  #allocation0 [shape = 'u32[]', space=smem, size = 0x4, offset = 0x4, fixed_abs, tag = 'smem constant byte address 0x4 - core index']
  #allocation1 [shape = 'u32[72,128]{1,0:T(1,128)}', space=vmem, size = 0x9000, scoped, tag = 'internal scratch']
  #allocation2 [shape = 'f32[128,128]{1,0:T(8,128)}', space=vmem, size = 0x10000, scoped, tag = 'scratch operand']
  %s0 = inlined_call_operand.vmem [shape: f32[2,18,18,128], index: 0, kind: input, shape index: {}]
  %s1 = inlined_call_operand.vmem [shape: f32[3,384,128], index: 1, kind: input, shape index: {}]
  %s2 = inlined_call_operand.vmem [shape: f32[1,128], index: 2, kind: input, shape index: {}]
  %s3 = inlined_call_operand.vmem [shape: f32[1,128], index: 3, kind: input, shape index: {}]
  %s4 = inlined_call_operand.vmem [shape: f32[2,256,128], index: 4, kind: output, shape index: {0}]
  %s5 = inlined_call_operand.vmem [shape: f32[4,8,128], index: 5, kind: output, shape index: {1}]
  %s6 = inlined_call_operand.vmem [shape: f32[4,8,128], index: 6, kind: output, shape index: {2}]
  %7 = xla_tuple %s4, %s5, %s6
  %s8 = sld [smem:[#allocation0]]
  $region65: #{bottleneck_forward.5} parent=0
    _
  %s10 = ssub.s32 1, %s8
  %s11 = scalar_select 0, %s10, %s8
  loop: start=0, step=1, limit=6
  $region2: #{bottleneck_forward.5} parent=0 // loop_pre_header
    _
  $region3: #{bottleneck_forward.5} parent=0 // loop_header
    %s13 = sphi 0, %s17
    %p14 = scmp.ge.s32.totalorder %s13, 6
    %s20 = sphi 0, %s32
    %s21 = sphi 0, %s28
    %s22 = sphi 0, %s20
    %s23 = sphi 0, %s21
    %s24 = sphi 0, %s22
    %s25 = sphi 0, %s23
    %s35 = sphi 0, %s37
    %s38 = sphi 0, %s35
    %s39 = sphi 0, %s38
    %s55 = sphi 0, %s39
    %s59 = sphi 0, %s59
    %s61 = sphi 0, %s59
    %s62 = sphi 0, %s61
    %s76 = sphi 0, %s62
    %s80 = sphi 0, %s80
    %s82 = sphi 0, %s80
    %s83 = sphi 0, %s82
    %s97 = sphi 0, %s83
    %s101 = sphi 0, %s101
    %s103 = sphi 0, %s101
    %s104 = sphi 0, %s103
    %s118 = sphi 0, %s104
    %s126 = sphi 0, %s128
    %s129 = sphi 0, %s126
    %s130 = sphi 0, %s129
    %s146 = sphi 0, %s130
    %s156 = sphi 0, %s158
    %s159 = sphi 0, %s156
    %s160 = sphi 0, %s159
    %s176 = sphi 0, %s160
    %s186 = sphi 0, %s188
    %s189 = sphi 0, %s186
    %s190 = sphi 0, %s189
    %s206 = sphi 0, %s190
  $region4: #{bottleneck_forward.5} parent=0 // loop_header_branch
    %16 = sbr.rel (%p14) target = $region8
  $region5: #{bottleneck_forward.5} parent=0 // loop_body
    %s18 = ssub.s32 %s13, 1
    %s19 = ssub.s32 %s13, 2
    %s26 = sadd.s32 1, %s21
    %p27 = scmp.ge.s32.totalorder %s26, 2
    %s28 = scalar_select %p27, 0, %s26
    %s29 = sadd.s32 1, %s20
    %s30 = scalar_select %p27, %s29, %s20
    %p31 = scmp.ge.s32.totalorder %s30, 2
    %s32 = scalar_select %p31, 0, %s30
    %s33 = ssub.s32 %s20, %s32
    %p34 = scmp.eq.s32.totalorder %s33, 0
    %s36 = sadd.s32 %s35, 1
    %s37 = scalar_select %p34, %s35, %s36
    %p40 = pneg %p34
    %p41 = scmp.eq.s32.totalorder %s13, 3
    %p42 = por %p40, %p41
    %p43 = scmp.ne.s32.totalorder %s35, %s38
    %p44 = scmp.eq.s32.totalorder %s13, 0
    %p45 = por %p43, %p44
    %p46 = scmp.ne.s32.totalorder %s35, %s38
    %p47 = scmp.eq.s32.totalorder %s18, 3
    %p48 = por %p46, %p47
    %p49 = scmp.ne.s32.totalorder %s38, %s39
    %p50 = scmp.eq.s32.totalorder %s18, 0
    %p51 = por %p49, %p50
    %p52 = scmp.ne.s32.totalorder %s38, %s39
    %p53 = scmp.eq.s32.totalorder %s19, 3
    %p54 = por %p52, %p53
    %p56 = scmp.ne.s32.totalorder %s39, %s55
    %p57 = scmp.eq.s32.totalorder %s19, 0
    %p58 = por %p56, %p57
    %s60 = sadd.s32 %s59, 1
    %p63 = scmp.eq.s32.totalorder %s13, 3
    %p64 = scmp.ne.s32.totalorder %s59, %s61
    %p65 = scmp.eq.s32.totalorder %s13, 0
    %p66 = por %p64, %p65
    %p67 = scmp.ne.s32.totalorder %s59, %s61
    %p68 = scmp.eq.s32.totalorder %s18, 3
    %p69 = por %p67, %p68
    %p70 = scmp.ne.s32.totalorder %s61, %s62
    %p71 = scmp.eq.s32.totalorder %s18, 0
    %p72 = por %p70, %p71
    %p73 = scmp.ne.s32.totalorder %s61, %s62
    %p74 = scmp.eq.s32.totalorder %s19, 3
    %p75 = por %p73, %p74
    %p77 = scmp.ne.s32.totalorder %s62, %s76
    %p78 = scmp.eq.s32.totalorder %s19, 0
    %p79 = por %p77, %p78
    %s81 = sadd.s32 %s80, 1
    %p84 = scmp.eq.s32.totalorder %s13, 3
    %p85 = scmp.ne.s32.totalorder %s80, %s82
    %p86 = scmp.eq.s32.totalorder %s13, 0
    %p87 = por %p85, %p86
    %p88 = scmp.ne.s32.totalorder %s80, %s82
    %p89 = scmp.eq.s32.totalorder %s18, 3
    %p90 = por %p88, %p89
    %p91 = scmp.ne.s32.totalorder %s82, %s83
    %p92 = scmp.eq.s32.totalorder %s18, 0
    %p93 = por %p91, %p92
    %p94 = scmp.ne.s32.totalorder %s82, %s83
    %p95 = scmp.eq.s32.totalorder %s19, 3
    %p96 = por %p94, %p95
    %p98 = scmp.ne.s32.totalorder %s83, %s97
    %p99 = scmp.eq.s32.totalorder %s19, 0
    %p100 = por %p98, %p99
    %s102 = sadd.s32 %s101, 1
    %p105 = scmp.eq.s32.totalorder %s13, 3
    %p106 = scmp.ne.s32.totalorder %s101, %s103
    %p107 = scmp.eq.s32.totalorder %s13, 0
    %p108 = por %p106, %p107
    %p109 = scmp.ne.s32.totalorder %s101, %s103
    %p110 = scmp.eq.s32.totalorder %s18, 3
    %p111 = por %p109, %p110
    %p112 = scmp.ne.s32.totalorder %s103, %s104
    %p113 = scmp.eq.s32.totalorder %s18, 0
    %p114 = por %p112, %p113
    %p115 = scmp.ne.s32.totalorder %s103, %s104
    %p116 = scmp.eq.s32.totalorder %s19, 3
    %p117 = por %p115, %p116
    %p119 = scmp.ne.s32.totalorder %s104, %s118
    %p120 = scmp.eq.s32.totalorder %s19, 0
    %p121 = por %p119, %p120
    %s122 = ssub.s32 %s20, %s32
    %s123 = ssub.s32 %s21, %s28
    %s124 = sor.u32 %s122, %s123
    %p125 = scmp.eq.s32.totalorder %s124, 0
    %s127 = sadd.s32 %s126, 1
    %s128 = scalar_select %p125, %s126, %s127
    %p131 = pneg %p125
    %p132 = scmp.eq.s32.totalorder %s13, 3
    %p133 = por %p131, %p132
    %p134 = scmp.ne.s32.totalorder %s126, %s129
    %p135 = scmp.eq.s32.totalorder %s13, 0
    %p136 = por %p134, %p135
    %p137 = scmp.ne.s32.totalorder %s126, %s129
    %p138 = scmp.eq.s32.totalorder %s18, 3
    %p139 = por %p137, %p138
    %p140 = scmp.ne.s32.totalorder %s129, %s130
    %p141 = scmp.eq.s32.totalorder %s18, 0
    %p142 = por %p140, %p141
    %p143 = scmp.ne.s32.totalorder %s129, %s130
    %p144 = scmp.eq.s32.totalorder %s19, 3
    %p145 = por %p143, %p144
    %p147 = scmp.ne.s32.totalorder %s130, %s146
    %p148 = scmp.eq.s32.totalorder %s19, 0
    %p149 = por %p147, %p148
    %s150 = smul.u32 %s20, 2
    %s151 = sadd.s32 %s150, %s21
    %s152 = smul.u32 %s32, 2
    %s153 = sadd.s32 %s152, %s28
    %s154 = ssub.s32 %s151, %s153
    %p155 = scmp.eq.s32.totalorder %s154, 0
    %s157 = sadd.s32 %s156, 1
    %s158 = scalar_select %p155, %s156, %s157
    %p161 = pneg %p155
    %p162 = scmp.eq.s32.totalorder %s13, 3
    %p163 = por %p161, %p162
    %p164 = scmp.ne.s32.totalorder %s156, %s159
    %p165 = scmp.eq.s32.totalorder %s13, 0
    %p166 = por %p164, %p165
    %p167 = scmp.ne.s32.totalorder %s156, %s159
    %p168 = scmp.eq.s32.totalorder %s18, 3
    %p169 = por %p167, %p168
    %p170 = scmp.ne.s32.totalorder %s159, %s160
    %p171 = scmp.eq.s32.totalorder %s18, 0
    %p172 = por %p170, %p171
    %p173 = scmp.ne.s32.totalorder %s159, %s160
    %p174 = scmp.eq.s32.totalorder %s19, 3
    %p175 = por %p173, %p174
    %p177 = scmp.ne.s32.totalorder %s160, %s176
    %p178 = scmp.eq.s32.totalorder %s19, 0
    %p179 = por %p177, %p178
    %s180 = smul.u32 %s20, 2
    %s181 = sadd.s32 %s180, %s21
    %s182 = smul.u32 %s32, 2
    %s183 = sadd.s32 %s182, %s28
    %s184 = ssub.s32 %s181, %s183
    %p185 = scmp.eq.s32.totalorder %s184, 0
    %s187 = sadd.s32 %s186, 1
    %s188 = scalar_select %p185, %s186, %s187
    %p191 = pneg %p185
    %p192 = scmp.eq.s32.totalorder %s13, 3
    %p193 = por %p191, %p192
    %p194 = scmp.ne.s32.totalorder %s186, %s189
    %p195 = scmp.eq.s32.totalorder %s13, 0
    %p196 = por %p194, %p195
    %p197 = scmp.ne.s32.totalorder %s186, %s189
    %p198 = scmp.eq.s32.totalorder %s18, 3
    %p199 = por %p197, %p198
    %p200 = scmp.ne.s32.totalorder %s189, %s190
    %p201 = scmp.eq.s32.totalorder %s18, 0
    %p202 = por %p200, %p201
    %p203 = scmp.ne.s32.totalorder %s189, %s190
    %p204 = scmp.eq.s32.totalorder %s19, 3
    %p205 = por %p203, %p204
    %p207 = scmp.ne.s32.totalorder %s190, %s206
    %p208 = scmp.eq.s32.totalorder %s19, 0
    %p209 = por %p207, %p208
    %p210 = scmp.le.s32.totalorder 1, %s13
    %p211 = scmp.lt.s32.totalorder %s13, 5
    %p212 = pnand %p210, %p211
    %p213 = pneg %p212
    // Predicated region
    $region9: #{bottleneck_forward.5} parent=5 // pred_check
      _
    $region10: #{bottleneck_forward.5} parent=5 // pred_check_branch
      %215 = sbr.rel (%p212) target = $region12
    $region11: #{bottleneck_forward.5} parent=5 // pred_region
      %s216 = ssub.s32 %s13, 1
      // Predicated region
      $region13: #{bottleneck_forward.5} parent=11 // pred_check
        %p217 = pneg %p72
      $region14: #{bottleneck_forward.5} parent=11 // pred_check_branch
        %219 = sbr.rel (%p217) target = $region16
      $region15: #{bottleneck_forward.5} parent=11 // pred_region
        _
      $region16: #{bottleneck_forward.5} parent=11 // pred_fallthru
        _
      // Predicated region
      $region17: #{bottleneck_forward.5} parent=11 // pred_check
        %p220 = pneg %p93
      $region18: #{bottleneck_forward.5} parent=11 // pred_check_branch
        %222 = sbr.rel (%p220) target = $region20
      $region19: #{bottleneck_forward.5} parent=11 // pred_region
        _
      $region20: #{bottleneck_forward.5} parent=11 // pred_fallthru
        _
      // Predicated region
      $region21: #{bottleneck_forward.5} parent=11 // pred_check
        %p223 = pneg %p114
      $region22: #{bottleneck_forward.5} parent=11 // pred_check_branch
        %225 = sbr.rel (%p223) target = $region24
      $region23: #{bottleneck_forward.5} parent=11 // pred_region
        _
      $region24: #{bottleneck_forward.5} parent=11 // pred_fallthru
        _
    $region12: #{bottleneck_forward.5} parent=5 // pred_fallthru
      _
    %p226 = scmp.lt.s32.totalorder %s13, 4
    // Predicated region
    $region25: #{bottleneck_forward.5} parent=5 // pred_check
      %p227 = pneg %p226
    $region26: #{bottleneck_forward.5} parent=5 // pred_check_branch
      %229 = sbr.rel (%p227) target = $region28
    $region27: #{bottleneck_forward.5} parent=5 // pred_region
      // Predicated region
      $region29: #{bottleneck_forward.5} parent=27 // pred_check
        %p230 = pneg %p45
      $region30: #{bottleneck_forward.5} parent=27 // pred_check_branch
        %232 = sbr.rel (%p230) target = $region32
      $region31: #{bottleneck_forward.5} parent=27 // pred_region
        %p233 = scmp.lt.s32.totalorder %s20, 1
        %s234 = scalar_select %p233, %s20, 1
        %s235 = smul.addr %s234, 54
        %s236 = smul.addr %s235, 8
        %s237 = scalar_lea.vmem %s0, %s236
      $region32: #{bottleneck_forward.5} parent=27 // pred_fallthru
        _
    $region28: #{bottleneck_forward.5} parent=5 // pred_fallthru
      _
    %p238 = scmp.le.s32.totalorder 1, %s13
    %p239 = scmp.lt.s32.totalorder %s13, 5
    %p240 = pnand %p238, %p239
    %p241 = pneg %p240
    // Predicated region
    $region33: #{bottleneck_forward.5} parent=5 // pred_check
      _
    $region34: #{bottleneck_forward.5} parent=5 // pred_check_branch
      %243 = sbr.rel (%p240) target = $region36
    $region35: #{bottleneck_forward.5} parent=5 // pred_region
      %s244 = ssub.s32 %s13, 1
      %p245 = scmp.lt.s32.totalorder %s22, 1
      %s246 = scalar_select %p245, %s22, 1
      %s247 = smul.addr %s246, 54
      %s248 = smul.addr %s247, 8
      %s249 = scalar_lea.vmem %s0, %s248
      %p250 = pneg %p51
      %p251 = pneg %p48
      %p252 = pneg %p72
      %p253 = pneg %p69
      %p254 = pneg %p93
      %p255 = pneg %p90
      %p256 = pneg %p114
      %p257 = pneg %p111
      %p258 = pneg %p142
      %p259 = pneg %p139
      %s260 = smul.u32 16, %s23
      %p261 = scmp.lt.s32.totalorder %s22, 1
      %s262 = scalar_select %p261, %s22, 1
      %p263 = scmp.lt.s32.totalorder %s260, 31
      %s264 = scalar_select %p263, %s260, 31
      %s265 = smul.addr %s262, 32
      %s266 = sadd.s32 %s264, %s265
      %s267 = smul.addr %s266, 8
      %s268 = scalar_lea.vmem %s4, %s267
      %p269 = pneg %p172
      %p270 = pneg %p169
      %s271 = smul.u32 %s22, 2
      %s272 = sadd.s32 %s271, %s23
      %p273 = scmp.lt.s32.totalorder %s272, 3
      %s274 = scalar_select %p273, %s272, 3
      %s275 = smul.addr %s274, 8
      %s276 = scalar_lea.vmem %s5, %s275
      %p277 = pneg %p202
      %p278 = pneg %p199
      %s279 = smul.u32 %s22, 2
      %s280 = sadd.s32 %s279, %s23
      %p281 = scmp.lt.s32.totalorder %s280, 3
      %s282 = scalar_select %p281, %s280, 3
      %s283 = smul.addr %s282, 8
      %s284 = scalar_lea.vmem %s6, %s283
      %p285 = scmp.lt.s32.totalorder %s22, 1
      %s286 = scalar_select %p285, %s22, 1
      %s287 = smul.addr %s286, 54
      %s288 = smul.addr %s287, 8
      %s289 = scalar_lea.vmem %s0, %s288
      %s290 = smul.u32 16, %s23
      %p291 = scmp.lt.s32.totalorder %s22, 1
      %s292 = scalar_select %p291, %s22, 1
      %p293 = scmp.lt.s32.totalorder %s290, 31
      %s294 = scalar_select %p293, %s290, 31
      %s295 = smul.addr %s292, 32
      %s296 = sadd.s32 %s294, %s295
      %s297 = smul.addr %s296, 8
      %s298 = scalar_lea.vmem %s4, %s297
      %s299 = smul.u32 16, %s23
      %s300 = smul.u32 %s22, 2
      %s301 = sadd.s32 %s300, %s23
      %p302 = scmp.lt.s32.totalorder %s301, 3
      %s303 = scalar_select %p302, %s301, 3
      %s304 = smul.addr %s303, 8
      %s305 = scalar_lea.vmem %s5, %s304
      %s306 = smul.u32 %s22, 2
      %s307 = sadd.s32 %s306, %s23
      %s308 = smul.u32 %s22, 2
      %s309 = sadd.s32 %s308, %s23
      %p310 = scmp.lt.s32.totalorder %s309, 3
      %s311 = scalar_select %p310, %s309, 3
      %s312 = smul.addr %s311, 8
      %s313 = scalar_lea.vmem %s6, %s312
      %s314 = smul.u32 %s22, 2
      %s315 = sadd.s32 %s314, %s23
      %s316 = smul.u32 %s23, 8
      %s317 = smul.u32 %s316, 24
      %s318 = scalar_lea.vmem %s289, %s317
      %v319 = vld [vmem:[%s318] sm:$0xff]
      %v320 = vld [vmem:[%s318 + $0x8] sm:$0xff]
      %v321 = vld [vmem:[%s318 + $0x10] sm:$0x3]
      %v322 = vld [vmem:[%s318 + $0x18] sm:$0xff]
      %v323 = vld [vmem:[%s318 + $0x20] sm:$0xff]
      %v324 = vld [vmem:[%s318 + $0x28] sm:$0x3]
      %v325 = vld [vmem:[%s318 + $0x30] sm:$0xff]
      %v326 = vld [vmem:[%s318 + $0x38] sm:$0xff]
      %v327 = vld [vmem:[%s318 + $0x40] sm:$0x3]
      %v328 = vld [vmem:[%s318 + $0x48] sm:$0xff]
      %v329 = vld [vmem:[%s318 + $0x50] sm:$0xff]
      %v330 = vld [vmem:[%s318 + $0x58] sm:$0x3]
      %v331 = vld [vmem:[%s318 + $0x60] sm:$0xff]
      %v332 = vld [vmem:[%s318 + $0x68] sm:$0xff]
      %v333 = vld [vmem:[%s318 + $0x70] sm:$0x3]
      %v334 = vld [vmem:[%s318 + $0x78] sm:$0xff]
      %v335 = vld [vmem:[%s318 + $0x80] sm:$0xff]
      %v336 = vld [vmem:[%s318 + $0x88] sm:$0x3]
      %v337 = vld [vmem:[%s318 + $0x90] sm:$0xff]
      %v338 = vld [vmem:[%s318 + $0x98] sm:$0xff]
      %v339 = vld [vmem:[%s318 + $0xa0] sm:$0x3]
      %v340 = vld [vmem:[%s318 + $0xa8] sm:$0xff]
      %v341 = vld [vmem:[%s318 + $0xb0] sm:$0xff]
      %v342 = vld [vmem:[%s318 + $0xb8] sm:$0x3]
      %v343 = vld [vmem:[%s318 + $0xc0] sm:$0xff]
      %v344 = vld [vmem:[%s318 + $0xc8] sm:$0xff]
      %v345 = vld [vmem:[%s318 + $0xd0] sm:$0x3]
      %v346 = vld [vmem:[%s318 + $0xd8] sm:$0xff]
      %v347 = vld [vmem:[%s318 + $0xe0] sm:$0xff]
      %v348 = vld [vmem:[%s318 + $0xe8] sm:$0x3]
      %v349 = vld [vmem:[%s2] sm:$0x1]
      %v351 = vperm.slane %v349, 0
      %v353 = vmul.f32 %v319, %v351
      %v354 = vmul.f32 %v320, %v351
      %v355 = vmul.f32 %v321, %v351
      %v356 = vmul.f32 %v322, %v351
      %v357 = vmul.f32 %v323, %v351
      %v358 = vmul.f32 %v324, %v351
      %v359 = vmul.f32 %v325, %v351
      %v360 = vmul.f32 %v326, %v351
      %v361 = vmul.f32 %v327, %v351
      %v362 = vmul.f32 %v328, %v351
      %v363 = vmul.f32 %v329, %v351
      %v364 = vmul.f32 %v330, %v351
      %v365 = vmul.f32 %v331, %v351
      %v366 = vmul.f32 %v332, %v351
      %v367 = vmul.f32 %v333, %v351
      %v368 = vmul.f32 %v334, %v351
      %v369 = vmul.f32 %v335, %v351
      %v370 = vmul.f32 %v336, %v351
      %v371 = vmul.f32 %v337, %v351
      %v372 = vmul.f32 %v338, %v351
      %v373 = vmul.f32 %v339, %v351
      %v374 = vmul.f32 %v340, %v351
      %v375 = vmul.f32 %v341, %v351
      %v376 = vmul.f32 %v342, %v351
      %v377 = vmul.f32 %v343, %v351
      %v378 = vmul.f32 %v344, %v351
      %v379 = vmul.f32 %v345, %v351
      %v380 = vmul.f32 %v346, %v351
      %v381 = vmul.f32 %v347, %v351
      %v382 = vmul.f32 %v348, %v351
      %v383 = vld [vmem:[%s3] sm:$0x1]
      %v385 = vperm.slane %v383, 0
      %v387 = vadd.f32 %v353, %v385
      %v388 = vadd.f32 %v354, %v385
      %v389 = vadd.f32 %v355, %v385
      %v390 = vadd.f32 %v356, %v385
      %v391 = vadd.f32 %v357, %v385
      %v392 = vadd.f32 %v358, %v385
      %v393 = vadd.f32 %v359, %v385
      %v394 = vadd.f32 %v360, %v385
      %v395 = vadd.f32 %v361, %v385
      %v396 = vadd.f32 %v362, %v385
      %v397 = vadd.f32 %v363, %v385
      %v398 = vadd.f32 %v364, %v385
      %v399 = vadd.f32 %v365, %v385
      %v400 = vadd.f32 %v366, %v385
      %v401 = vadd.f32 %v367, %v385
      %v402 = vadd.f32 %v368, %v385
      %v403 = vadd.f32 %v369, %v385
      %v404 = vadd.f32 %v370, %v385
      %v405 = vadd.f32 %v371, %v385
      %v406 = vadd.f32 %v372, %v385
      %v407 = vadd.f32 %v373, %v385
      %v408 = vadd.f32 %v374, %v385
      %v409 = vadd.f32 %v375, %v385
      %v410 = vadd.f32 %v376, %v385
      %v411 = vadd.f32 %v377, %v385
      %v412 = vadd.f32 %v378, %v385
      %v413 = vadd.f32 %v379, %v385
      %v414 = vadd.f32 %v380, %v385
      %v415 = vadd.f32 %v381, %v385
      %v416 = vadd.f32 %v382, %v385
      %v417 = vmax.f32 %v387, 0.0
      %v418 = vmax.f32 %v388, 0.0
      %v419 = vmax.f32 %v389, 0.0
      %v420 = vmax.f32 %v390, 0.0
      %v421 = vmax.f32 %v391, 0.0
      %v422 = vmax.f32 %v392, 0.0
      %v423 = vmax.f32 %v393, 0.0
      %v424 = vmax.f32 %v394, 0.0
      %v425 = vmax.f32 %v395, 0.0
      %v426 = vmax.f32 %v396, 0.0
      %v427 = vmax.f32 %v397, 0.0
      %v428 = vmax.f32 %v398, 0.0
      %v429 = vmax.f32 %v399, 0.0
      %v430 = vmax.f32 %v400, 0.0
      %v431 = vmax.f32 %v401, 0.0
      %v432 = vmax.f32 %v402, 0.0
      %v433 = vmax.f32 %v403, 0.0
      %v434 = vmax.f32 %v404, 0.0
      %v435 = vmax.f32 %v405, 0.0
      %v436 = vmax.f32 %v406, 0.0
      %v437 = vmax.f32 %v407, 0.0
      %v438 = vmax.f32 %v408, 0.0
      %v439 = vmax.f32 %v409, 0.0
      %v440 = vmax.f32 %v410, 0.0
      %v441 = vmax.f32 %v411, 0.0
      %v442 = vmax.f32 %v412, 0.0
      %v443 = vmax.f32 %v413, 0.0
      %v444 = vmax.f32 %v414, 0.0
      %v445 = vmax.f32 %v415, 0.0
      %v446 = vmax.f32 %v416, 0.0
      %v447 = vstv %s316
      %v448 = vadd.s32 %v447, 1
      %v449 = vadd.s32 %v447, 2
      %v450 = vadd.s32 %v447, 3
      %v451 = vadd.s32 %v447, 4
      %v452 = vadd.s32 %v447, 5
      %v453 = vadd.s32 %v447, 6
      %v454 = vadd.s32 %v447, 7
      %v455 = vadd.s32 %v447, 8
      %v456 = vadd.s32 %v447, 9
      %v457 = vlaneseq
      %v458 = vshrl.u32 %v457, 7
      %v459 = vadd.s32 %v458, 8
      %v460 = vadd.s32 %v458, 16
      %vm461 = vcmp.eq.s32.totalorder %v458, 0
      %vm462 = vcmp.eq.s32.totalorder %v459, 0
      %vm463 = vcmp.eq.s32.totalorder %v460, 0
      %vm464 = vcmp.ge.s32.totalorder %v458, 17
      %vm465 = vcmp.ge.s32.totalorder %v459, 17
      %vm466 = vcmp.ge.s32.totalorder %v460, 17
      %vm467 = vmor %vm461, %vm464
      %vm468 = vmor %vm462, %vm465
      %vm469 = vmor %vm463, %vm466
      %vm470 = vcmp.eq.s32.totalorder %v447, 0
      %vm471 = vcmp.eq.s32.totalorder %v448, 0
      %vm472 = vcmp.eq.s32.totalorder %v449, 0
      %vm473 = vcmp.eq.s32.totalorder %v450, 0
      %vm474 = vcmp.eq.s32.totalorder %v451, 0
      %vm475 = vcmp.eq.s32.totalorder %v452, 0
      %vm476 = vcmp.eq.s32.totalorder %v453, 0
      %vm477 = vcmp.eq.s32.totalorder %v454, 0
      %vm478 = vcmp.eq.s32.totalorder %v455, 0
      %vm479 = vcmp.eq.s32.totalorder %v456, 0
      %vm480 = vmor %vm467, %vm470
      %vm481 = vmor %vm468, %vm470
      %vm482 = vmor %vm469, %vm470
      %vm483 = vmor %vm467, %vm471
      %vm484 = vmor %vm468, %vm471
      %vm485 = vmor %vm469, %vm471
      %vm486 = vmor %vm467, %vm472
      %vm487 = vmor %vm468, %vm472
      %vm488 = vmor %vm469, %vm472
      %vm489 = vmor %vm467, %vm473
      %vm490 = vmor %vm468, %vm473
      %vm491 = vmor %vm469, %vm473
      %vm492 = vmor %vm467, %vm474
      %vm493 = vmor %vm468, %vm474
      %vm494 = vmor %vm469, %vm474
      %vm495 = vmor %vm467, %vm475
      %vm496 = vmor %vm468, %vm475
      %vm497 = vmor %vm469, %vm475
      %vm498 = vmor %vm467, %vm476
      %vm499 = vmor %vm468, %vm476
      %vm500 = vmor %vm469, %vm476
      %vm501 = vmor %vm467, %vm477
      %vm502 = vmor %vm468, %vm477
      %vm503 = vmor %vm469, %vm477
      %vm504 = vmor %vm467, %vm478
      %vm505 = vmor %vm468, %vm478
      %vm506 = vmor %vm469, %vm478
      %vm507 = vmor %vm467, %vm479
      %vm508 = vmor %vm468, %vm479
      %vm509 = vmor %vm469, %vm479
      %vm510 = vcmp.ge.s32.totalorder %v447, 17
      %vm511 = vcmp.ge.s32.totalorder %v448, 17
      %vm512 = vcmp.ge.s32.totalorder %v449, 17
      %vm513 = vcmp.ge.s32.totalorder %v450, 17
      %vm514 = vcmp.ge.s32.totalorder %v451, 17
      %vm515 = vcmp.ge.s32.totalorder %v452, 17
      %vm516 = vcmp.ge.s32.totalorder %v453, 17
      %vm517 = vcmp.ge.s32.totalorder %v454, 17
      %vm518 = vcmp.ge.s32.totalorder %v455, 17
      %vm519 = vcmp.ge.s32.totalorder %v456, 17
      %vm520 = vmor %vm480, %vm510
      %vm521 = vmor %vm481, %vm510
      %vm522 = vmor %vm482, %vm510
      %vm523 = vmor %vm483, %vm511
      %vm524 = vmor %vm484, %vm511
      %vm525 = vmor %vm485, %vm511
      %vm526 = vmor %vm486, %vm512
      %vm527 = vmor %vm487, %vm512
      %vm528 = vmor %vm488, %vm512
      %vm529 = vmor %vm489, %vm513
      %vm530 = vmor %vm490, %vm513
      %vm531 = vmor %vm491, %vm513
      %vm532 = vmor %vm492, %vm514
      %vm533 = vmor %vm493, %vm514
      %vm534 = vmor %vm494, %vm514
      %vm535 = vmor %vm495, %vm515
      %vm536 = vmor %vm496, %vm515
      %vm537 = vmor %vm497, %vm515
      %vm538 = vmor %vm498, %vm516
      %vm539 = vmor %vm499, %vm516
      %vm540 = vmor %vm500, %vm516
      %vm541 = vmor %vm501, %vm517
      %vm542 = vmor %vm502, %vm517
      %vm543 = vmor %vm503, %vm517
      %vm544 = vmor %vm504, %vm518
      %vm545 = vmor %vm505, %vm518
      %vm546 = vmor %vm506, %vm518
      %vm547 = vmor %vm507, %vm519
      %vm548 = vmor %vm508, %vm519
      %vm549 = vmor %vm509, %vm519
      %v550 = vsel %vm520, 0.0, %v417
      %v551 = vsel %vm521, 0.0, %v418
      %v552 = vsel %vm522, 0.0, %v419
      %v553 = vsel %vm523, 0.0, %v420
      %v554 = vsel %vm524, 0.0, %v421
      %v555 = vsel %vm525, 0.0, %v422
      %v556 = vsel %vm526, 0.0, %v423
      %v557 = vsel %vm527, 0.0, %v424
      %v558 = vsel %vm528, 0.0, %v425
      %v559 = vsel %vm529, 0.0, %v426
      %v560 = vsel %vm530, 0.0, %v427
      %v561 = vsel %vm531, 0.0, %v428
      %v562 = vsel %vm532, 0.0, %v429
      %v563 = vsel %vm533, 0.0, %v430
      %v564 = vsel %vm534, 0.0, %v431
      %v565 = vsel %vm535, 0.0, %v432
      %v566 = vsel %vm536, 0.0, %v433
      %v567 = vsel %vm537, 0.0, %v434
      %v568 = vsel %vm538, 0.0, %v435
      %v569 = vsel %vm539, 0.0, %v436
      %v570 = vsel %vm540, 0.0, %v437
      %v571 = vsel %vm541, 0.0, %v438
      %v572 = vsel %vm542, 0.0, %v439
      %v573 = vsel %vm543, 0.0, %v440
      %v574 = vsel %vm544, 0.0, %v441
      %v575 = vsel %vm545, 0.0, %v442
      %v576 = vsel %vm546, 0.0, %v443
      %v577 = vsel %vm547, 0.0, %v444
      %v578 = vsel %vm548, 0.0, %v445
      %v579 = vsel %vm549, 0.0, %v446
      %vm610 = vcmask 1046528
      %v611 = vrot.slane %v550, 1
      %v612 = vrot.slane %v551, 1
      %v613 = vsel %vm610, %v611, %v612
      %v614 = vrot.slane %v552, 1
      %v615 = vsel %vm610, %v612, %v614
      %v616 = vrot.slane %v553, 1
      %v617 = vrot.slane %v554, 1
      %v618 = vsel %vm610, %v616, %v617
      %v619 = vrot.slane %v555, 1
      %v620 = vsel %vm610, %v617, %v619
      %v621 = vrot.slane %v556, 1
      %v622 = vrot.slane %v557, 1
      %v623 = vsel %vm610, %v621, %v622
      %v624 = vrot.slane %v558, 1
      %v625 = vsel %vm610, %v622, %v624
      %v626 = vrot.slane %v559, 1
      %v627 = vrot.slane %v560, 1
      %v628 = vsel %vm610, %v626, %v627
      %v629 = vrot.slane %v561, 1
      %v630 = vsel %vm610, %v627, %v629
      %v631 = vrot.slane %v562, 1
      %v632 = vrot.slane %v563, 1
      %v633 = vsel %vm610, %v631, %v632
      %v634 = vrot.slane %v564, 1
      %v635 = vsel %vm610, %v632, %v634
      %v636 = vrot.slane %v565, 1
      %v637 = vrot.slane %v566, 1
      %v638 = vsel %vm610, %v636, %v637
      %v639 = vrot.slane %v567, 1
      %v640 = vsel %vm610, %v637, %v639
      %v641 = vrot.slane %v568, 1
      %v642 = vrot.slane %v569, 1
      %v643 = vsel %vm610, %v641, %v642
      %v644 = vrot.slane %v570, 1
      %v645 = vsel %vm610, %v642, %v644
      %v646 = vrot.slane %v571, 1
      %v647 = vrot.slane %v572, 1
      %v648 = vsel %vm610, %v646, %v647
      %v649 = vrot.slane %v573, 1
      %v650 = vsel %vm610, %v647, %v649
      %v651 = vrot.slane %v574, 1
      %v652 = vrot.slane %v575, 1
      %v653 = vsel %vm610, %v651, %v652
      %v654 = vrot.slane %v576, 1
      %v655 = vsel %vm610, %v652, %v654
      %v656 = vrot.slane %v577, 1
      %v657 = vrot.slane %v578, 1
      %v658 = vsel %vm610, %v656, %v657
      %v659 = vrot.slane %v579, 1
      %v660 = vsel %vm610, %v657, %v659
      %vm681 = vcmask 1045504
      %v682 = vrot.slane %v550, 2
      %v683 = vrot.slane %v551, 2
      %v684 = vsel %vm681, %v682, %v683
      %v685 = vrot.slane %v552, 2
      %v686 = vsel %vm681, %v683, %v685
      %v687 = vrot.slane %v553, 2
      %v688 = vrot.slane %v554, 2
      %v689 = vsel %vm681, %v687, %v688
      %v690 = vrot.slane %v555, 2
      %v691 = vsel %vm681, %v688, %v690
      %v692 = vrot.slane %v556, 2
      %v693 = vrot.slane %v557, 2
      %v694 = vsel %vm681, %v692, %v693
      %v695 = vrot.slane %v558, 2
      %v696 = vsel %vm681, %v693, %v695
      %v697 = vrot.slane %v559, 2
      %v698 = vrot.slane %v560, 2
      %v699 = vsel %vm681, %v697, %v698
      %v700 = vrot.slane %v561, 2
      %v701 = vsel %vm681, %v698, %v700
      %v702 = vrot.slane %v562, 2
      %v703 = vrot.slane %v563, 2
      %v704 = vsel %vm681, %v702, %v703
      %v705 = vrot.slane %v564, 2
      %v706 = vsel %vm681, %v703, %v705
      %v707 = vrot.slane %v565, 2
      %v708 = vrot.slane %v566, 2
      %v709 = vsel %vm681, %v707, %v708
      %v710 = vrot.slane %v567, 2
      %v711 = vsel %vm681, %v708, %v710
      %v712 = vrot.slane %v568, 2
      %v713 = vrot.slane %v569, 2
      %v714 = vsel %vm681, %v712, %v713
      %v715 = vrot.slane %v570, 2
      %v716 = vsel %vm681, %v713, %v715
      %v717 = vrot.slane %v571, 2
      %v718 = vrot.slane %v572, 2
      %v719 = vsel %vm681, %v717, %v718
      %v720 = vrot.slane %v573, 2
      %v721 = vsel %vm681, %v718, %v720
      %v722 = vrot.slane %v574, 2
      %v723 = vrot.slane %v575, 2
      %v724 = vsel %vm681, %v722, %v723
      %v725 = vrot.slane %v576, 2
      %v726 = vsel %vm681, %v723, %v725
      %v727 = vrot.slane %v577, 2
      %v728 = vrot.slane %v578, 2
      %v729 = vsel %vm681, %v727, %v728
      %v730 = vrot.slane %v579, 2
      %v731 = vsel %vm681, %v728, %v730
      %v752 = vld [vmem:[%s1] sm:$0xff]
      %v753 = vld [vmem:[%s1 + $0x8] sm:$0xff]
      %v754 = vld [vmem:[%s1 + $0x10] sm:$0xff]
      %v755 = vld [vmem:[%s1 + $0x18] sm:$0xff]
      %v756 = vld [vmem:[%s1 + $0x20] sm:$0xff]
      %v757 = vld [vmem:[%s1 + $0x28] sm:$0xff]
      %v758 = vld [vmem:[%s1 + $0x30] sm:$0xff]
      %v759 = vld [vmem:[%s1 + $0x38] sm:$0xff]
      %v760 = vld [vmem:[%s1 + $0x40] sm:$0xff]
      %v761 = vld [vmem:[%s1 + $0x48] sm:$0xff]
      %v762 = vld [vmem:[%s1 + $0x50] sm:$0xff]
      %v763 = vld [vmem:[%s1 + $0x58] sm:$0xff]
      %v764 = vld [vmem:[%s1 + $0x60] sm:$0xff]
      %v765 = vld [vmem:[%s1 + $0x68] sm:$0xff]
      %v766 = vld [vmem:[%s1 + $0x70] sm:$0xff]
      %v767 = vld [vmem:[%s1 + $0x78] sm:$0xff]
      %v768 = vld [vmem:[%s1 + $0x80] sm:$0xff]
      %v769 = vld [vmem:[%s1 + $0x88] sm:$0xff]
      %v770 = vld [vmem:[%s1 + $0x90] sm:$0xff]
      %v771 = vld [vmem:[%s1 + $0x98] sm:$0xff]
      %v772 = vld [vmem:[%s1 + $0xa0] sm:$0xff]
      %v773 = vld [vmem:[%s1 + $0xa8] sm:$0xff]
      %v774 = vld [vmem:[%s1 + $0xb0] sm:$0xff]
      %v775 = vld [vmem:[%s1 + $0xb8] sm:$0xff]
      %v776 = vld [vmem:[%s1 + $0xc0] sm:$0xff]
      %v777 = vld [vmem:[%s1 + $0xc8] sm:$0xff]
      %v778 = vld [vmem:[%s1 + $0xd0] sm:$0xff]
      %v779 = vld [vmem:[%s1 + $0xd8] sm:$0xff]
      %v780 = vld [vmem:[%s1 + $0xe0] sm:$0xff]
      %v781 = vld [vmem:[%s1 + $0xe8] sm:$0xff]
      %v782 = vld [vmem:[%s1 + $0xf0] sm:$0xff]
      %v783 = vld [vmem:[%s1 + $0xf8] sm:$0xff]
      %v784 = vld [vmem:[%s1 + $0x100] sm:$0xff]
      %v785 = vld [vmem:[%s1 + $0x108] sm:$0xff]
      %v786 = vld [vmem:[%s1 + $0x110] sm:$0xff]
      %v787 = vld [vmem:[%s1 + $0x118] sm:$0xff]
      %v788 = vld [vmem:[%s1 + $0x120] sm:$0xff]
      %v789 = vld [vmem:[%s1 + $0x128] sm:$0xff]
      %v790 = vld [vmem:[%s1 + $0x130] sm:$0xff]
      %v791 = vld [vmem:[%s1 + $0x138] sm:$0xff]
      %v792 = vld [vmem:[%s1 + $0x140] sm:$0xff]
      %v793 = vld [vmem:[%s1 + $0x148] sm:$0xff]
      %v794 = vld [vmem:[%s1 + $0x150] sm:$0xff]
      %v795 = vld [vmem:[%s1 + $0x158] sm:$0xff]
      %v796 = vld [vmem:[%s1 + $0x160] sm:$0xff]
      %v797 = vld [vmem:[%s1 + $0x168] sm:$0xff]
      %v798 = vld [vmem:[%s1 + $0x170] sm:$0xff]
      %v799 = vld [vmem:[%s1 + $0x178] sm:$0xff]
      %800 = vmatpush.msra.mxu0 %v767
      %801 = vmatpush.msra.mxu0 %v766
      %802 = vmatpush.msra.mxu0 %v765
      %803 = vmatpush.msra.mxu0 %v764
      %804 = vmatpush.msra.mxu0 %v763
      %805 = vmatpush.msra.mxu0 %v762
      %806 = vmatpush.msra.mxu0 %v761
      %807 = vmatpush.msra.mxu0 %v760
      %808 = vmatpush.msra.mxu0 %v759
      %809 = vmatpush.msra.mxu0 %v758
      %810 = vmatpush.msra.mxu0 %v757
      %811 = vmatpush.msra.mxu0 %v756
      %812 = vmatpush.msra.mxu0 %v755
      %813 = vmatpush.msra.mxu0 %v754
      %814 = vmatpush.msra.mxu0 %v753
      %815 = vmatpush.msra.mxu0 %v752
      %816 = vmatmul.f32.gmra.mxu0 %v550
      %v817 = vpop.f32.mrf.mxu0
      %v818 = vadd.f32 0.0, %v817
      %819 = vmatmul.f32.gmra.mxu0 %v551
      %v820 = vpop.f32.mrf.mxu0
      %v821 = vadd.f32 0.0, %v820
      %822 = vmatmul.f32.gmra.mxu0 %v553
      %v823 = vpop.f32.mrf.mxu0
      %v824 = vadd.f32 0.0, %v823
      %825 = vmatmul.f32.gmra.mxu0 %v554
      %v826 = vpop.f32.mrf.mxu0
      %v827 = vadd.f32 0.0, %v826
      %828 = vmatmul.f32.gmra.mxu0 %v556
      %v829 = vpop.f32.mrf.mxu0
      %v830 = vadd.f32 0.0, %v829
      %831 = vmatmul.f32.gmra.mxu0 %v557
      %v832 = vpop.f32.mrf.mxu0
      %v833 = vadd.f32 0.0, %v832
      %834 = vmatmul.f32.gmra.mxu0 %v559
      %v835 = vpop.f32.mrf.mxu0
      %v836 = vadd.f32 0.0, %v835
      %837 = vmatmul.f32.gmra.mxu0 %v560
      %v838 = vpop.f32.mrf.mxu0
      %v839 = vadd.f32 0.0, %v838
      %840 = vmatmul.f32.gmra.mxu0 %v562
      %v841 = vpop.f32.mrf.mxu0
      %v842 = vadd.f32 0.0, %v841
      %843 = vmatmul.f32.gmra.mxu0 %v563
      %v844 = vpop.f32.mrf.mxu0
      %v845 = vadd.f32 0.0, %v844
      %846 = vmatmul.f32.gmra.mxu0 %v565
      %v847 = vpop.f32.mrf.mxu0
      %v848 = vadd.f32 0.0, %v847
      %849 = vmatmul.f32.gmra.mxu0 %v566
      %v850 = vpop.f32.mrf.mxu0
      %v851 = vadd.f32 0.0, %v850
      %852 = vmatmul.f32.gmra.mxu0 %v568
      %v853 = vpop.f32.mrf.mxu0
      %v854 = vadd.f32 0.0, %v853
      %855 = vmatmul.f32.gmra.mxu0 %v569
      %v856 = vpop.f32.mrf.mxu0
      %v857 = vadd.f32 0.0, %v856
      %858 = vmatmul.f32.gmra.mxu0 %v571
      %v859 = vpop.f32.mrf.mxu0
      %v860 = vadd.f32 0.0, %v859
      %861 = vmatmul.f32.gmra.mxu0 %v572
      %v862 = vpop.f32.mrf.mxu0
      %v863 = vadd.f32 0.0, %v862
      %864 = vdwg.mxu0
      %865 = vmatpush.msra.mxu0 %v783
      %866 = vmatpush.msra.mxu0 %v782
      %867 = vmatpush.msra.mxu0 %v781
      %868 = vmatpush.msra.mxu0 %v780
      %869 = vmatpush.msra.mxu0 %v779
      %870 = vmatpush.msra.mxu0 %v778
      %871 = vmatpush.msra.mxu0 %v777
      %872 = vmatpush.msra.mxu0 %v776
      %873 = vmatpush.msra.mxu0 %v775
      %874 = vmatpush.msra.mxu0 %v774
      %875 = vmatpush.msra.mxu0 %v773
      %876 = vmatpush.msra.mxu0 %v772
      %877 = vmatpush.msra.mxu0 %v771
      %878 = vmatpush.msra.mxu0 %v770
      %879 = vmatpush.msra.mxu0 %v769
      %880 = vmatpush.msra.mxu0 %v768
      %881 = vmatmul.f32.gmra.mxu0 %v613
      %v882 = vpop.f32.mrf.mxu0
      %v883 = vadd.f32 %v818, %v882
      %884 = vmatmul.f32.gmra.mxu0 %v615
      %v885 = vpop.f32.mrf.mxu0
      %v886 = vadd.f32 %v821, %v885
      %887 = vmatmul.f32.gmra.mxu0 %v618
      %v888 = vpop.f32.mrf.mxu0
      %v889 = vadd.f32 %v824, %v888
      %890 = vmatmul.f32.gmra.mxu0 %v620
      %v891 = vpop.f32.mrf.mxu0
      %v892 = vadd.f32 %v827, %v891
      %893 = vmatmul.f32.gmra.mxu0 %v623
      %v894 = vpop.f32.mrf.mxu0
      %v895 = vadd.f32 %v830, %v894
      %896 = vmatmul.f32.gmra.mxu0 %v625
      %v897 = vpop.f32.mrf.mxu0
      %v898 = vadd.f32 %v833, %v897
      %899 = vmatmul.f32.gmra.mxu0 %v628
      %v900 = vpop.f32.mrf.mxu0
      %v901 = vadd.f32 %v836, %v900
      %902 = vmatmul.f32.gmra.mxu0 %v630
      %v903 = vpop.f32.mrf.mxu0
      %v904 = vadd.f32 %v839, %v903
      %905 = vmatmul.f32.gmra.mxu0 %v633
      %v906 = vpop.f32.mrf.mxu0
      %v907 = vadd.f32 %v842, %v906
      %908 = vmatmul.f32.gmra.mxu0 %v635
      %v909 = vpop.f32.mrf.mxu0
      %v910 = vadd.f32 %v845, %v909
      %911 = vmatmul.f32.gmra.mxu0 %v638
      %v912 = vpop.f32.mrf.mxu0
      %v913 = vadd.f32 %v848, %v912
      %914 = vmatmul.f32.gmra.mxu0 %v640
      %v915 = vpop.f32.mrf.mxu0
      %v916 = vadd.f32 %v851, %v915
      %917 = vmatmul.f32.gmra.mxu0 %v643
      %v918 = vpop.f32.mrf.mxu0
      %v919 = vadd.f32 %v854, %v918
      %920 = vmatmul.f32.gmra.mxu0 %v645
      %v921 = vpop.f32.mrf.mxu0
      %v922 = vadd.f32 %v857, %v921
      %923 = vmatmul.f32.gmra.mxu0 %v648
      %v924 = vpop.f32.mrf.mxu0
      %v925 = vadd.f32 %v860, %v924
      %926 = vmatmul.f32.gmra.mxu0 %v650
      %v927 = vpop.f32.mrf.mxu0
      %v928 = vadd.f32 %v863, %v927
      %929 = vdwg.mxu0
      %930 = vmatpush.msra.mxu0 %v799
      %931 = vmatpush.msra.mxu0 %v798
      %932 = vmatpush.msra.mxu0 %v797
      %933 = vmatpush.msra.mxu0 %v796
      %934 = vmatpush.msra.mxu0 %v795
      %935 = vmatpush.msra.mxu0 %v794
      %936 = vmatpush.msra.mxu0 %v793
      %937 = vmatpush.msra.mxu0 %v792
      %938 = vmatpush.msra.mxu0 %v791
      %939 = vmatpush.msra.mxu0 %v790
      %940 = vmatpush.msra.mxu0 %v789
      %941 = vmatpush.msra.mxu0 %v788
      %942 = vmatpush.msra.mxu0 %v787
      %943 = vmatpush.msra.mxu0 %v786
      %944 = vmatpush.msra.mxu0 %v785
      %945 = vmatpush.msra.mxu0 %v784
      %946 = vmatmul.f32.gmra.mxu0 %v684
      %v947 = vpop.f32.mrf.mxu0
      %v948 = vadd.f32 %v883, %v947
      %949 = vmatmul.f32.gmra.mxu0 %v686
      %v950 = vpop.f32.mrf.mxu0
      %v951 = vadd.f32 %v886, %v950
      %952 = vmatmul.f32.gmra.mxu0 %v689
      %v953 = vpop.f32.mrf.mxu0
      %v954 = vadd.f32 %v889, %v953
      %955 = vmatmul.f32.gmra.mxu0 %v691
      %v956 = vpop.f32.mrf.mxu0
      %v957 = vadd.f32 %v892, %v956
      %958 = vmatmul.f32.gmra.mxu0 %v694
      %v959 = vpop.f32.mrf.mxu0
      %v960 = vadd.f32 %v895, %v959
      %961 = vmatmul.f32.gmra.mxu0 %v696
      %v962 = vpop.f32.mrf.mxu0
      %v963 = vadd.f32 %v898, %v962
      %964 = vmatmul.f32.gmra.mxu0 %v699
      %v965 = vpop.f32.mrf.mxu0
      %v966 = vadd.f32 %v901, %v965
      %967 = vmatmul.f32.gmra.mxu0 %v701
      %v968 = vpop.f32.mrf.mxu0
      %v969 = vadd.f32 %v904, %v968
      %970 = vmatmul.f32.gmra.mxu0 %v704
      %v971 = vpop.f32.mrf.mxu0
      %v972 = vadd.f32 %v907, %v971
      %973 = vmatmul.f32.gmra.mxu0 %v706
      %v974 = vpop.f32.mrf.mxu0
      %v975 = vadd.f32 %v910, %v974
      %976 = vmatmul.f32.gmra.mxu0 %v709
      %v977 = vpop.f32.mrf.mxu0
      %v978 = vadd.f32 %v913, %v977
      %979 = vmatmul.f32.gmra.mxu0 %v711
      %v980 = vpop.f32.mrf.mxu0
      %v981 = vadd.f32 %v916, %v980
      %982 = vmatmul.f32.gmra.mxu0 %v714
      %v983 = vpop.f32.mrf.mxu0
      %v984 = vadd.f32 %v919, %v983
      %985 = vmatmul.f32.gmra.mxu0 %v716
      %v986 = vpop.f32.mrf.mxu0
      %v987 = vadd.f32 %v922, %v986
      %988 = vmatmul.f32.gmra.mxu0 %v719
      %v989 = vpop.f32.mrf.mxu0
      %v990 = vadd.f32 %v925, %v989
      %991 = vmatmul.f32.gmra.mxu0 %v721
      %v992 = vpop.f32.mrf.mxu0
      %v993 = vadd.f32 %v928, %v992
      %994 = vdwg.mxu0
      %995 = vst [vmem:[#allocation2] sm:$0xff] %v948
      %996 = vst [vmem:[#allocation2 + $0x8] sm:$0xff] %v951
      %997 = vst [vmem:[#allocation2 + $0x10] sm:$0xff] %v954
      %998 = vst [vmem:[#allocation2 + $0x18] sm:$0xff] %v957
      %999 = vst [vmem:[#allocation2 + $0x20] sm:$0xff] %v960
      %1000 = vst [vmem:[#allocation2 + $0x28] sm:$0xff] %v963
      %1001 = vst [vmem:[#allocation2 + $0x30] sm:$0xff] %v966
      %1002 = vst [vmem:[#allocation2 + $0x38] sm:$0xff] %v969
      %1003 = vst [vmem:[#allocation2 + $0x40] sm:$0xff] %v972
      %1004 = vst [vmem:[#allocation2 + $0x48] sm:$0xff] %v975
      %1005 = vst [vmem:[#allocation2 + $0x50] sm:$0xff] %v978
      %1006 = vst [vmem:[#allocation2 + $0x58] sm:$0xff] %v981
      %1007 = vst [vmem:[#allocation2 + $0x60] sm:$0xff] %v984
      %1008 = vst [vmem:[#allocation2 + $0x68] sm:$0xff] %v987
      %1009 = vst [vmem:[#allocation2 + $0x70] sm:$0xff] %v990
      %1010 = vst [vmem:[#allocation2 + $0x78] sm:$0xff] %v993
      %s1011 = scalar_lea.vmem %s1, 384
      %v1012 = vld [vmem:[%s1011] sm:$0xff]
      %v1013 = vld [vmem:[%s1011 + $0x8] sm:$0xff]
      %v1014 = vld [vmem:[%s1011 + $0x10] sm:$0xff]
      %v1015 = vld [vmem:[%s1011 + $0x18] sm:$0xff]
      %v1016 = vld [vmem:[%s1011 + $0x20] sm:$0xff]
      %v1017 = vld [vmem:[%s1011 + $0x28] sm:$0xff]
      %v1018 = vld [vmem:[%s1011 + $0x30] sm:$0xff]
      %v1019 = vld [vmem:[%s1011 + $0x38] sm:$0xff]
      %v1020 = vld [vmem:[%s1011 + $0x40] sm:$0xff]
      %v1021 = vld [vmem:[%s1011 + $0x48] sm:$0xff]
      %v1022 = vld [vmem:[%s1011 + $0x50] sm:$0xff]
      %v1023 = vld [vmem:[%s1011 + $0x58] sm:$0xff]
      %v1024 = vld [vmem:[%s1011 + $0x60] sm:$0xff]
      %v1025 = vld [vmem:[%s1011 + $0x68] sm:$0xff]
      %v1026 = vld [vmem:[%s1011 + $0x70] sm:$0xff]
      %v1027 = vld [vmem:[%s1011 + $0x78] sm:$0xff]
      %v1028 = vld [vmem:[%s1011 + $0x80] sm:$0xff]
      %v1029 = vld [vmem:[%s1011 + $0x88] sm:$0xff]
      %v1030 = vld [vmem:[%s1011 + $0x90] sm:$0xff]
      %v1031 = vld [vmem:[%s1011 + $0x98] sm:$0xff]
      %v1032 = vld [vmem:[%s1011 + $0xa0] sm:$0xff]
      %v1033 = vld [vmem:[%s1011 + $0xa8] sm:$0xff]
      %v1034 = vld [vmem:[%s1011 + $0xb0] sm:$0xff]
      %v1035 = vld [vmem:[%s1011 + $0xb8] sm:$0xff]
      %v1036 = vld [vmem:[%s1011 + $0xc0] sm:$0xff]
      %v1037 = vld [vmem:[%s1011 + $0xc8] sm:$0xff]
      %v1038 = vld [vmem:[%s1011 + $0xd0] sm:$0xff]
      %v1039 = vld [vmem:[%s1011 + $0xd8] sm:$0xff]
      %v1040 = vld [vmem:[%s1011 + $0xe0] sm:$0xff]
      %v1041 = vld [vmem:[%s1011 + $0xe8] sm:$0xff]
      %v1042 = vld [vmem:[%s1011 + $0xf0] sm:$0xff]
      %v1043 = vld [vmem:[%s1011 + $0xf8] sm:$0xff]
      %v1044 = vld [vmem:[%s1011 + $0x100] sm:$0xff]
      %v1045 = vld [vmem:[%s1011 + $0x108] sm:$0xff]
      %v1046 = vld [vmem:[%s1011 + $0x110] sm:$0xff]
      %v1047 = vld [vmem:[%s1011 + $0x118] sm:$0xff]
      %v1048 = vld [vmem:[%s1011 + $0x120] sm:$0xff]
      %v1049 = vld [vmem:[%s1011 + $0x128] sm:$0xff]
      %v1050 = vld [vmem:[%s1011 + $0x130] sm:$0xff]
      %v1051 = vld [vmem:[%s1011 + $0x138] sm:$0xff]
      %v1052 = vld [vmem:[%s1011 + $0x140] sm:$0xff]
      %v1053 = vld [vmem:[%s1011 + $0x148] sm:$0xff]
      %v1054 = vld [vmem:[%s1011 + $0x150] sm:$0xff]
      %v1055 = vld [vmem:[%s1011 + $0x158] sm:$0xff]
      %v1056 = vld [vmem:[%s1011 + $0x160] sm:$0xff]
      %v1057 = vld [vmem:[%s1011 + $0x168] sm:$0xff]
      %v1058 = vld [vmem:[%s1011 + $0x170] sm:$0xff]
      %v1059 = vld [vmem:[%s1011 + $0x178] sm:$0xff]
      %1060 = vmatpush.msra.mxu0 %v1027
      %1061 = vmatpush.msra.mxu0 %v1026
      %1062 = vmatpush.msra.mxu0 %v1025
      %1063 = vmatpush.msra.mxu0 %v1024
      %1064 = vmatpush.msra.mxu0 %v1023
      %1065 = vmatpush.msra.mxu0 %v1022
      %1066 = vmatpush.msra.mxu0 %v1021
      %1067 = vmatpush.msra.mxu0 %v1020
      %1068 = vmatpush.msra.mxu0 %v1019
      %1069 = vmatpush.msra.mxu0 %v1018
      %1070 = vmatpush.msra.mxu0 %v1017
      %1071 = vmatpush.msra.mxu0 %v1016
      %1072 = vmatpush.msra.mxu0 %v1015
      %1073 = vmatpush.msra.mxu0 %v1014
      %1074 = vmatpush.msra.mxu0 %v1013
      %1075 = vmatpush.msra.mxu0 %v1012
      %1076 = vmatmul.f32.gmra.mxu0 %v553
      %v1077 = vpop.f32.mrf.mxu0
      %v1078 = vadd.f32 0.0, %v1077
      %1079 = vmatmul.f32.gmra.mxu0 %v554
      %v1080 = vpop.f32.mrf.mxu0
      %v1081 = vadd.f32 0.0, %v1080
      %1082 = vmatmul.f32.gmra.mxu0 %v556
      %v1083 = vpop.f32.mrf.mxu0
      %v1084 = vadd.f32 0.0, %v1083
      %1085 = vmatmul.f32.gmra.mxu0 %v557
      %v1086 = vpop.f32.mrf.mxu0
      %v1087 = vadd.f32 0.0, %v1086
      %1088 = vmatmul.f32.gmra.mxu0 %v559
      %v1089 = vpop.f32.mrf.mxu0
      %v1090 = vadd.f32 0.0, %v1089
      %1091 = vmatmul.f32.gmra.mxu0 %v560
      %v1092 = vpop.f32.mrf.mxu0
      %v1093 = vadd.f32 0.0, %v1092
      %1094 = vmatmul.f32.gmra.mxu0 %v562
      %v1095 = vpop.f32.mrf.mxu0
      %v1096 = vadd.f32 0.0, %v1095
      %1097 = vmatmul.f32.gmra.mxu0 %v563
      %v1098 = vpop.f32.mrf.mxu0
      %v1099 = vadd.f32 0.0, %v1098
      %1100 = vmatmul.f32.gmra.mxu0 %v565
      %v1101 = vpop.f32.mrf.mxu0
      %v1102 = vadd.f32 0.0, %v1101
      %1103 = vmatmul.f32.gmra.mxu0 %v566
      %v1104 = vpop.f32.mrf.mxu0
      %v1105 = vadd.f32 0.0, %v1104
      %1106 = vmatmul.f32.gmra.mxu0 %v568
      %v1107 = vpop.f32.mrf.mxu0
      %v1108 = vadd.f32 0.0, %v1107
      %1109 = vmatmul.f32.gmra.mxu0 %v569
      %v1110 = vpop.f32.mrf.mxu0
      %v1111 = vadd.f32 0.0, %v1110
      %1112 = vmatmul.f32.gmra.mxu0 %v571
      %v1113 = vpop.f32.mrf.mxu0
      %v1114 = vadd.f32 0.0, %v1113
      %1115 = vmatmul.f32.gmra.mxu0 %v572
      %v1116 = vpop.f32.mrf.mxu0
      %v1117 = vadd.f32 0.0, %v1116
      %1118 = vmatmul.f32.gmra.mxu0 %v574
      %v1119 = vpop.f32.mrf.mxu0
      %v1120 = vadd.f32 0.0, %v1119
      %1121 = vmatmul.f32.gmra.mxu0 %v575
      %v1122 = vpop.f32.mrf.mxu0
      %v1123 = vadd.f32 0.0, %v1122
      %1124 = vdwg.mxu0
      %1125 = vmatpush.msra.mxu0 %v1043
      %1126 = vmatpush.msra.mxu0 %v1042
      %1127 = vmatpush.msra.mxu0 %v1041
      %1128 = vmatpush.msra.mxu0 %v1040
      %1129 = vmatpush.msra.mxu0 %v1039
      %1130 = vmatpush.msra.mxu0 %v1038
      %1131 = vmatpush.msra.mxu0 %v1037
      %1132 = vmatpush.msra.mxu0 %v1036
      %1133 = vmatpush.msra.mxu0 %v1035
      %1134 = vmatpush.msra.mxu0 %v1034
      %1135 = vmatpush.msra.mxu0 %v1033
      %1136 = vmatpush.msra.mxu0 %v1032
      %1137 = vmatpush.msra.mxu0 %v1031
      %1138 = vmatpush.msra.mxu0 %v1030
      %1139 = vmatpush.msra.mxu0 %v1029
      %1140 = vmatpush.msra.mxu0 %v1028
      %1141 = vmatmul.f32.gmra.mxu0 %v618
      %v1142 = vpop.f32.mrf.mxu0
      %v1143 = vadd.f32 %v1078, %v1142
      %1144 = vmatmul.f32.gmra.mxu0 %v620
      %v1145 = vpop.f32.mrf.mxu0
      %v1146 = vadd.f32 %v1081, %v1145
      %1147 = vmatmul.f32.gmra.mxu0 %v623
      %v1148 = vpop.f32.mrf.mxu0
      %v1149 = vadd.f32 %v1084, %v1148
      %1150 = vmatmul.f32.gmra.mxu0 %v625
      %v1151 = vpop.f32.mrf.mxu0
      %v1152 = vadd.f32 %v1087, %v1151
      %1153 = vmatmul.f32.gmra.mxu0 %v628
      %v1154 = vpop.f32.mrf.mxu0
      %v1155 = vadd.f32 %v1090, %v1154
      %1156 = vmatmul.f32.gmra.mxu0 %v630
      %v1157 = vpop.f32.mrf.mxu0
      %v1158 = vadd.f32 %v1093, %v1157
      %1159 = vmatmul.f32.gmra.mxu0 %v633
      %v1160 = vpop.f32.mrf.mxu0
      %v1161 = vadd.f32 %v1096, %v1160
      %1162 = vmatmul.f32.gmra.mxu0 %v635
      %v1163 = vpop.f32.mrf.mxu0
      %v1164 = vadd.f32 %v1099, %v1163
      %1165 = vmatmul.f32.gmra.mxu0 %v638
      %v1166 = vpop.f32.mrf.mxu0
      %v1167 = vadd.f32 %v1102, %v1166
      %1168 = vmatmul.f32.gmra.mxu0 %v640
      %v1169 = vpop.f32.mrf.mxu0
      %v1170 = vadd.f32 %v1105, %v1169
      %1171 = vmatmul.f32.gmra.mxu0 %v643
      %v1172 = vpop.f32.mrf.mxu0
      %v1173 = vadd.f32 %v1108, %v1172
      %1174 = vmatmul.f32.gmra.mxu0 %v645
      %v1175 = vpop.f32.mrf.mxu0
      %v1176 = vadd.f32 %v1111, %v1175
      %1177 = vmatmul.f32.gmra.mxu0 %v648
      %v1178 = vpop.f32.mrf.mxu0
      %v1179 = vadd.f32 %v1114, %v1178
      %1180 = vmatmul.f32.gmra.mxu0 %v650
      %v1181 = vpop.f32.mrf.mxu0
      %v1182 = vadd.f32 %v1117, %v1181
      %1183 = vmatmul.f32.gmra.mxu0 %v653
      %v1184 = vpop.f32.mrf.mxu0
      %v1185 = vadd.f32 %v1120, %v1184
      %1186 = vmatmul.f32.gmra.mxu0 %v655
      %v1187 = vpop.f32.mrf.mxu0
      %v1188 = vadd.f32 %v1123, %v1187
      %1189 = vdwg.mxu0
      %1190 = vmatpush.msra.mxu0 %v1059
      %1191 = vmatpush.msra.mxu0 %v1058
      %1192 = vmatpush.msra.mxu0 %v1057
      %1193 = vmatpush.msra.mxu0 %v1056
      %1194 = vmatpush.msra.mxu0 %v1055
      %1195 = vmatpush.msra.mxu0 %v1054
      %1196 = vmatpush.msra.mxu0 %v1053
      %1197 = vmatpush.msra.mxu0 %v1052
      %1198 = vmatpush.msra.mxu0 %v1051
      %1199 = vmatpush.msra.mxu0 %v1050
      %1200 = vmatpush.msra.mxu0 %v1049
      %1201 = vmatpush.msra.mxu0 %v1048
      %1202 = vmatpush.msra.mxu0 %v1047
      %1203 = vmatpush.msra.mxu0 %v1046
      %1204 = vmatpush.msra.mxu0 %v1045
      %1205 = vmatpush.msra.mxu0 %v1044
      %1206 = vmatmul.f32.gmra.mxu0 %v689
      %v1207 = vpop.f32.mrf.mxu0
      %v1208 = vadd.f32 %v1143, %v1207
      %1209 = vmatmul.f32.gmra.mxu0 %v691
      %v1210 = vpop.f32.mrf.mxu0
      %v1211 = vadd.f32 %v1146, %v1210
      %1212 = vmatmul.f32.gmra.mxu0 %v694
      %v1213 = vpop.f32.mrf.mxu0
      %v1214 = vadd.f32 %v1149, %v1213
      %1215 = vmatmul.f32.gmra.mxu0 %v696
      %v1216 = vpop.f32.mrf.mxu0
      %v1217 = vadd.f32 %v1152, %v1216
      %1218 = vmatmul.f32.gmra.mxu0 %v699
      %v1219 = vpop.f32.mrf.mxu0
      %v1220 = vadd.f32 %v1155, %v1219
      %1221 = vmatmul.f32.gmra.mxu0 %v701
      %v1222 = vpop.f32.mrf.mxu0
      %v1223 = vadd.f32 %v1158, %v1222
      %1224 = vmatmul.f32.gmra.mxu0 %v704
      %v1225 = vpop.f32.mrf.mxu0
      %v1226 = vadd.f32 %v1161, %v1225
      %1227 = vmatmul.f32.gmra.mxu0 %v706
      %v1228 = vpop.f32.mrf.mxu0
      %v1229 = vadd.f32 %v1164, %v1228
      %1230 = vmatmul.f32.gmra.mxu0 %v709
      %v1231 = vpop.f32.mrf.mxu0
      %v1232 = vadd.f32 %v1167, %v1231
      %1233 = vmatmul.f32.gmra.mxu0 %v711
      %v1234 = vpop.f32.mrf.mxu0
      %v1235 = vadd.f32 %v1170, %v1234
      %1236 = vmatmul.f32.gmra.mxu0 %v714
      %v1237 = vpop.f32.mrf.mxu0
      %v1238 = vadd.f32 %v1173, %v1237
      %1239 = vmatmul.f32.gmra.mxu0 %v716
      %v1240 = vpop.f32.mrf.mxu0
      %v1241 = vadd.f32 %v1176, %v1240
      %1242 = vmatmul.f32.gmra.mxu0 %v719
      %v1243 = vpop.f32.mrf.mxu0
      %v1244 = vadd.f32 %v1179, %v1243
      %1245 = vmatmul.f32.gmra.mxu0 %v721
      %v1246 = vpop.f32.mrf.mxu0
      %v1247 = vadd.f32 %v1182, %v1246
      %1248 = vmatmul.f32.gmra.mxu0 %v724
      %v1249 = vpop.f32.mrf.mxu0
      %v1250 = vadd.f32 %v1185, %v1249
      %1251 = vmatmul.f32.gmra.mxu0 %v726
      %v1252 = vpop.f32.mrf.mxu0
      %v1253 = vadd.f32 %v1188, %v1252
      %1254 = vdwg.mxu0
      %v1255 = vld [vmem:[#allocation2] sm:$0xff]
      %v1256 = vld [vmem:[#allocation2 + $0x8] sm:$0xff]
      %v1257 = vld [vmem:[#allocation2 + $0x10] sm:$0xff]
      %v1258 = vld [vmem:[#allocation2 + $0x18] sm:$0xff]
      %v1259 = vld [vmem:[#allocation2 + $0x20] sm:$0xff]
      %v1260 = vld [vmem:[#allocation2 + $0x28] sm:$0xff]
      %v1261 = vld [vmem:[#allocation2 + $0x30] sm:$0xff]
      %v1262 = vld [vmem:[#allocation2 + $0x38] sm:$0xff]
      %v1263 = vld [vmem:[#allocation2 + $0x40] sm:$0xff]
      %v1264 = vld [vmem:[#allocation2 + $0x48] sm:$0xff]
      %v1265 = vld [vmem:[#allocation2 + $0x50] sm:$0xff]
      %v1266 = vld [vmem:[#allocation2 + $0x58] sm:$0xff]
      %v1267 = vld [vmem:[#allocation2 + $0x60] sm:$0xff]
      %v1268 = vld [vmem:[#allocation2 + $0x68] sm:$0xff]
      %v1269 = vld [vmem:[#allocation2 + $0x70] sm:$0xff]
      %v1270 = vld [vmem:[#allocation2 + $0x78] sm:$0xff]
      %v1271 = vadd.f32 %v1255, %v1208
      %v1272 = vadd.f32 %v1256, %v1211
      %v1273 = vadd.f32 %v1257, %v1214
      %v1274 = vadd.f32 %v1258, %v1217
      %v1275 = vadd.f32 %v1259, %v1220
      %v1276 = vadd.f32 %v1260, %v1223
      %v1277 = vadd.f32 %v1261, %v1226
      %v1278 = vadd.f32 %v1262, %v1229
      %v1279 = vadd.f32 %v1263, %v1232
      %v1280 = vadd.f32 %v1264, %v1235
      %v1281 = vadd.f32 %v1265, %v1238
      %v1282 = vadd.f32 %v1266, %v1241
      %v1283 = vadd.f32 %v1267, %v1244
      %v1284 = vadd.f32 %v1268, %v1247
      %v1285 = vadd.f32 %v1269, %v1250
      %v1286 = vadd.f32 %v1270, %v1253
      %1287 = vst [vmem:[#allocation2] sm:$0xff] %v1271
      %1288 = vst [vmem:[#allocation2 + $0x8] sm:$0xff] %v1272
      %1289 = vst [vmem:[#allocation2 + $0x10] sm:$0xff] %v1273
      %1290 = vst [vmem:[#allocation2 + $0x18] sm:$0xff] %v1274
      %1291 = vst [vmem:[#allocation2 + $0x20] sm:$0xff] %v1275
      %1292 = vst [vmem:[#allocation2 + $0x28] sm:$0xff] %v1276
      %1293 = vst [vmem:[#allocation2 + $0x30] sm:$0xff] %v1277
      %1294 = vst [vmem:[#allocation2 + $0x38] sm:$0xff] %v1278
      %1295 = vst [vmem:[#allocation2 + $0x40] sm:$0xff] %v1279
      %1296 = vst [vmem:[#allocation2 + $0x48] sm:$0xff] %v1280
      %1297 = vst [vmem:[#allocation2 + $0x50] sm:$0xff] %v1281
      %1298 = vst [vmem:[#allocation2 + $0x58] sm:$0xff] %v1282
      %1299 = vst [vmem:[#allocation2 + $0x60] sm:$0xff] %v1283
      %1300 = vst [vmem:[#allocation2 + $0x68] sm:$0xff] %v1284
      %1301 = vst [vmem:[#allocation2 + $0x70] sm:$0xff] %v1285
      %1302 = vst [vmem:[#allocation2 + $0x78] sm:$0xff] %v1286
      %s1303 = scalar_lea.vmem %s1, 768
      %v1304 = vld [vmem:[%s1303] sm:$0xff]
      %v1305 = vld [vmem:[%s1303 + $0x8] sm:$0xff]
      %v1306 = vld [vmem:[%s1303 + $0x10] sm:$0xff]
      %v1307 = vld [vmem:[%s1303 + $0x18] sm:$0xff]
      %v1308 = vld [vmem:[%s1303 + $0x20] sm:$0xff]
      %v1309 = vld [vmem:[%s1303 + $0x28] sm:$0xff]
      %v1310 = vld [vmem:[%s1303 + $0x30] sm:$0xff]
      %v1311 = vld [vmem:[%s1303 + $0x38] sm:$0xff]
      %v1312 = vld [vmem:[%s1303 + $0x40] sm:$0xff]
      %v1313 = vld [vmem:[%s1303 + $0x48] sm:$0xff]
      %v1314 = vld [vmem:[%s1303 + $0x50] sm:$0xff]
      %v1315 = vld [vmem:[%s1303 + $0x58] sm:$0xff]
      %v1316 = vld [vmem:[%s1303 + $0x60] sm:$0xff]
      %v1317 = vld [vmem:[%s1303 + $0x68] sm:$0xff]
      %v1318 = vld [vmem:[%s1303 + $0x70] sm:$0xff]
      %v1319 = vld [vmem:[%s1303 + $0x78] sm:$0xff]
      %v1320 = vld [vmem:[%s1303 + $0x80] sm:$0xff]
      %v1321 = vld [vmem:[%s1303 + $0x88] sm:$0xff]
      %v1322 = vld [vmem:[%s1303 + $0x90] sm:$0xff]
      %v1323 = vld [vmem:[%s1303 + $0x98] sm:$0xff]
      %v1324 = vld [vmem:[%s1303 + $0xa0] sm:$0xff]
      %v1325 = vld [vmem:[%s1303 + $0xa8] sm:$0xff]
      %v1326 = vld [vmem:[%s1303 + $0xb0] sm:$0xff]
      %v1327 = vld [vmem:[%s1303 + $0xb8] sm:$0xff]
      %v1328 = vld [vmem:[%s1303 + $0xc0] sm:$0xff]
      %v1329 = vld [vmem:[%s1303 + $0xc8] sm:$0xff]
      %v1330 = vld [vmem:[%s1303 + $0xd0] sm:$0xff]
      %v1331 = vld [vmem:[%s1303 + $0xd8] sm:$0xff]
      %v1332 = vld [vmem:[%s1303 + $0xe0] sm:$0xff]
      %v1333 = vld [vmem:[%s1303 + $0xe8] sm:$0xff]
      %v1334 = vld [vmem:[%s1303 + $0xf0] sm:$0xff]
      %v1335 = vld [vmem:[%s1303 + $0xf8] sm:$0xff]
      %v1336 = vld [vmem:[%s1303 + $0x100] sm:$0xff]
      %v1337 = vld [vmem:[%s1303 + $0x108] sm:$0xff]
      %v1338 = vld [vmem:[%s1303 + $0x110] sm:$0xff]
      %v1339 = vld [vmem:[%s1303 + $0x118] sm:$0xff]
      %v1340 = vld [vmem:[%s1303 + $0x120] sm:$0xff]
      %v1341 = vld [vmem:[%s1303 + $0x128] sm:$0xff]
      %v1342 = vld [vmem:[%s1303 + $0x130] sm:$0xff]
      %v1343 = vld [vmem:[%s1303 + $0x138] sm:$0xff]
      %v1344 = vld [vmem:[%s1303 + $0x140] sm:$0xff]
      %v1345 = vld [vmem:[%s1303 + $0x148] sm:$0xff]
      %v1346 = vld [vmem:[%s1303 + $0x150] sm:$0xff]
      %v1347 = vld [vmem:[%s1303 + $0x158] sm:$0xff]
      %v1348 = vld [vmem:[%s1303 + $0x160] sm:$0xff]
      %v1349 = vld [vmem:[%s1303 + $0x168] sm:$0xff]
      %v1350 = vld [vmem:[%s1303 + $0x170] sm:$0xff]
      %v1351 = vld [vmem:[%s1303 + $0x178] sm:$0xff]
      %1352 = vmatpush.msra.mxu0 %v1319
      %1353 = vmatpush.msra.mxu0 %v1318
      %1354 = vmatpush.msra.mxu0 %v1317
      %1355 = vmatpush.msra.mxu0 %v1316
      %1356 = vmatpush.msra.mxu0 %v1315
      %1357 = vmatpush.msra.mxu0 %v1314
      %1358 = vmatpush.msra.mxu0 %v1313
      %1359 = vmatpush.msra.mxu0 %v1312
      %1360 = vmatpush.msra.mxu0 %v1311
      %1361 = vmatpush.msra.mxu0 %v1310
      %1362 = vmatpush.msra.mxu0 %v1309
      %1363 = vmatpush.msra.mxu0 %v1308
      %1364 = vmatpush.msra.mxu0 %v1307
      %1365 = vmatpush.msra.mxu0 %v1306
      %1366 = vmatpush.msra.mxu0 %v1305
      %1367 = vmatpush.msra.mxu0 %v1304
      %1368 = vmatmul.f32.gmra.mxu0 %v556
      %v1369 = vpop.f32.mrf.mxu0
      %v1370 = vadd.f32 0.0, %v1369
      %1371 = vmatmul.f32.gmra.mxu0 %v557
      %v1372 = vpop.f32.mrf.mxu0
      %v1373 = vadd.f32 0.0, %v1372
      %1374 = vmatmul.f32.gmra.mxu0 %v559
      %v1375 = vpop.f32.mrf.mxu0
      %v1376 = vadd.f32 0.0, %v1375
      %1377 = vmatmul.f32.gmra.mxu0 %v560
      %v1378 = vpop.f32.mrf.mxu0
      %v1379 = vadd.f32 0.0, %v1378
      %1380 = vmatmul.f32.gmra.mxu0 %v562
      %v1381 = vpop.f32.mrf.mxu0
      %v1382 = vadd.f32 0.0, %v1381
      %1383 = vmatmul.f32.gmra.mxu0 %v563
      %v1384 = vpop.f32.mrf.mxu0
      %v1385 = vadd.f32 0.0, %v1384
      %1386 = vmatmul.f32.gmra.mxu0 %v565
      %v1387 = vpop.f32.mrf.mxu0
      %v1388 = vadd.f32 0.0, %v1387
      %1389 = vmatmul.f32.gmra.mxu0 %v566
      %v1390 = vpop.f32.mrf.mxu0
      %v1391 = vadd.f32 0.0, %v1390
      %1392 = vmatmul.f32.gmra.mxu0 %v568
      %v1393 = vpop.f32.mrf.mxu0
      %v1394 = vadd.f32 0.0, %v1393
      %1395 = vmatmul.f32.gmra.mxu0 %v569
      %v1396 = vpop.f32.mrf.mxu0
      %v1397 = vadd.f32 0.0, %v1396
      %1398 = vmatmul.f32.gmra.mxu0 %v571
      %v1399 = vpop.f32.mrf.mxu0
      %v1400 = vadd.f32 0.0, %v1399
      %1401 = vmatmul.f32.gmra.mxu0 %v572
      %v1402 = vpop.f32.mrf.mxu0
      %v1403 = vadd.f32 0.0, %v1402
      %1404 = vmatmul.f32.gmra.mxu0 %v574
      %v1405 = vpop.f32.mrf.mxu0
      %v1406 = vadd.f32 0.0, %v1405
      %1407 = vmatmul.f32.gmra.mxu0 %v575
      %v1408 = vpop.f32.mrf.mxu0
      %v1409 = vadd.f32 0.0, %v1408
      %1410 = vmatmul.f32.gmra.mxu0 %v577
      %v1411 = vpop.f32.mrf.mxu0
      %v1412 = vadd.f32 0.0, %v1411
      %1413 = vmatmul.f32.gmra.mxu0 %v578
      %v1414 = vpop.f32.mrf.mxu0
      %v1415 = vadd.f32 0.0, %v1414
      %1416 = vdwg.mxu0
      %1417 = vmatpush.msra.mxu0 %v1335
      %1418 = vmatpush.msra.mxu0 %v1334
      %1419 = vmatpush.msra.mxu0 %v1333
      %1420 = vmatpush.msra.mxu0 %v1332
      %1421 = vmatpush.msra.mxu0 %v1331
      %1422 = vmatpush.msra.mxu0 %v1330
      %1423 = vmatpush.msra.mxu0 %v1329
      %1424 = vmatpush.msra.mxu0 %v1328
      %1425 = vmatpush.msra.mxu0 %v1327
      %1426 = vmatpush.msra.mxu0 %v1326
      %1427 = vmatpush.msra.mxu0 %v1325
      %1428 = vmatpush.msra.mxu0 %v1324
      %1429 = vmatpush.msra.mxu0 %v1323
      %1430 = vmatpush.msra.mxu0 %v1322
      %1431 = vmatpush.msra.mxu0 %v1321
      %1432 = vmatpush.msra.mxu0 %v1320
      %1433 = vmatmul.f32.gmra.mxu0 %v623
      %v1434 = vpop.f32.mrf.mxu0
      %v1435 = vadd.f32 %v1370, %v1434
      %1436 = vmatmul.f32.gmra.mxu0 %v625
      %v1437 = vpop.f32.mrf.mxu0
      %v1438 = vadd.f32 %v1373, %v1437
      %1439 = vmatmul.f32.gmra.mxu0 %v628
      %v1440 = vpop.f32.mrf.mxu0
      %v1441 = vadd.f32 %v1376, %v1440
      %1442 = vmatmul.f32.gmra.mxu0 %v630
      %v1443 = vpop.f32.mrf.mxu0
      %v1444 = vadd.f32 %v1379, %v1443
      %1445 = vmatmul.f32.gmra.mxu0 %v633
      %v1446 = vpop.f32.mrf.mxu0
      %v1447 = vadd.f32 %v1382, %v1446
      %1448 = vmatmul.f32.gmra.mxu0 %v635
      %v1449 = vpop.f32.mrf.mxu0
      %v1450 = vadd.f32 %v1385, %v1449
      %1451 = vmatmul.f32.gmra.mxu0 %v638
      %v1452 = vpop.f32.mrf.mxu0
      %v1453 = vadd.f32 %v1388, %v1452
      %1454 = vmatmul.f32.gmra.mxu0 %v640
      %v1455 = vpop.f32.mrf.mxu0
      %v1456 = vadd.f32 %v1391, %v1455
      %1457 = vmatmul.f32.gmra.mxu0 %v643
      %v1458 = vpop.f32.mrf.mxu0
      %v1459 = vadd.f32 %v1394, %v1458
      %1460 = vmatmul.f32.gmra.mxu0 %v645
      %v1461 = vpop.f32.mrf.mxu0
      %v1462 = vadd.f32 %v1397, %v1461
      %1463 = vmatmul.f32.gmra.mxu0 %v648
      %v1464 = vpop.f32.mrf.mxu0
      %v1465 = vadd.f32 %v1400, %v1464
      %1466 = vmatmul.f32.gmra.mxu0 %v650
      %v1467 = vpop.f32.mrf.mxu0
      %v1468 = vadd.f32 %v1403, %v1467
      %1469 = vmatmul.f32.gmra.mxu0 %v653
      %v1470 = vpop.f32.mrf.mxu0
      %v1471 = vadd.f32 %v1406, %v1470
      %1472 = vmatmul.f32.gmra.mxu0 %v655
      %v1473 = vpop.f32.mrf.mxu0
      %v1474 = vadd.f32 %v1409, %v1473
      %1475 = vmatmul.f32.gmra.mxu0 %v658
      %v1476 = vpop.f32.mrf.mxu0
      %v1477 = vadd.f32 %v1412, %v1476
      %1478 = vmatmul.f32.gmra.mxu0 %v660
      %v1479 = vpop.f32.mrf.mxu0
      %v1480 = vadd.f32 %v1415, %v1479
      %1481 = vdwg.mxu0
      %1482 = vmatpush.msra.mxu0 %v1351
      %1483 = vmatpush.msra.mxu0 %v1350
      %1484 = vmatpush.msra.mxu0 %v1349
      %1485 = vmatpush.msra.mxu0 %v1348
      %1486 = vmatpush.msra.mxu0 %v1347
      %1487 = vmatpush.msra.mxu0 %v1346
      %1488 = vmatpush.msra.mxu0 %v1345
      %1489 = vmatpush.msra.mxu0 %v1344
      %1490 = vmatpush.msra.mxu0 %v1343
      %1491 = vmatpush.msra.mxu0 %v1342
      %1492 = vmatpush.msra.mxu0 %v1341
      %1493 = vmatpush.msra.mxu0 %v1340
      %1494 = vmatpush.msra.mxu0 %v1339
      %1495 = vmatpush.msra.mxu0 %v1338
      %1496 = vmatpush.msra.mxu0 %v1337
      %1497 = vmatpush.msra.mxu0 %v1336
      %1498 = vmatmul.f32.gmra.mxu0 %v694
      %v1499 = vpop.f32.mrf.mxu0
      %v1500 = vadd.f32 %v1435, %v1499
      %1501 = vmatmul.f32.gmra.mxu0 %v696
      %v1502 = vpop.f32.mrf.mxu0
      %v1503 = vadd.f32 %v1438, %v1502
      %1504 = vmatmul.f32.gmra.mxu0 %v699
      %v1505 = vpop.f32.mrf.mxu0
      %v1506 = vadd.f32 %v1441, %v1505
      %1507 = vmatmul.f32.gmra.mxu0 %v701
      %v1508 = vpop.f32.mrf.mxu0
      %v1509 = vadd.f32 %v1444, %v1508
      %1510 = vmatmul.f32.gmra.mxu0 %v704
      %v1511 = vpop.f32.mrf.mxu0
      %v1512 = vadd.f32 %v1447, %v1511
      %1513 = vmatmul.f32.gmra.mxu0 %v706
      %v1514 = vpop.f32.mrf.mxu0
      %v1515 = vadd.f32 %v1450, %v1514
      %1516 = vmatmul.f32.gmra.mxu0 %v709
      %v1517 = vpop.f32.mrf.mxu0
      %v1518 = vadd.f32 %v1453, %v1517
      %1519 = vmatmul.f32.gmra.mxu0 %v711
      %v1520 = vpop.f32.mrf.mxu0
      %v1521 = vadd.f32 %v1456, %v1520
      %1522 = vmatmul.f32.gmra.mxu0 %v714
      %v1523 = vpop.f32.mrf.mxu0
      %v1524 = vadd.f32 %v1459, %v1523
      %1525 = vmatmul.f32.gmra.mxu0 %v716
      %v1526 = vpop.f32.mrf.mxu0
      %v1527 = vadd.f32 %v1462, %v1526
      %1528 = vmatmul.f32.gmra.mxu0 %v719
      %v1529 = vpop.f32.mrf.mxu0
      %v1530 = vadd.f32 %v1465, %v1529
      %1531 = vmatmul.f32.gmra.mxu0 %v721
      %v1532 = vpop.f32.mrf.mxu0
      %v1533 = vadd.f32 %v1468, %v1532
      %1534 = vmatmul.f32.gmra.mxu0 %v724
      %v1535 = vpop.f32.mrf.mxu0
      %v1536 = vadd.f32 %v1471, %v1535
      %1537 = vmatmul.f32.gmra.mxu0 %v726
      %v1538 = vpop.f32.mrf.mxu0
      %v1539 = vadd.f32 %v1474, %v1538
      %1540 = vmatmul.f32.gmra.mxu0 %v729
      %v1541 = vpop.f32.mrf.mxu0
      %v1542 = vadd.f32 %v1477, %v1541
      %1543 = vmatmul.f32.gmra.mxu0 %v731
      %v1544 = vpop.f32.mrf.mxu0
      %v1545 = vadd.f32 %v1480, %v1544
      %1546 = vdwg.mxu0
      %v1547 = vld [vmem:[#allocation2] sm:$0xff]
      %v1548 = vld [vmem:[#allocation2 + $0x8] sm:$0xff]
      %v1549 = vld [vmem:[#allocation2 + $0x10] sm:$0xff]
      %v1550 = vld [vmem:[#allocation2 + $0x18] sm:$0xff]
      %v1551 = vld [vmem:[#allocation2 + $0x20] sm:$0xff]
      %v1552 = vld [vmem:[#allocation2 + $0x28] sm:$0xff]
      %v1553 = vld [vmem:[#allocation2 + $0x30] sm:$0xff]
      %v1554 = vld [vmem:[#allocation2 + $0x38] sm:$0xff]
      %v1555 = vld [vmem:[#allocation2 + $0x40] sm:$0xff]
      %v1556 = vld [vmem:[#allocation2 + $0x48] sm:$0xff]
      %v1557 = vld [vmem:[#allocation2 + $0x50] sm:$0xff]
      %v1558 = vld [vmem:[#allocation2 + $0x58] sm:$0xff]
      %v1559 = vld [vmem:[#allocation2 + $0x60] sm:$0xff]
      %v1560 = vld [vmem:[#allocation2 + $0x68] sm:$0xff]
      %v1561 = vld [vmem:[#allocation2 + $0x70] sm:$0xff]
      %v1562 = vld [vmem:[#allocation2 + $0x78] sm:$0xff]
      %v1563 = vadd.f32 %v1547, %v1500
      %v1564 = vadd.f32 %v1548, %v1503
      %v1565 = vadd.f32 %v1549, %v1506
      %v1566 = vadd.f32 %v1550, %v1509
      %v1567 = vadd.f32 %v1551, %v1512
      %v1568 = vadd.f32 %v1552, %v1515
      %v1569 = vadd.f32 %v1553, %v1518
      %v1570 = vadd.f32 %v1554, %v1521
      %v1571 = vadd.f32 %v1555, %v1524
      %v1572 = vadd.f32 %v1556, %v1527
      %v1573 = vadd.f32 %v1557, %v1530
      %v1574 = vadd.f32 %v1558, %v1533
      %v1575 = vadd.f32 %v1559, %v1536
      %v1576 = vadd.f32 %v1560, %v1539
      %v1577 = vadd.f32 %v1561, %v1542
      %v1578 = vadd.f32 %v1562, %v1545
      %1579 = vst [vmem:[#allocation2] sm:$0xff] %v1563
      %1580 = vst [vmem:[#allocation2 + $0x8] sm:$0xff] %v1564
      %1581 = vst [vmem:[#allocation2 + $0x10] sm:$0xff] %v1565
      %1582 = vst [vmem:[#allocation2 + $0x18] sm:$0xff] %v1566
      %1583 = vst [vmem:[#allocation2 + $0x20] sm:$0xff] %v1567
      %1584 = vst [vmem:[#allocation2 + $0x28] sm:$0xff] %v1568
      %1585 = vst [vmem:[#allocation2 + $0x30] sm:$0xff] %v1569
      %1586 = vst [vmem:[#allocation2 + $0x38] sm:$0xff] %v1570
      %1587 = vst [vmem:[#allocation2 + $0x40] sm:$0xff] %v1571
      %1588 = vst [vmem:[#allocation2 + $0x48] sm:$0xff] %v1572
      %1589 = vst [vmem:[#allocation2 + $0x50] sm:$0xff] %v1573
      %1590 = vst [vmem:[#allocation2 + $0x58] sm:$0xff] %v1574
      %1591 = vst [vmem:[#allocation2 + $0x60] sm:$0xff] %v1575
      %1592 = vst [vmem:[#allocation2 + $0x68] sm:$0xff] %v1576
      %1593 = vst [vmem:[#allocation2 + $0x70] sm:$0xff] %v1577
      %1594 = vst [vmem:[#allocation2 + $0x78] sm:$0xff] %v1578
      %v1595 = vld [vmem:[#allocation2] sm:$0xff]
      %v1596 = vld [vmem:[#allocation2 + $0x8] sm:$0xff]
      %v1597 = vld [vmem:[#allocation2 + $0x10] sm:$0xff]
      %v1598 = vld [vmem:[#allocation2 + $0x18] sm:$0xff]
      %v1599 = vld [vmem:[#allocation2 + $0x20] sm:$0xff]
      %v1600 = vld [vmem:[#allocation2 + $0x28] sm:$0xff]
      %v1601 = vld [vmem:[#allocation2 + $0x30] sm:$0xff]
      %v1602 = vld [vmem:[#allocation2 + $0x38] sm:$0xff]
      %v1603 = vld [vmem:[#allocation2 + $0x40] sm:$0xff]
      %v1604 = vld [vmem:[#allocation2 + $0x48] sm:$0xff]
      %v1605 = vld [vmem:[#allocation2 + $0x50] sm:$0xff]
      %v1606 = vld [vmem:[#allocation2 + $0x58] sm:$0xff]
      %v1607 = vld [vmem:[#allocation2 + $0x60] sm:$0xff]
      %v1608 = vld [vmem:[#allocation2 + $0x68] sm:$0xff]
      %v1609 = vld [vmem:[#allocation2 + $0x70] sm:$0xff]
      %v1610 = vld [vmem:[#allocation2 + $0x78] sm:$0xff]
      %1611 = vst [vmem:[%s298] sm:$0xff] %v1595
      %1612 = vst [vmem:[%s298 + $0x8] sm:$0xff] %v1596
      %1613 = vst [vmem:[%s298 + $0x10] sm:$0xff] %v1597
      %1614 = vst [vmem:[%s298 + $0x18] sm:$0xff] %v1598
      %1615 = vst [vmem:[%s298 + $0x20] sm:$0xff] %v1599
      %1616 = vst [vmem:[%s298 + $0x28] sm:$0xff] %v1600
      %1617 = vst [vmem:[%s298 + $0x30] sm:$0xff] %v1601
      %1618 = vst [vmem:[%s298 + $0x38] sm:$0xff] %v1602
      %1619 = vst [vmem:[%s298 + $0x40] sm:$0xff] %v1603
      %1620 = vst [vmem:[%s298 + $0x48] sm:$0xff] %v1604
      %1621 = vst [vmem:[%s298 + $0x50] sm:$0xff] %v1605
      %1622 = vst [vmem:[%s298 + $0x58] sm:$0xff] %v1606
      %1623 = vst [vmem:[%s298 + $0x60] sm:$0xff] %v1607
      %1624 = vst [vmem:[%s298 + $0x68] sm:$0xff] %v1608
      %1625 = vst [vmem:[%s298 + $0x70] sm:$0xff] %v1609
      %1626 = vst [vmem:[%s298 + $0x78] sm:$0xff] %v1610
      %v1627 = vadd.f32 %v1595, %v1596
      %v1628 = vadd.f32 %v1627, %v1597
      %v1629 = vadd.f32 %v1628, %v1598
      %v1630 = vadd.f32 %v1629, %v1599
      %v1631 = vadd.f32 %v1630, %v1600
      %v1632 = vadd.f32 %v1631, %v1601
      %v1633 = vadd.f32 %v1632, %v1602
      %v1634 = vadd.f32 %v1633, %v1603
      %v1635 = vadd.f32 %v1634, %v1604
      %v1636 = vadd.f32 %v1635, %v1605
      %v1637 = vadd.f32 %v1636, %v1606
      %v1638 = vadd.f32 %v1637, %v1607
      %v1639 = vadd.f32 %v1638, %v1608
      %v1640 = vadd.f32 %v1639, %v1609
      %v1641 = vadd.f32 %v1640, %v1610
      %v1642 = vrot.slane %v1641, 4
      %v1643 = vadd.f32 %v1641, %v1642
      %v1644 = vrot.slane %v1643, 2
      %v1645 = vadd.f32 %v1643, %v1644
      %v1646 = vrot.slane %v1645, 1
      %v1647 = vadd.f32 %v1645, %v1646
      %v1648 = vmul.f32 %v1647, 0.0078125
      %v1649 = vsub.f32 %v1595, %v1648
      %v1650 = vsub.f32 %v1596, %v1648
      %v1651 = vsub.f32 %v1597, %v1648
      %v1652 = vsub.f32 %v1598, %v1648
      %v1653 = vsub.f32 %v1599, %v1648
      %v1654 = vsub.f32 %v1600, %v1648
      %v1655 = vsub.f32 %v1601, %v1648
      %v1656 = vsub.f32 %v1602, %v1648
      %v1657 = vsub.f32 %v1603, %v1648
      %v1658 = vsub.f32 %v1604, %v1648
      %v1659 = vsub.f32 %v1605, %v1648
      %v1660 = vsub.f32 %v1606, %v1648
      %v1661 = vsub.f32 %v1607, %v1648
      %v1662 = vsub.f32 %v1608, %v1648
      %v1663 = vsub.f32 %v1609, %v1648
      %v1664 = vsub.f32 %v1610, %v1648
      %v1665 = vmul.f32 %v1649, %v1649
      %v1666 = vmul.f32 %v1650, %v1650
      %v1667 = vmul.f32 %v1651, %v1651
      %v1668 = vmul.f32 %v1652, %v1652
      %v1669 = vmul.f32 %v1653, %v1653
      %v1670 = vmul.f32 %v1654, %v1654
      %v1671 = vmul.f32 %v1655, %v1655
      %v1672 = vmul.f32 %v1656, %v1656
      %v1673 = vmul.f32 %v1657, %v1657
      %v1674 = vmul.f32 %v1658, %v1658
      %v1675 = vmul.f32 %v1659, %v1659
      %v1676 = vmul.f32 %v1660, %v1660
      %v1677 = vmul.f32 %v1661, %v1661
      %v1678 = vmul.f32 %v1662, %v1662
      %v1679 = vmul.f32 %v1663, %v1663
      %v1680 = vmul.f32 %v1664, %v1664
      %v1681 = vadd.f32 %v1665, %v1666
      %v1682 = vadd.f32 %v1681, %v1667
      %v1683 = vadd.f32 %v1682, %v1668
      %v1684 = vadd.f32 %v1683, %v1669
      %v1685 = vadd.f32 %v1684, %v1670
      %v1686 = vadd.f32 %v1685, %v1671
      %v1687 = vadd.f32 %v1686, %v1672
      %v1688 = vadd.f32 %v1687, %v1673
      %v1689 = vadd.f32 %v1688, %v1674
      %v1690 = vadd.f32 %v1689, %v1675
      %v1691 = vadd.f32 %v1690, %v1676
      %v1692 = vadd.f32 %v1691, %v1677
      %v1693 = vadd.f32 %v1692, %v1678
      %v1694 = vadd.f32 %v1693, %v1679
      %v1695 = vadd.f32 %v1694, %v1680
      %v1696 = vrot.slane %v1695, 4
      %v1697 = vadd.f32 %v1695, %v1696
      %v1698 = vrot.slane %v1697, 2
      %v1699 = vadd.f32 %v1697, %v1698
      %v1700 = vrot.slane %v1699, 1
      %v1701 = vadd.f32 %v1699, %v1700
      %1702 = vst [vmem:[%s305] sm:$0xff] %v1647
      %1703 = vst [vmem:[%s313] sm:$0xff] %v1701
      %s1704 = smul.u32 16, %s23
      %p1705 = scmp.lt.s32.totalorder %s22, 1
      %s1706 = scalar_select %p1705, %s22, 1
      %p1707 = scmp.lt.s32.totalorder %s1704, 31
      %s1708 = scalar_select %p1707, %s1704, 31
      %s1709 = smul.addr %s1706, 32
      %s1710 = sadd.s32 %s1708, %s1709
      %s1711 = smul.addr %s1710, 8
      %s1712 = scalar_lea.vmem %s4, %s1711
      %s1713 = smul.u32 %s22, 2
      %s1714 = sadd.s32 %s1713, %s23
      %p1715 = scmp.lt.s32.totalorder %s1714, 3
      %s1716 = scalar_select %p1715, %s1714, 3
      %s1717 = smul.addr %s1716, 8
      %s1718 = scalar_lea.vmem %s5, %s1717
      %s1719 = smul.u32 %s22, 2
      %s1720 = sadd.s32 %s1719, %s23
      %p1721 = scmp.lt.s32.totalorder %s1720, 3
      %s1722 = scalar_select %p1721, %s1720, 3
      %s1723 = smul.addr %s1722, 8
      %s1724 = scalar_lea.vmem %s6, %s1723
      // Predicated region
      $region37: #{bottleneck_forward.5} parent=35 // pred_check
        %p1725 = pneg %p139
      $region38: #{bottleneck_forward.5} parent=35 // pred_check_branch
        %1727 = sbr.rel (%p1725) target = $region40
      $region39: #{bottleneck_forward.5} parent=35 // pred_region
        %s1728 = smul.u32 16, %s23
      $region40: #{bottleneck_forward.5} parent=35 // pred_fallthru
        _
      // Predicated region
      $region41: #{bottleneck_forward.5} parent=35 // pred_check
        %p1729 = pneg %p169
      $region42: #{bottleneck_forward.5} parent=35 // pred_check_branch
        %1731 = sbr.rel (%p1729) target = $region44
      $region43: #{bottleneck_forward.5} parent=35 // pred_region
        %s1732 = smul.u32 %s22, 2
        %s1733 = sadd.s32 %s1732, %s23
      $region44: #{bottleneck_forward.5} parent=35 // pred_fallthru
        _
      // Predicated region
      $region45: #{bottleneck_forward.5} parent=35 // pred_check
        %p1734 = pneg %p199
      $region46: #{bottleneck_forward.5} parent=35 // pred_check_branch
        %1736 = sbr.rel (%p1734) target = $region48
      $region47: #{bottleneck_forward.5} parent=35 // pred_region
        %s1737 = smul.u32 %s22, 2
        %s1738 = sadd.s32 %s1737, %s23
      $region48: #{bottleneck_forward.5} parent=35 // pred_fallthru
        _
    $region36: #{bottleneck_forward.5} parent=5 // pred_fallthru
      _
    %p1739 = scmp.le.s32.totalorder 2, %s13
    // Predicated region
    $region49: #{bottleneck_forward.5} parent=5 // pred_check
      %p1740 = pneg %p1739
    $region50: #{bottleneck_forward.5} parent=5 // pred_check_branch
      %1742 = sbr.rel (%p1740) target = $region52
    $region51: #{bottleneck_forward.5} parent=5 // pred_region
      %s1743 = ssub.s32 %s13, 2
      // Predicated region
      $region53: #{bottleneck_forward.5} parent=51 // pred_check
        %p1744 = pneg %p145
      $region54: #{bottleneck_forward.5} parent=51 // pred_check_branch
        %1746 = sbr.rel (%p1744) target = $region56
      $region55: #{bottleneck_forward.5} parent=51 // pred_region
        %s1747 = smul.u32 16, %s25
        %p1748 = scmp.lt.s32.totalorder %s24, 1
        %s1749 = scalar_select %p1748, %s24, 1
        %p1750 = scmp.lt.s32.totalorder %s1747, 31
        %s1751 = scalar_select %p1750, %s1747, 31
        %s1752 = smul.addr %s1749, 32
        %s1753 = sadd.s32 %s1751, %s1752
        %s1754 = smul.addr %s1753, 8
        %s1755 = scalar_lea.vmem %s4, %s1754
      $region56: #{bottleneck_forward.5} parent=51 // pred_fallthru
        _
      // Predicated region
      $region57: #{bottleneck_forward.5} parent=51 // pred_check
        %p1756 = pneg %p175
      $region58: #{bottleneck_forward.5} parent=51 // pred_check_branch
        %1758 = sbr.rel (%p1756) target = $region60
      $region59: #{bottleneck_forward.5} parent=51 // pred_region
        %s1759 = smul.u32 %s24, 2
        %s1760 = sadd.s32 %s1759, %s25
        %p1761 = scmp.lt.s32.totalorder %s1760, 3
        %s1762 = scalar_select %p1761, %s1760, 3
        %s1763 = smul.addr %s1762, 8
        %s1764 = scalar_lea.vmem %s5, %s1763
      $region60: #{bottleneck_forward.5} parent=51 // pred_fallthru
        _
      // Predicated region
      $region61: #{bottleneck_forward.5} parent=51 // pred_check
        %p1765 = pneg %p205
      $region62: #{bottleneck_forward.5} parent=51 // pred_check_branch
        %1767 = sbr.rel (%p1765) target = $region64
      $region63: #{bottleneck_forward.5} parent=51 // pred_region
        %s1768 = smul.u32 %s24, 2
        %s1769 = sadd.s32 %s1768, %s25
        %p1770 = scmp.lt.s32.totalorder %s1769, 3
        %s1771 = scalar_select %p1770, %s1769, 3
        %s1772 = smul.addr %s1771, 8
        %s1773 = scalar_lea.vmem %s6, %s1772
      $region64: #{bottleneck_forward.5} parent=51 // pred_fallthru
        _
    $region52: #{bottleneck_forward.5} parent=5 // pred_fallthru
      _
  $region6: #{bottleneck_forward.5} parent=0 // loop_footer
    %s17 = sadd.s32 1, %s13
  $region7: #{bottleneck_forward.5} parent=0 // loop_footer_branch
    %12 = sbr.rel target = $region3
  $region8: #{bottleneck_forward.5} parent=0 // loop_exit
    _

</llo_original>
